<compile_context>
chip_gen: v5e
topology: v5e:2x2
jax: 0.10.0
libtpu: 0.0.40
codegen_flags: <defaults>
</compile_context>

<pallas_src>
import jax
import jax.numpy as jnp
from jax.experimental import pallas as pl
from jax.experimental.pallas import tpu as pltpu

_ANCHORS_PER_ROW = 128  # anchors folded into one lane-dense row -> lanes = 128*C


def _weighted_l1_kernel(cw_ref, e_ref, x_ref, t_ref, w_ref, o_ref):
    """One lane-dense (TR, L) tile of the flattened per-batch loss plane.

    cw_ref: (1, L)    code_weights tiled to the lane width (resident).
    e_ref : (TA, L)   0/1 expansion matrix, E[a, a*C + c] = 1 (resident).
    x_ref : (TR, L)   predictions  (each row = 128 anchors x C codes).
    t_ref : (TR, L)   regression targets.
    w_ref : (TR, TA)  per-anchor weights for the same rows.
    o_ref : (TR, L)   output loss tile.
    """
    x = x_ref[...]
    t = t_ref[...]
    # NaN targets are replaced by the prediction (=> zero contribution).
    t = jnp.where(jnp.isnan(t), x, t)
    # abs() applied AFTER the code_weight scaling, exactly like the PyTorch op.
    loss = jnp.abs((x - t) * cw_ref[...])            # (1, L) broadcasts over rows
    # Expand per-anchor weights onto the lane-dense layout using the idle MXU:
    # (TR, TA) @ (TA, L) copies w[:, a] into lanes [a*C, (a+1)*C).  HIGHEST
    # precision makes this 0/1 matmul bit-exact; its cost is hidden under the
    # HBM stream of this mem-bound kernel.
    w_lanes = jnp.dot(w_ref[...], e_ref[...],
                      preferred_element_type=jnp.float32,
                      precision=jax.lax.Precision.HIGHEST)
    o_ref[...] = (loss * w_lanes).astype(o_ref.dtype)


def _pick_row_tile(num_rows, lanes, target_bytes=1 << 20):
    """Rows per block: a multiple of 8 (f32 sublane quantum) dividing num_rows,
    with each f32 stream block <= ~target_bytes.  Falls back to the full row
    count (always legal: block dim == array dim)."""
    max_rows = max(8, target_bytes // (lanes * 4))
    best = None
    for tr in range(8, min(num_rows, max_rows) + 1, 8):
        if num_rows % tr == 0:
            best = tr
    # TODO(synk): if num_rows has no small multiple-of-8 divisor, the fallback
    # block can get large; a ragged last block (cdiv grid) would fix that.
    return best if best is not None else num_rows


def weighted_l1_loss(inp, target, weights=None, code_weights=None):
    """
    Args:
      inp:          (B, A, C) float tensor — encoded predictions.
      target:       (B, A, C) float tensor — regression targets.
      weights:      (B, A)    float tensor or None.
      code_weights: (C,)      float tensor / list or None.
    Returns:
      loss: (B, A, C) tensor (no reduction), same semantics as the PyTorch op.
    """
    B, A, C = inp.shape
    out_dtype = inp.dtype

    if code_weights is None:
        code_weights = jnp.ones((C,), jnp.float32)
    code_weights = jnp.asarray(code_weights, jnp.float32).reshape(C)
    if weights is None:
        weights = jnp.ones((B, A), jnp.float32)

    ta = _ANCHORS_PER_ROW
    lanes = ta * C                       # lane width: always a multiple of 128

    # Pad the anchor axis to a multiple of 128 if needed (padded loss is
    # sliced off below).  Standard pcdet anchor counts are already multiples
    # of 128, so this path normally costs nothing.
    pad_a = (-A) % ta
    if pad_a:
        # TODO(synk): zero-padding copies x/t once; pick A % 128 == 0 to avoid.
        inp = jnp.pad(inp, ((0, 0), (0, pad_a), (0, 0)))
        target = jnp.pad(target, ((0, 0), (0, pad_a), (0, 0)))
        weights = jnp.pad(weights, ((0, 0), (0, pad_a)))
    a_pad = A + pad_a
    rows = a_pad // ta                   # lane-dense rows per batch
    tr = _pick_row_tile(rows, lanes)

    # Free reshapes: contiguous data, no transpose, no extra HBM traffic.
    x2 = inp.reshape(B, rows, lanes)
    t2 = target.reshape(B, rows, lanes)
    w2 = weights.astype(jnp.float32).reshape(B, rows, ta)

    # Tiny resident operands (constant index_map => DMA'd once, kept in VMEM).
    cw_row = jnp.tile(code_weights, ta).reshape(1, lanes)            # (1, 128*C)
    expand = (jnp.arange(lanes, dtype=jnp.int32)[None, :] // C
              == jnp.arange(ta, dtype=jnp.int32)[:, None]).astype(jnp.float32)

    grid = (B, rows // tr)
    out = pl.pallas_call(
        _weighted_l1_kernel,
        out_shape=jax.ShapeDtypeStruct((B, rows, lanes), out_dtype),
        grid_spec=pltpu.PrefetchScalarGridSpec(
            num_scalar_prefetch=0,
            grid=grid,
            in_specs=[
                pl.BlockSpec((1, lanes), lambda b, r: (0, 0)),           # code wts
                pl.BlockSpec((ta, lanes), lambda b, r: (0, 0)),          # E matrix
                pl.BlockSpec((pl.Squeezed(), tr, lanes),
                             lambda b, r: (b, r, 0)),                    # input
                pl.BlockSpec((pl.Squeezed(), tr, lanes),
                             lambda b, r: (b, r, 0)),                    # target
                pl.BlockSpec((pl.Squeezed(), tr, ta),
                             lambda b, r: (b, r, 0)),                    # weights
            ],
            out_specs=pl.BlockSpec((pl.Squeezed(), tr, lanes),
                                   lambda b, r: (b, r, 0)),
        ),
        # Elementwise => no cross-step state: both axes parallel (keeps both
        # v7x TensorCores busy).  Blocks are <=1 MiB per stream, so the
        # double-buffered working set fits v5e's 16 MiB default scoped VMEM
        # and v7x's 64 MiB physical VMEM with no overrides.
        compiler_params=pltpu.CompilerParams(
            dimension_semantics=("parallel", "parallel")),
    )(cw_row, expand, x2, t2, w2)

    loss = out.reshape(B, a_pad, C)
    if pad_a:
        loss = loss[:, :A, :]
    return loss


def weighted_l1_loss_ref(inp, target, weights, code_weights):
    """Pure-JAX reference mirroring the PyTorch forward."""
    target = jnp.where(jnp.isnan(target), inp, target)
    diff = (inp - target) * code_weights.reshape(1, 1, -1)
    loss = jnp.abs(diff)
    if weights is not None:
        loss = loss * weights[..., None]
    return loss


if __name__ == "__main__":
    key = jax.random.PRNGKey(0)
    # Small but lane-friendly shapes: A is a multiple of 128 (as in real pcdet
    # heads), C = 8 codes.
    B, A, C = 2, 1024, 8

    k1, k2, k3 = jax.random.split(key, 3)
    x = jax.random.normal(k1, (B, A, C), dtype=jnp.float32)
    t = jax.random.normal(k2, (B, A, C), dtype=jnp.float32)
    # Inject NaNs into the target to exercise the isnan path.
    t = t.at[0, 0, 0].set(jnp.nan)
    t = t.at[1, 100, 5].set(jnp.nan)
    w = jax.random.uniform(k3, (B, A), dtype=jnp.float32)

    # Deterministic code_weights (module __init__ takes a float list of len C).
    code_weights = jnp.array(
        [1.0, 1.0, 1.0, 1.0, 1.0, 1.0, 2.0, 0.5], dtype=jnp.float32)

    out = weighted_l1_loss(x, t, w, code_weights)
    out = jax.block_until_ready(out)

    ref = weighted_l1_loss_ref(x, t, w, code_weights)
    assert out.shape == (B, A, C)
    assert out.dtype == x.dtype
    assert jnp.allclose(out, ref, atol=1e-6, rtol=1e-6), "mismatch vs reference"

    print("KERNEL_OK")
</pallas_src>

<mosaic_0001>
module attributes {stable_mosaic.version = 11 : i64} {
  func.func @_weighted_l1_kernel(%arg0: i32, %arg1: i32, %arg2: memref<1x1024xf32, #tpu.memory_space<vmem>>, %arg3: memref<128x1024xf32, #tpu.memory_space<vmem>>, %arg4: memref<1x8x1024xf32, #tpu.memory_space<vmem>>, %arg5: memref<1x8x1024xf32, #tpu.memory_space<vmem>>, %arg6: memref<1x8x128xf32, #tpu.memory_space<vmem>>, %arg7: memref<1x8x1024xf32, #tpu.memory_space<vmem>>) attributes {dimension_semantics = [#tpu.dimension_semantics<parallel>, #tpu.dimension_semantics<parallel>], iteration_bounds = array<i64: 2, 1>, scalar_prefetch = 0 : i64, scratch_operands = 0 : i64, tpu.core_type = #tpu.core_type<tc>, window_params = [{pipeline_mode = #tpu.pipeline_mode<synchronous>, transform_indices = @transform_0, window_bounds = array<i64: 1, 1024>}, {pipeline_mode = #tpu.pipeline_mode<synchronous>, transform_indices = @transform_1, window_bounds = array<i64: 128, 1024>}, {transform_indices = @transform_2, window_bounds = array<i64: 1, 8, 1024>}, {transform_indices = @transform_3, window_bounds = array<i64: 1, 8, 1024>}, {transform_indices = @transform_4, window_bounds = array<i64: 1, 8, 128>}, {transform_indices = @transform_5, window_bounds = array<i64: 1, 8, 1024>}]} {
    %c0 = arith.constant 0 : index
    %c0_0 = arith.constant 0 : index
    %c0_1 = arith.constant 0 : index
    %0 = vector.load %arg4[%c0, %c0_0, %c0_1] : memref<1x8x1024xf32, #tpu.memory_space<vmem>>, vector<1x8x1024xf32>
    %1 = vector.shape_cast %0 : vector<1x8x1024xf32> to vector<8x1024xf32>
    %c0_2 = arith.constant 0 : index
    %c0_3 = arith.constant 0 : index
    %c0_4 = arith.constant 0 : index
    %2 = vector.load %arg5[%c0_2, %c0_3, %c0_4] : memref<1x8x1024xf32, #tpu.memory_space<vmem>>, vector<1x8x1024xf32>
    %3 = vector.shape_cast %2 : vector<1x8x1024xf32> to vector<8x1024xf32>
    %4 = arith.cmpf one, %3, %3 : vector<8x1024xf32>
    %5 = arith.select %4, %1, %3 : vector<8x1024xi1>, vector<8x1024xf32>
    %6 = arith.subf %1, %5 : vector<8x1024xf32>
    %c0_5 = arith.constant 0 : index
    %c0_6 = arith.constant 0 : index
    %7 = vector.load %arg2[%c0_5, %c0_6] : memref<1x1024xf32, #tpu.memory_space<vmem>>, vector<1x1024xf32>
    %8 = vector.broadcast %7 : vector<1x1024xf32> to vector<8x1024xf32>
    %9 = arith.mulf %6, %8 : vector<8x1024xf32>
    %10 = math.absf %9 : vector<8x1024xf32>
    %c0_7 = arith.constant 0 : index
    %c0_8 = arith.constant 0 : index
    %c0_9 = arith.constant 0 : index
    %11 = vector.load %arg6[%c0_7, %c0_8, %c0_9] : memref<1x8x128xf32, #tpu.memory_space<vmem>>, vector<1x8x128xf32>
    %12 = vector.shape_cast %11 : vector<1x8x128xf32> to vector<8x128xf32>
    %c0_10 = arith.constant 0 : index
    %c0_11 = arith.constant 0 : index
    %13 = vector.load %arg3[%c0_10, %c0_11] : memref<128x1024xf32, #tpu.memory_space<vmem>>, vector<128x1024xf32>
    %cst = arith.constant dense<0.000000e+00> : vector<8x1024xf32>
    %14 = tpu.matmul %12, %13, %cst {dimension_numbers = #tpu.dot_dimension_numbers<[1], [0], [0], [1], [0, 0, 1, 1], [], []>, precision = #tpu.contract_precision<fp32>} : vector<8x128xf32>, vector<128x1024xf32>, vector<8x1024xf32> -> vector<8x1024xf32>
    %15 = arith.mulf %10, %14 : vector<8x1024xf32>
    %c0_12 = arith.constant 0 : index
    %c0_13 = arith.constant 0 : index
    %c0_14 = arith.constant 0 : index
    %16 = vector.load %arg7[%c0_12, %c0_13, %c0_14] : memref<1x8x1024xf32, #tpu.memory_space<vmem>>, vector<1x8x1024xf32>
    %17 = vector.shape_cast %16 : vector<1x8x1024xf32> to vector<8x1024xf32>
    %18 = vector.shape_cast %15 : vector<8x1024xf32> to vector<1x8x1024xf32>
    tpu.vector_store %arg7[%c0_12, %c0_13, %c0_14], %18 {strides = array<i32>} : memref<1x8x1024xf32, #tpu.memory_space<vmem>>, vector<1x8x1024xf32>,
    return
  }
  func.func @transform_0(%arg0: i32, %arg1: i32) -> (i32, i32) {
    %c0_i32 = arith.constant 0 : i32
    %c0_i32_0 = arith.constant 0 : i32
    %c0_i32_1 = arith.constant 0 : i32
    return %c0_i32, %c0_i32_0 : i32, i32
  }
  func.func @transform_1(%arg0: i32, %arg1: i32) -> (i32, i32) {
    %c0_i32 = arith.constant 0 : i32
    %c0_i32_0 = arith.constant 0 : i32
    %c0_i32_1 = arith.constant 0 : i32
    return %c0_i32, %c0_i32_0 : i32, i32
  }
  func.func @transform_2(%arg0: i32, %arg1: i32) -> (i32, i32, i32) {
    %c0_i32 = arith.constant 0 : i32
    %c0_i32_0 = arith.constant 0 : i32
    return %arg0, %arg1, %c0_i32 : i32, i32, i32
  }
  func.func @transform_3(%arg0: i32, %arg1: i32) -> (i32, i32, i32) {
    %c0_i32 = arith.constant 0 : i32
    %c0_i32_0 = arith.constant 0 : i32
    return %arg0, %arg1, %c0_i32 : i32, i32, i32
  }
  func.func @transform_4(%arg0: i32, %arg1: i32) -> (i32, i32, i32) {
    %c0_i32 = arith.constant 0 : i32
    %c0_i32_0 = arith.constant 0 : i32
    return %arg0, %arg1, %c0_i32 : i32, i32, i32
  }
  func.func @transform_5(%arg0: i32, %arg1: i32) -> (i32, i32, i32) {
    %c0_i32 = arith.constant 0 : i32
    %c0_i32_0 = arith.constant 0 : i32
    return %arg0, %arg1, %c0_i32 : i32, i32, i32
  }
}

</mosaic_0001>

<llo_original>
// kernel: tpu_custom_call.1
$region0: #{tpu_custom_call.1}
  #allocation0 [shape = 'u32[]', space=smem, size = 0x4, offset = 0x4, fixed_abs, tag = 'smem constant byte address 0x4 - core index']
  #allocation1 [shape = 'u32[72,128]{1,0:T(1,128)}', space=vmem, size = 0x9000, scoped, tag = 'internal scratch']
  %s0 = inlined_call_operand.hbm [shape: f32[1,1024], index: 0, kind: input, shape index: {}]
  %s1 = inlined_call_operand.hbm [shape: f32[128,1024], index: 1, kind: input, shape index: {}]
  %s2 = inlined_call_operand.hbm [shape: f32[2,8,1024], index: 2, kind: input, shape index: {}]
  %s3 = inlined_call_operand.hbm [shape: f32[2,8,1024], index: 3, kind: input, shape index: {}]
  %s4 = inlined_call_operand.hbm [shape: f32[2,8,128], index: 4, kind: input, shape index: {}]
  %s5 = inlined_call_operand.hbm [shape: f32[2,8,1024], index: 5, kind: output, shape index: {}]
  %s6 = sld [smem:[#allocation0]]
  $region73: #{tpu_custom_call.1} parent=0
    _
  %s8 = ssub.s32 1, %s6
  %s9 = scalar_select 0, %s8, %s6
  $region1: #{tpu_custom_call.1} parent=0
    #allocation2 [shape = 'u8[4096]{0}', space=vmem, size = 0x1000, scoped, tag = 'input window, operand 0, single buffered']
    #allocation3 [shape = 's32[2]{0}', space=sflag, size = 0x8, scoped, tag = 'scoped memory for tpu_custom_call.1']
    #allocation4 [shape = 's32[2]{0}', space=sflag, size = 0x8, scoped, tag = 'scoped memory for tpu_custom_call.1']
    #allocation5 [shape = 'u8[524288]{0}', space=vmem, size = 0x80000, scoped, tag = 'input window, operand 1, single buffered']
    #allocation6 [shape = 's32[1]{0}', space=sflag, size = 0x4, scoped, tag = 'scoped memory for tpu_custom_call.1']
    #allocation7 [shape = 'u8[65536]{0}', space=vmem, size = 0x10000, scoped, tag = 'input window, operand 2']
    #allocation8 [shape = 'u8[65536]{0}', space=vmem, size = 0x10000, scoped, tag = 'input window, operand 3']
    #allocation9 [shape = 'u8[8192]{0}', space=vmem, size = 0x2000, scoped, tag = 'input window, operand 4']
    #allocation10 [shape = 'u8[65536]{0}', space=vmem, size = 0x10000, scoped, tag = 'output window, operand 0']
    %10 = vsyncpa [#allocation3], 0
    %11 = vsyncpa [#allocation6], 0
    %12 = vsyncpa [#allocation4], 0
    %s13 = scalar_lea.sflag [#allocation4], 1
    %14 = vsyncpa %s13, 0
    loop: start=0, step=1, limit=4
    $region2: #{tpu_custom_call.1} parent=1 // loop_pre_header
      _
    $region3: #{tpu_custom_call.1} parent=1 // loop_header
      %s16 = sphi 0, %s20
      %p17 = scmp.ge.s32.totalorder %s16, 4
      %s23 = sphi 0, %s35
      %s24 = sphi 0, %s31
      %s25 = sphi 0, %s23
      %s26 = sphi 0, %s24
      %s27 = sphi 0, %s25
      %s28 = sphi 0, %s26
      %s36 = sphi 0, %s36
      %s38 = sphi 0, %s36
      %s39 = sphi 0, %s38
      %s53 = sphi 0, %s39
      %s57 = sphi 0, %s57
      %s59 = sphi 0, %s57
      %s60 = sphi 0, %s59
      %s74 = sphi 0, %s60
      %s82 = sphi 0, %s84
      %s85 = sphi 0, %s82
      %s86 = sphi 0, %s85
      %s102 = sphi 0, %s86
      %s110 = sphi 0, %s112
      %s113 = sphi 0, %s110
      %s114 = sphi 0, %s113
      %s130 = sphi 0, %s114
      %s138 = sphi 0, %s140
      %s141 = sphi 0, %s138
      %s142 = sphi 0, %s141
      %s158 = sphi 0, %s142
      %s166 = sphi 0, %s168
      %s169 = sphi 0, %s166
      %s170 = sphi 0, %s169
      %s186 = sphi 0, %s170
    $region4: #{tpu_custom_call.1} parent=1 // loop_header_branch
      %19 = sbr.rel (%p17) target = $region8
    $region5: #{tpu_custom_call.1} parent=1 // loop_body
      %s21 = ssub.s32 %s16, 1
      %s22 = ssub.s32 %s16, 2
      %s29 = sadd.s32 1, %s24
      %p30 = scmp.ge.s32.totalorder %s29, 1
      %s31 = scalar_select %p30, 0, %s29
      %s32 = sadd.s32 1, %s23
      %s33 = scalar_select %p30, %s32, %s23
      %p34 = scmp.ge.s32.totalorder %s33, 2
      %s35 = scalar_select %p34, 0, %s33
      %s37 = sadd.s32 %s36, 1
      %p40 = scmp.eq.s32.totalorder %s16, 1
      %p41 = scmp.ne.s32.totalorder %s36, %s38
      %p42 = scmp.eq.s32.totalorder %s16, 0
      %p43 = por %p41, %p42
      %p44 = scmp.ne.s32.totalorder %s36, %s38
      %p45 = scmp.eq.s32.totalorder %s21, 1
      %p46 = por %p44, %p45
      %p47 = scmp.ne.s32.totalorder %s38, %s39
      %p48 = scmp.eq.s32.totalorder %s21, 0
      %p49 = por %p47, %p48
      %p50 = scmp.ne.s32.totalorder %s38, %s39
      %p51 = scmp.eq.s32.totalorder %s22, 1
      %p52 = por %p50, %p51
      %p54 = scmp.ne.s32.totalorder %s39, %s53
      %p55 = scmp.eq.s32.totalorder %s22, 0
      %p56 = por %p54, %p55
      %s58 = sadd.s32 %s57, 1
      %p61 = scmp.eq.s32.totalorder %s16, 1
      %p62 = scmp.ne.s32.totalorder %s57, %s59
      %p63 = scmp.eq.s32.totalorder %s16, 0
      %p64 = por %p62, %p63
      %p65 = scmp.ne.s32.totalorder %s57, %s59
      %p66 = scmp.eq.s32.totalorder %s21, 1
      %p67 = por %p65, %p66
      %p68 = scmp.ne.s32.totalorder %s59, %s60
      %p69 = scmp.eq.s32.totalorder %s21, 0
      %p70 = por %p68, %p69
      %p71 = scmp.ne.s32.totalorder %s59, %s60
      %p72 = scmp.eq.s32.totalorder %s22, 1
      %p73 = por %p71, %p72
      %p75 = scmp.ne.s32.totalorder %s60, %s74
      %p76 = scmp.eq.s32.totalorder %s22, 0
      %p77 = por %p75, %p76
      %s78 = ssub.s32 %s23, %s35
      %s79 = ssub.s32 %s24, %s31
      %s80 = sor.u32 %s78, %s79
      %p81 = scmp.eq.s32.totalorder %s80, 0
      %s83 = sadd.s32 %s82, 1
      %s84 = scalar_select %p81, %s82, %s83
      %p87 = pneg %p81
      %p88 = scmp.eq.s32.totalorder %s16, 1
      %p89 = por %p87, %p88
      %p90 = scmp.ne.s32.totalorder %s82, %s85
      %p91 = scmp.eq.s32.totalorder %s16, 0
      %p92 = por %p90, %p91
      %p93 = scmp.ne.s32.totalorder %s82, %s85
      %p94 = scmp.eq.s32.totalorder %s21, 1
      %p95 = por %p93, %p94
      %p96 = scmp.ne.s32.totalorder %s85, %s86
      %p97 = scmp.eq.s32.totalorder %s21, 0
      %p98 = por %p96, %p97
      %p99 = scmp.ne.s32.totalorder %s85, %s86
      %p100 = scmp.eq.s32.totalorder %s22, 1
      %p101 = por %p99, %p100
      %p103 = scmp.ne.s32.totalorder %s86, %s102
      %p104 = scmp.eq.s32.totalorder %s22, 0
      %p105 = por %p103, %p104
      %s106 = ssub.s32 %s23, %s35
      %s107 = ssub.s32 %s24, %s31
      %s108 = sor.u32 %s106, %s107
      %p109 = scmp.eq.s32.totalorder %s108, 0
      %s111 = sadd.s32 %s110, 1
      %s112 = scalar_select %p109, %s110, %s111
      %p115 = pneg %p109
      %p116 = scmp.eq.s32.totalorder %s16, 1
      %p117 = por %p115, %p116
      %p118 = scmp.ne.s32.totalorder %s110, %s113
      %p119 = scmp.eq.s32.totalorder %s16, 0
      %p120 = por %p118, %p119
      %p121 = scmp.ne.s32.totalorder %s110, %s113
      %p122 = scmp.eq.s32.totalorder %s21, 1
      %p123 = por %p121, %p122
      %p124 = scmp.ne.s32.totalorder %s113, %s114
      %p125 = scmp.eq.s32.totalorder %s21, 0
      %p126 = por %p124, %p125
      %p127 = scmp.ne.s32.totalorder %s113, %s114
      %p128 = scmp.eq.s32.totalorder %s22, 1
      %p129 = por %p127, %p128
      %p131 = scmp.ne.s32.totalorder %s114, %s130
      %p132 = scmp.eq.s32.totalorder %s22, 0
      %p133 = por %p131, %p132
      %s134 = ssub.s32 %s23, %s35
      %s135 = ssub.s32 %s24, %s31
      %s136 = sor.u32 %s134, %s135
      %p137 = scmp.eq.s32.totalorder %s136, 0
      %s139 = sadd.s32 %s138, 1
      %s140 = scalar_select %p137, %s138, %s139
      %p143 = pneg %p137
      %p144 = scmp.eq.s32.totalorder %s16, 1
      %p145 = por %p143, %p144
      %p146 = scmp.ne.s32.totalorder %s138, %s141
      %p147 = scmp.eq.s32.totalorder %s16, 0
      %p148 = por %p146, %p147
      %p149 = scmp.ne.s32.totalorder %s138, %s141
      %p150 = scmp.eq.s32.totalorder %s21, 1
      %p151 = por %p149, %p150
      %p152 = scmp.ne.s32.totalorder %s141, %s142
      %p153 = scmp.eq.s32.totalorder %s21, 0
      %p154 = por %p152, %p153
      %p155 = scmp.ne.s32.totalorder %s141, %s142
      %p156 = scmp.eq.s32.totalorder %s22, 1
      %p157 = por %p155, %p156
      %p159 = scmp.ne.s32.totalorder %s142, %s158
      %p160 = scmp.eq.s32.totalorder %s22, 0
      %p161 = por %p159, %p160
      %s162 = ssub.s32 %s23, %s35
      %s163 = ssub.s32 %s24, %s31
      %s164 = sor.u32 %s162, %s163
      %p165 = scmp.eq.s32.totalorder %s164, 0
      %s167 = sadd.s32 %s166, 1
      %s168 = scalar_select %p165, %s166, %s167
      %p171 = pneg %p165
      %p172 = scmp.eq.s32.totalorder %s16, 1
      %p173 = por %p171, %p172
      %p174 = scmp.ne.s32.totalorder %s166, %s169
      %p175 = scmp.eq.s32.totalorder %s16, 0
      %p176 = por %p174, %p175
      %p177 = scmp.ne.s32.totalorder %s166, %s169
      %p178 = scmp.eq.s32.totalorder %s21, 1
      %p179 = por %p177, %p178
      %p180 = scmp.ne.s32.totalorder %s169, %s170
      %p181 = scmp.eq.s32.totalorder %s21, 0
      %p182 = por %p180, %p181
      %p183 = scmp.ne.s32.totalorder %s169, %s170
      %p184 = scmp.eq.s32.totalorder %s22, 1
      %p185 = por %p183, %p184
      %p187 = scmp.ne.s32.totalorder %s170, %s186
      %p188 = scmp.eq.s32.totalorder %s22, 0
      %p189 = por %p187, %p188
      %p190 = scmp.le.s32.totalorder 1, %s16
      %p191 = scmp.lt.s32.totalorder %s16, 3
      %p192 = pnand %p190, %p191
      %p193 = pneg %p192
      // Predicated region
      $region9: #{tpu_custom_call.1} parent=5 // pred_check
        _
      $region10: #{tpu_custom_call.1} parent=5 // pred_check_branch
        %195 = sbr.rel (%p192) target = $region12
      $region11: #{tpu_custom_call.1} parent=5 // pred_region
        %s196 = ssub.s32 %s16, 1
        // Predicated region
        $region13: #{tpu_custom_call.1} parent=11 // pred_check
          %p197 = pneg %p49
        $region14: #{tpu_custom_call.1} parent=11 // pred_check_branch
          %199 = sbr.rel (%p197) target = $region16
        $region15: #{tpu_custom_call.1} parent=11 // pred_region
          %201 = vsyncadd [#allocation3], 0
          %s203 = sshll.u32 %s0, 4
          %s204 = int_to_ptr.hbm [resolvable:$true] %s203
          %s205 = sshll.u32 [#allocation2], 4
          %s206 = int_to_ptr.vmem [resolvable:$true] %s205
          %208 = dma.hbm_to_vmem [thread:$0]  %s204, 128, %s206, [#allocation3]
        $region16: #{tpu_custom_call.1} parent=11 // pred_fallthru
          _
        // Predicated region
        $region17: #{tpu_custom_call.1} parent=11 // pred_check
          %p209 = pneg %p70
        $region18: #{tpu_custom_call.1} parent=11 // pred_check_branch
          %211 = sbr.rel (%p209) target = $region20
        $region19: #{tpu_custom_call.1} parent=11 // pred_region
          %213 = vsyncadd [#allocation6], 0
          %s214 = sshll.u32 %s1, 4
          %s215 = int_to_ptr.hbm [resolvable:$true] %s214
          %s216 = sshll.u32 [#allocation5], 4
          %s217 = int_to_ptr.vmem [resolvable:$true] %s216
          %222 = dma.hbm_to_vmem [thread:$0]  %s215, 16384, %s217, [#allocation6], 1024, 1024, 64
        $region20: #{tpu_custom_call.1} parent=11 // pred_fallthru
          _
      $region12: #{tpu_custom_call.1} parent=5 // pred_fallthru
        _
      %p223 = scmp.lt.s32.totalorder %s16, 2
      // Predicated region
      $region21: #{tpu_custom_call.1} parent=5 // pred_check
        %p224 = pneg %p223
      $region22: #{tpu_custom_call.1} parent=5 // pred_check_branch
        %226 = sbr.rel (%p224) target = $region24
      $region23: #{tpu_custom_call.1} parent=5 // pred_region
        // Predicated region
        $region25: #{tpu_custom_call.1} parent=23 // pred_check
          %p227 = pneg %p92
        $region26: #{tpu_custom_call.1} parent=23 // pred_check_branch
          %229 = sbr.rel (%p227) target = $region28
        $region27: #{tpu_custom_call.1} parent=23 // pred_region
          %s230 = sand.u32 %s16, 1
          %s231 = scalar_lea.sflag [#allocation3], %s230
          %s232 = sand.u32 %s82, 1
          %s233 = smul.addr %s232, 64
          %s234 = scalar_lea.vmem [#allocation7], %s233
          %236 = vsyncadd %s231, 0
          %s237 = smul.addr %s24, 8
          %s238 = smul.addr %s23, 8
          %s239 = sadd.s32 %s237, %s238
          %s240 = smul.addr %s239, 8
          %s241 = scalar_lea.hbm %s2, %s240
          %s243 = sshll.u32 %s241, 4
          %s244 = int_to_ptr.hbm [resolvable:$true] %s243
          %s245 = sshll.u32 %s234, 4
          %s246 = int_to_ptr.vmem [resolvable:$true] %s245
          %248 = dma.hbm_to_vmem [thread:$0]  %s244, 1024, %s246, %s231
        $region28: #{tpu_custom_call.1} parent=23 // pred_fallthru
          _
        // Predicated region
        $region29: #{tpu_custom_call.1} parent=23 // pred_check
          %p249 = pneg %p120
        $region30: #{tpu_custom_call.1} parent=23 // pred_check_branch
          %251 = sbr.rel (%p249) target = $region32
        $region31: #{tpu_custom_call.1} parent=23 // pred_region
          %s252 = sand.u32 %s16, 1
          %s253 = scalar_lea.sflag [#allocation3], %s252
          %s254 = sand.u32 %s110, 1
          %s255 = smul.addr %s254, 64
          %s256 = scalar_lea.vmem [#allocation8], %s255
          %258 = vsyncadd %s253, 0
          %s259 = smul.addr %s24, 8
          %s260 = smul.addr %s23, 8
          %s261 = sadd.s32 %s259, %s260
          %s262 = smul.addr %s261, 8
          %s263 = scalar_lea.hbm %s3, %s262
          %s265 = sshll.u32 %s263, 4
          %s266 = int_to_ptr.hbm [resolvable:$true] %s265
          %s267 = sshll.u32 %s256, 4
          %s268 = int_to_ptr.vmem [resolvable:$true] %s267
          %270 = dma.hbm_to_vmem [thread:$0]  %s266, 1024, %s268, %s253
        $region32: #{tpu_custom_call.1} parent=23 // pred_fallthru
          _
        // Predicated region
        $region33: #{tpu_custom_call.1} parent=23 // pred_check
          %p271 = pneg %p148
        $region34: #{tpu_custom_call.1} parent=23 // pred_check_branch
          %273 = sbr.rel (%p271) target = $region36
        $region35: #{tpu_custom_call.1} parent=23 // pred_region
          %s274 = sand.u32 %s16, 1
          %s275 = scalar_lea.sflag [#allocation3], %s274
          %s276 = sand.u32 %s138, 1
          %s277 = smul.addr %s276, 8
          %s278 = scalar_lea.vmem [#allocation9], %s277
          %280 = vsyncadd %s275, 0
          %s281 = sadd.s32 %s24, %s23
          %s282 = smul.addr %s281, 8
          %s283 = scalar_lea.hbm %s4, %s282
          %s285 = sshll.u32 %s283, 4
          %s286 = int_to_ptr.hbm [resolvable:$true] %s285
          %s287 = sshll.u32 %s278, 4
          %s288 = int_to_ptr.vmem [resolvable:$true] %s287
          %290 = dma.hbm_to_vmem [thread:$0]  %s286, 128, %s288, %s275
        $region36: #{tpu_custom_call.1} parent=23 // pred_fallthru
          _
      $region24: #{tpu_custom_call.1} parent=5 // pred_fallthru
        _
      %p291 = scmp.le.s32.totalorder 1, %s16
      %p292 = scmp.lt.s32.totalorder %s16, 3
      %p293 = pnand %p291, %p292
      %p294 = pneg %p293
      // Predicated region
      $region37: #{tpu_custom_call.1} parent=5 // pred_check
        _
      $region38: #{tpu_custom_call.1} parent=5 // pred_check_branch
        %296 = sbr.rel (%p293) target = $region40
      $region39: #{tpu_custom_call.1} parent=5 // pred_region
        %s297 = ssub.s32 %s16, 1
        // Predicated region
        $region41: #{tpu_custom_call.1} parent=39 // pred_check
          %p298 = pneg %p49
        $region42: #{tpu_custom_call.1} parent=39 // pred_check_branch
          %300 = sbr.rel (%p298) target = $region44
        $region43: #{tpu_custom_call.1} parent=39 // pred_region
          %302 = dma.done [#allocation3], 128
        $region44: #{tpu_custom_call.1} parent=39 // pred_fallthru
          _
        // Predicated region
        $region45: #{tpu_custom_call.1} parent=39 // pred_check
          %p303 = pneg %p70
        $region46: #{tpu_custom_call.1} parent=39 // pred_check_branch
          %305 = sbr.rel (%p303) target = $region48
        $region47: #{tpu_custom_call.1} parent=39 // pred_region
          %307 = dma.done [#allocation6], 16384
        $region48: #{tpu_custom_call.1} parent=39 // pred_fallthru
          _
        %s308 = sand.u32 %s21, 1
        %s309 = scalar_lea.sflag [#allocation3], %s308
        %s310 = sand.u32 %s85, 1
        %s311 = smul.addr %s310, 64
        %s312 = scalar_lea.vmem [#allocation7], %s311
        // Predicated region
        $region49: #{tpu_custom_call.1} parent=39 // pred_check
          %p313 = pneg %p98
        $region50: #{tpu_custom_call.1} parent=39 // pred_check_branch
          %315 = sbr.rel (%p313) target = $region52
        $region51: #{tpu_custom_call.1} parent=39 // pred_region
          %317 = dma.done %s309, 1024
        $region52: #{tpu_custom_call.1} parent=39 // pred_fallthru
          _
        %s318 = sand.u32 %s21, 1
        %s319 = scalar_lea.sflag [#allocation3], %s318
        %s320 = sand.u32 %s113, 1
        %s321 = smul.addr %s320, 64
        %s322 = scalar_lea.vmem [#allocation8], %s321
        // Predicated region
        $region53: #{tpu_custom_call.1} parent=39 // pred_check
          %p323 = pneg %p126
        $region54: #{tpu_custom_call.1} parent=39 // pred_check_branch
          %325 = sbr.rel (%p323) target = $region56
        $region55: #{tpu_custom_call.1} parent=39 // pred_region
          %327 = dma.done %s319, 1024
        $region56: #{tpu_custom_call.1} parent=39 // pred_fallthru
          _
        %s328 = sand.u32 %s21, 1
        %s329 = scalar_lea.sflag [#allocation3], %s328
        %s330 = sand.u32 %s141, 1
        %s331 = smul.addr %s330, 8
        %s332 = scalar_lea.vmem [#allocation9], %s331
        // Predicated region
        $region57: #{tpu_custom_call.1} parent=39 // pred_check
          %p333 = pneg %p154
        $region58: #{tpu_custom_call.1} parent=39 // pred_check_branch
          %335 = sbr.rel (%p333) target = $region60
        $region59: #{tpu_custom_call.1} parent=39 // pred_region
          %337 = dma.done %s329, 128
        $region60: #{tpu_custom_call.1} parent=39 // pred_fallthru
          _
        %p338 = pneg %p49
        %p339 = pneg %p46
        %p340 = pneg %p70
        %p341 = pneg %p67
        %s342 = sand.u32 %s21, 1
        %s343 = scalar_lea.sflag [#allocation3], %s342
        %s344 = sand.u32 %s85, 1
        %s345 = smul.addr %s344, 64
        %s346 = scalar_lea.vmem [#allocation7], %s345
        %p347 = pneg %p98
        %p348 = pneg %p95
        %s349 = sand.u32 %s21, 1
        %s350 = scalar_lea.sflag [#allocation3], %s349
        %s351 = sand.u32 %s113, 1
        %s352 = smul.addr %s351, 64
        %s353 = scalar_lea.vmem [#allocation8], %s352
        %p354 = pneg %p126
        %p355 = pneg %p123
        %s356 = sand.u32 %s21, 1
        %s357 = scalar_lea.sflag [#allocation3], %s356
        %s358 = sand.u32 %s141, 1
        %s359 = smul.addr %s358, 8
        %s360 = scalar_lea.vmem [#allocation9], %s359
        %p361 = pneg %p154
        %p362 = pneg %p151
        %p363 = pneg %p182
        %p364 = pneg %p179
        %s365 = sand.u32 %s169, 1
        %s366 = scalar_lea.sflag [#allocation4], %s365
        %s367 = sand.u32 %s169, 1
        %s368 = smul.addr %s367, 64
        %s369 = scalar_lea.vmem [#allocation10], %s368
        %v370 = vld [vmem:[%s312] sm:$0xff]
        %v371 = vld [vmem:[%s312 + $0x8] sm:$0xff]
        %v372 = vld [vmem:[%s312 + $0x10] sm:$0xff]
        %v373 = vld [vmem:[%s312 + $0x18] sm:$0xff]
        %v374 = vld [vmem:[%s312 + $0x20] sm:$0xff]
        %v375 = vld [vmem:[%s312 + $0x28] sm:$0xff]
        %v376 = vld [vmem:[%s312 + $0x30] sm:$0xff]
        %v377 = vld [vmem:[%s312 + $0x38] sm:$0xff]
        %v378 = vld [vmem:[%s322] sm:$0xff]
        %v379 = vld [vmem:[%s322 + $0x8] sm:$0xff]
        %v380 = vld [vmem:[%s322 + $0x10] sm:$0xff]
        %v381 = vld [vmem:[%s322 + $0x18] sm:$0xff]
        %v382 = vld [vmem:[%s322 + $0x20] sm:$0xff]
        %v383 = vld [vmem:[%s322 + $0x28] sm:$0xff]
        %v384 = vld [vmem:[%s322 + $0x30] sm:$0xff]
        %v385 = vld [vmem:[%s322 + $0x38] sm:$0xff]
        %vm386 = vcmp.ne.f32.partialorder %v378, %v378
        %vm387 = vcmp.ne.f32.partialorder %v379, %v379
        %vm388 = vcmp.ne.f32.partialorder %v380, %v380
        %vm389 = vcmp.ne.f32.partialorder %v381, %v381
        %vm390 = vcmp.ne.f32.partialorder %v382, %v382
        %vm391 = vcmp.ne.f32.partialorder %v383, %v383
        %vm392 = vcmp.ne.f32.partialorder %v384, %v384
        %vm393 = vcmp.ne.f32.partialorder %v385, %v385
        %v394 = vsel %vm386, %v370, %v378
        %v395 = vsel %vm387, %v371, %v379
        %v396 = vsel %vm388, %v372, %v380
        %v397 = vsel %vm389, %v373, %v381
        %v398 = vsel %vm390, %v374, %v382
        %v399 = vsel %vm391, %v375, %v383
        %v400 = vsel %vm392, %v376, %v384
        %v401 = vsel %vm393, %v377, %v385
        %v402 = vsub.f32 %v370, %v394
        %v403 = vsub.f32 %v371, %v395
        %v404 = vsub.f32 %v372, %v396
        %v405 = vsub.f32 %v373, %v397
        %v406 = vsub.f32 %v374, %v398
        %v407 = vsub.f32 %v375, %v399
        %v408 = vsub.f32 %v376, %v400
        %v409 = vsub.f32 %v377, %v401
        %v410 = vld [vmem:[#allocation2] sm:$0xff]
        %v412 = vperm.slane %v410, 0
        %v413 = vperm.slane %v410, 1
        %v414 = vperm.slane %v410, 2
        %v415 = vperm.slane %v410, 3
        %v416 = vperm.slane %v410, 4
        %v417 = vperm.slane %v410, 5
        %v418 = vperm.slane %v410, 6
        %v419 = vperm.slane %v410, 7
        %v428 = vmul.f32 %v402, %v412
        %v429 = vmul.f32 %v403, %v413
        %v430 = vmul.f32 %v404, %v414
        %v431 = vmul.f32 %v405, %v415
        %v432 = vmul.f32 %v406, %v416
        %v433 = vmul.f32 %v407, %v417
        %v434 = vmul.f32 %v408, %v418
        %v435 = vmul.f32 %v409, %v419
        %v436 = vand.u32 2147483647, %v428
        %v437 = vand.u32 2147483647, %v429
        %v438 = vand.u32 2147483647, %v430
        %v439 = vand.u32 2147483647, %v431
        %v440 = vand.u32 2147483647, %v432
        %v441 = vand.u32 2147483647, %v433
        %v442 = vand.u32 2147483647, %v434
        %v443 = vand.u32 2147483647, %v435
        %v444 = vld [vmem:[%s332] sm:$0xff]
        %v445 = vld [vmem:[#allocation5] sm:$0xff]
        %v446 = vld [vmem:[#allocation5 + $0x8] sm:$0xff]
        %v447 = vld [vmem:[#allocation5 + $0x10] sm:$0xff]
        %v448 = vld [vmem:[#allocation5 + $0x18] sm:$0xff]
        %v449 = vld [vmem:[#allocation5 + $0x20] sm:$0xff]
        %v450 = vld [vmem:[#allocation5 + $0x28] sm:$0xff]
        %v451 = vld [vmem:[#allocation5 + $0x30] sm:$0xff]
        %v452 = vld [vmem:[#allocation5 + $0x38] sm:$0xff]
        %v453 = vld [vmem:[#allocation5 + $0x40] sm:$0xff]
        %v454 = vld [vmem:[#allocation5 + $0x48] sm:$0xff]
        %v455 = vld [vmem:[#allocation5 + $0x50] sm:$0xff]
        %v456 = vld [vmem:[#allocation5 + $0x58] sm:$0xff]
        %v457 = vld [vmem:[#allocation5 + $0x60] sm:$0xff]
        %v458 = vld [vmem:[#allocation5 + $0x68] sm:$0xff]
        %v459 = vld [vmem:[#allocation5 + $0x70] sm:$0xff]
        %v460 = vld [vmem:[#allocation5 + $0x78] sm:$0xff]
        %v461 = vld [vmem:[#allocation5 + $0x80] sm:$0xff]
        %v462 = vld [vmem:[#allocation5 + $0x88] sm:$0xff]
        %v463 = vld [vmem:[#allocation5 + $0x90] sm:$0xff]
        %v464 = vld [vmem:[#allocation5 + $0x98] sm:$0xff]
        %v465 = vld [vmem:[#allocation5 + $0xa0] sm:$0xff]
        %v466 = vld [vmem:[#allocation5 + $0xa8] sm:$0xff]
        %v467 = vld [vmem:[#allocation5 + $0xb0] sm:$0xff]
        %v468 = vld [vmem:[#allocation5 + $0xb8] sm:$0xff]
        %v469 = vld [vmem:[#allocation5 + $0xc0] sm:$0xff]
        %v470 = vld [vmem:[#allocation5 + $0xc8] sm:$0xff]
        %v471 = vld [vmem:[#allocation5 + $0xd0] sm:$0xff]
        %v472 = vld [vmem:[#allocation5 + $0xd8] sm:$0xff]
        %v473 = vld [vmem:[#allocation5 + $0xe0] sm:$0xff]
        %v474 = vld [vmem:[#allocation5 + $0xe8] sm:$0xff]
        %v475 = vld [vmem:[#allocation5 + $0xf0] sm:$0xff]
        %v476 = vld [vmem:[#allocation5 + $0xf8] sm:$0xff]
        %v477 = vld [vmem:[#allocation5 + $0x100] sm:$0xff]
        %v478 = vld [vmem:[#allocation5 + $0x108] sm:$0xff]
        %v479 = vld [vmem:[#allocation5 + $0x110] sm:$0xff]
        %v480 = vld [vmem:[#allocation5 + $0x118] sm:$0xff]
        %v481 = vld [vmem:[#allocation5 + $0x120] sm:$0xff]
        %v482 = vld [vmem:[#allocation5 + $0x128] sm:$0xff]
        %v483 = vld [vmem:[#allocation5 + $0x130] sm:$0xff]
        %v484 = vld [vmem:[#allocation5 + $0x138] sm:$0xff]
        %v485 = vld [vmem:[#allocation5 + $0x140] sm:$0xff]
        %v486 = vld [vmem:[#allocation5 + $0x148] sm:$0xff]
        %v487 = vld [vmem:[#allocation5 + $0x150] sm:$0xff]
        %v488 = vld [vmem:[#allocation5 + $0x158] sm:$0xff]
        %v489 = vld [vmem:[#allocation5 + $0x160] sm:$0xff]
        %v490 = vld [vmem:[#allocation5 + $0x168] sm:$0xff]
        %v491 = vld [vmem:[#allocation5 + $0x170] sm:$0xff]
        %v492 = vld [vmem:[#allocation5 + $0x178] sm:$0xff]
        %v493 = vld [vmem:[#allocation5 + $0x180] sm:$0xff]
        %v494 = vld [vmem:[#allocation5 + $0x188] sm:$0xff]
        %v495 = vld [vmem:[#allocation5 + $0x190] sm:$0xff]
        %v496 = vld [vmem:[#allocation5 + $0x198] sm:$0xff]
        %v497 = vld [vmem:[#allocation5 + $0x1a0] sm:$0xff]
        %v498 = vld [vmem:[#allocation5 + $0x1a8] sm:$0xff]
        %v499 = vld [vmem:[#allocation5 + $0x1b0] sm:$0xff]
        %v500 = vld [vmem:[#allocation5 + $0x1b8] sm:$0xff]
        %v501 = vld [vmem:[#allocation5 + $0x1c0] sm:$0xff]
        %v502 = vld [vmem:[#allocation5 + $0x1c8] sm:$0xff]
        %v503 = vld [vmem:[#allocation5 + $0x1d0] sm:$0xff]
        %v504 = vld [vmem:[#allocation5 + $0x1d8] sm:$0xff]
        %v505 = vld [vmem:[#allocation5 + $0x1e0] sm:$0xff]
        %v506 = vld [vmem:[#allocation5 + $0x1e8] sm:$0xff]
        %v507 = vld [vmem:[#allocation5 + $0x1f0] sm:$0xff]
        %v508 = vld [vmem:[#allocation5 + $0x1f8] sm:$0xff]
        %v509 = vld [vmem:[#allocation5 + $0x200] sm:$0xff]
        %v510 = vld [vmem:[#allocation5 + $0x208] sm:$0xff]
        %v511 = vld [vmem:[#allocation5 + $0x210] sm:$0xff]
        %v512 = vld [vmem:[#allocation5 + $0x218] sm:$0xff]
        %v513 = vld [vmem:[#allocation5 + $0x220] sm:$0xff]
        %v514 = vld [vmem:[#allocation5 + $0x228] sm:$0xff]
        %v515 = vld [vmem:[#allocation5 + $0x230] sm:$0xff]
        %v516 = vld [vmem:[#allocation5 + $0x238] sm:$0xff]
        %v517 = vld [vmem:[#allocation5 + $0x240] sm:$0xff]
        %v518 = vld [vmem:[#allocation5 + $0x248] sm:$0xff]
        %v519 = vld [vmem:[#allocation5 + $0x250] sm:$0xff]
        %v520 = vld [vmem:[#allocation5 + $0x258] sm:$0xff]
        %v521 = vld [vmem:[#allocation5 + $0x260] sm:$0xff]
        %v522 = vld [vmem:[#allocation5 + $0x268] sm:$0xff]
        %v523 = vld [vmem:[#allocation5 + $0x270] sm:$0xff]
        %v524 = vld [vmem:[#allocation5 + $0x278] sm:$0xff]
        %v525 = vld [vmem:[#allocation5 + $0x280] sm:$0xff]
        %v526 = vld [vmem:[#allocation5 + $0x288] sm:$0xff]
        %v527 = vld [vmem:[#allocation5 + $0x290] sm:$0xff]
        %v528 = vld [vmem:[#allocation5 + $0x298] sm:$0xff]
        %v529 = vld [vmem:[#allocation5 + $0x2a0] sm:$0xff]
        %v530 = vld [vmem:[#allocation5 + $0x2a8] sm:$0xff]
        %v531 = vld [vmem:[#allocation5 + $0x2b0] sm:$0xff]
        %v532 = vld [vmem:[#allocation5 + $0x2b8] sm:$0xff]
        %v533 = vld [vmem:[#allocation5 + $0x2c0] sm:$0xff]
        %v534 = vld [vmem:[#allocation5 + $0x2c8] sm:$0xff]
        %v535 = vld [vmem:[#allocation5 + $0x2d0] sm:$0xff]
        %v536 = vld [vmem:[#allocation5 + $0x2d8] sm:$0xff]
        %v537 = vld [vmem:[#allocation5 + $0x2e0] sm:$0xff]
        %v538 = vld [vmem:[#allocation5 + $0x2e8] sm:$0xff]
        %v539 = vld [vmem:[#allocation5 + $0x2f0] sm:$0xff]
        %v540 = vld [vmem:[#allocation5 + $0x2f8] sm:$0xff]
        %v541 = vld [vmem:[#allocation5 + $0x300] sm:$0xff]
        %v542 = vld [vmem:[#allocation5 + $0x308] sm:$0xff]
        %v543 = vld [vmem:[#allocation5 + $0x310] sm:$0xff]
        %v544 = vld [vmem:[#allocation5 + $0x318] sm:$0xff]
        %v545 = vld [vmem:[#allocation5 + $0x320] sm:$0xff]
        %v546 = vld [vmem:[#allocation5 + $0x328] sm:$0xff]
        %v547 = vld [vmem:[#allocation5 + $0x330] sm:$0xff]
        %v548 = vld [vmem:[#allocation5 + $0x338] sm:$0xff]
        %v549 = vld [vmem:[#allocation5 + $0x340] sm:$0xff]
        %v550 = vld [vmem:[#allocation5 + $0x348] sm:$0xff]
        %v551 = vld [vmem:[#allocation5 + $0x350] sm:$0xff]
        %v552 = vld [vmem:[#allocation5 + $0x358] sm:$0xff]
        %v553 = vld [vmem:[#allocation5 + $0x360] sm:$0xff]
        %v554 = vld [vmem:[#allocation5 + $0x368] sm:$0xff]
        %v555 = vld [vmem:[#allocation5 + $0x370] sm:$0xff]
        %v556 = vld [vmem:[#allocation5 + $0x378] sm:$0xff]
        %v557 = vld [vmem:[#allocation5 + $0x380] sm:$0xff]
        %v558 = vld [vmem:[#allocation5 + $0x388] sm:$0xff]
        %v559 = vld [vmem:[#allocation5 + $0x390] sm:$0xff]
        %v560 = vld [vmem:[#allocation5 + $0x398] sm:$0xff]
        %v561 = vld [vmem:[#allocation5 + $0x3a0] sm:$0xff]
        %v562 = vld [vmem:[#allocation5 + $0x3a8] sm:$0xff]
        %v563 = vld [vmem:[#allocation5 + $0x3b0] sm:$0xff]
        %v564 = vld [vmem:[#allocation5 + $0x3b8] sm:$0xff]
        %v565 = vld [vmem:[#allocation5 + $0x3c0] sm:$0xff]
        %v566 = vld [vmem:[#allocation5 + $0x3c8] sm:$0xff]
        %v567 = vld [vmem:[#allocation5 + $0x3d0] sm:$0xff]
        %v568 = vld [vmem:[#allocation5 + $0x3d8] sm:$0xff]
        %v569 = vld [vmem:[#allocation5 + $0x3e0] sm:$0xff]
        %v570 = vld [vmem:[#allocation5 + $0x3e8] sm:$0xff]
        %v571 = vld [vmem:[#allocation5 + $0x3f0] sm:$0xff]
        %v572 = vld [vmem:[#allocation5 + $0x3f8] sm:$0xff]
        %v573 = vand.u32 %v565, 4294901760
        %574 = vmatpush.msra.mxu0 %v573
        %v575 = vand.u32 %v557, 4294901760
        %576 = vmatpush.msra.mxu0 %v575
        %v577 = vand.u32 %v549, 4294901760
        %578 = vmatpush.msra.mxu0 %v577
        %v579 = vand.u32 %v541, 4294901760
        %580 = vmatpush.msra.mxu0 %v579
        %v581 = vand.u32 %v533, 4294901760
        %582 = vmatpush.msra.mxu0 %v581
        %v583 = vand.u32 %v525, 4294901760
        %584 = vmatpush.msra.mxu0 %v583
        %v585 = vand.u32 %v517, 4294901760
        %586 = vmatpush.msra.mxu0 %v585
        %v587 = vand.u32 %v509, 4294901760
        %588 = vmatpush.msra.mxu0 %v587
        %v589 = vand.u32 %v501, 4294901760
        %590 = vmatpush.msra.mxu0 %v589
        %v591 = vand.u32 %v493, 4294901760
        %592 = vmatpush.msra.mxu0 %v591
        %v593 = vand.u32 %v485, 4294901760
        %594 = vmatpush.msra.mxu0 %v593
        %v595 = vand.u32 %v477, 4294901760
        %596 = vmatpush.msra.mxu0 %v595
        %v597 = vand.u32 %v469, 4294901760
        %598 = vmatpush.msra.mxu0 %v597
        %v599 = vand.u32 %v461, 4294901760
        %600 = vmatpush.msra.mxu0 %v599
        %v601 = vand.u32 %v453, 4294901760
        %602 = vmatpush.msra.mxu0 %v601
        %v603 = vand.u32 %v445, 4294901760
        %604 = vmatpush.msra.mxu0 %v603
        %v605 = vand.u32 %v444, 4294901760
        %v606 = vsub.f32 %v444, %v605
        %v607 = vand.u32 %v606, 4294901760
        %v608 = vsub.f32 %v606, %v607
        %v609 = vand.u32 %v608, 4294901760
        %610 = vmatmul.f32.gmra.mxu0 %v609
        %v611 = vpop.f32.mrf.mxu0
        %v612 = vadd.f32 0.0, %v611
        %613 = vdwg.mxu0
        %v614 = vand.u32 %v565, 4294901760
        %v615 = vsub.f32 %v565, %v614
        %v616 = vand.u32 %v615, 4294901760
        %v617 = vsub.f32 %v615, %v616
        %v618 = vand.u32 %v617, 4294901760
        %619 = vmatpush.msra.mxu0 %v618
        %v620 = vand.u32 %v557, 4294901760
        %v621 = vsub.f32 %v557, %v620
        %v622 = vand.u32 %v621, 4294901760
        %v623 = vsub.f32 %v621, %v622
        %v624 = vand.u32 %v623, 4294901760
        %625 = vmatpush.msra.mxu0 %v624
        %v626 = vand.u32 %v549, 4294901760
        %v627 = vsub.f32 %v549, %v626
        %v628 = vand.u32 %v627, 4294901760
        %v629 = vsub.f32 %v627, %v628
        %v630 = vand.u32 %v629, 4294901760
        %631 = vmatpush.msra.mxu0 %v630
        %v632 = vand.u32 %v541, 4294901760
        %v633 = vsub.f32 %v541, %v632
        %v634 = vand.u32 %v633, 4294901760
        %v635 = vsub.f32 %v633, %v634
        %v636 = vand.u32 %v635, 4294901760
        %637 = vmatpush.msra.mxu0 %v636
        %v638 = vand.u32 %v533, 4294901760
        %v639 = vsub.f32 %v533, %v638
        %v640 = vand.u32 %v639, 4294901760
        %v641 = vsub.f32 %v639, %v640
        %v642 = vand.u32 %v641, 4294901760
        %643 = vmatpush.msra.mxu0 %v642
        %v644 = vand.u32 %v525, 4294901760
        %v645 = vsub.f32 %v525, %v644
        %v646 = vand.u32 %v645, 4294901760
        %v647 = vsub.f32 %v645, %v646
        %v648 = vand.u32 %v647, 4294901760
        %649 = vmatpush.msra.mxu0 %v648
        %v650 = vand.u32 %v517, 4294901760
        %v651 = vsub.f32 %v517, %v650
        %v652 = vand.u32 %v651, 4294901760
        %v653 = vsub.f32 %v651, %v652
        %v654 = vand.u32 %v653, 4294901760
        %655 = vmatpush.msra.mxu0 %v654
        %v656 = vand.u32 %v509, 4294901760
        %v657 = vsub.f32 %v509, %v656
        %v658 = vand.u32 %v657, 4294901760
        %v659 = vsub.f32 %v657, %v658
        %v660 = vand.u32 %v659, 4294901760
        %661 = vmatpush.msra.mxu0 %v660
        %v662 = vand.u32 %v501, 4294901760
        %v663 = vsub.f32 %v501, %v662
        %v664 = vand.u32 %v663, 4294901760
        %v665 = vsub.f32 %v663, %v664
        %v666 = vand.u32 %v665, 4294901760
        %667 = vmatpush.msra.mxu0 %v666
        %v668 = vand.u32 %v493, 4294901760
        %v669 = vsub.f32 %v493, %v668
        %v670 = vand.u32 %v669, 4294901760
        %v671 = vsub.f32 %v669, %v670
        %v672 = vand.u32 %v671, 4294901760
        %673 = vmatpush.msra.mxu0 %v672
        %v674 = vand.u32 %v485, 4294901760
        %v675 = vsub.f32 %v485, %v674
        %v676 = vand.u32 %v675, 4294901760
        %v677 = vsub.f32 %v675, %v676
        %v678 = vand.u32 %v677, 4294901760
        %679 = vmatpush.msra.mxu0 %v678
        %v680 = vand.u32 %v477, 4294901760
        %v681 = vsub.f32 %v477, %v680
        %v682 = vand.u32 %v681, 4294901760
        %v683 = vsub.f32 %v681, %v682
        %v684 = vand.u32 %v683, 4294901760
        %685 = vmatpush.msra.mxu0 %v684
        %v686 = vand.u32 %v469, 4294901760
        %v687 = vsub.f32 %v469, %v686
        %v688 = vand.u32 %v687, 4294901760
        %v689 = vsub.f32 %v687, %v688
        %v690 = vand.u32 %v689, 4294901760
        %691 = vmatpush.msra.mxu0 %v690
        %v692 = vand.u32 %v461, 4294901760
        %v693 = vsub.f32 %v461, %v692
        %v694 = vand.u32 %v693, 4294901760
        %v695 = vsub.f32 %v693, %v694
        %v696 = vand.u32 %v695, 4294901760
        %697 = vmatpush.msra.mxu0 %v696
        %v698 = vand.u32 %v453, 4294901760
        %v699 = vsub.f32 %v453, %v698
        %v700 = vand.u32 %v699, 4294901760
        %v701 = vsub.f32 %v699, %v700
        %v702 = vand.u32 %v701, 4294901760
        %703 = vmatpush.msra.mxu0 %v702
        %v704 = vand.u32 %v445, 4294901760
        %v705 = vsub.f32 %v445, %v704
        %v706 = vand.u32 %v705, 4294901760
        %v707 = vsub.f32 %v705, %v706
        %v708 = vand.u32 %v707, 4294901760
        %709 = vmatpush.msra.mxu0 %v708
        %v710 = vand.u32 %v444, 4294901760
        %711 = vmatmul.f32.gmra.mxu0 %v710
        %v712 = vpop.f32.mrf.mxu0
        %v713 = vadd.f32 %v612, %v712
        %714 = vdwg.mxu0
        %v715 = vand.u32 %v565, 4294901760
        %v716 = vsub.f32 %v565, %v715
        %717 = vmatpush.msra.mxu0 %v716
        %v718 = vand.u32 %v557, 4294901760
        %v719 = vsub.f32 %v557, %v718
        %720 = vmatpush.msra.mxu0 %v719
        %v721 = vand.u32 %v549, 4294901760
        %v722 = vsub.f32 %v549, %v721
        %723 = vmatpush.msra.mxu0 %v722
        %v724 = vand.u32 %v541, 4294901760
        %v725 = vsub.f32 %v541, %v724
        %726 = vmatpush.msra.mxu0 %v725
        %v727 = vand.u32 %v533, 4294901760
        %v728 = vsub.f32 %v533, %v727
        %729 = vmatpush.msra.mxu0 %v728
        %v730 = vand.u32 %v525, 4294901760
        %v731 = vsub.f32 %v525, %v730
        %732 = vmatpush.msra.mxu0 %v731
        %v733 = vand.u32 %v517, 4294901760
        %v734 = vsub.f32 %v517, %v733
        %735 = vmatpush.msra.mxu0 %v734
        %v736 = vand.u32 %v509, 4294901760
        %v737 = vsub.f32 %v509, %v736
        %738 = vmatpush.msra.mxu0 %v737
        %v739 = vand.u32 %v501, 4294901760
        %v740 = vsub.f32 %v501, %v739
        %741 = vmatpush.msra.mxu0 %v740
        %v742 = vand.u32 %v493, 4294901760
        %v743 = vsub.f32 %v493, %v742
        %744 = vmatpush.msra.mxu0 %v743
        %v745 = vand.u32 %v485, 4294901760
        %v746 = vsub.f32 %v485, %v745
        %747 = vmatpush.msra.mxu0 %v746
        %v748 = vand.u32 %v477, 4294901760
        %v749 = vsub.f32 %v477, %v748
        %750 = vmatpush.msra.mxu0 %v749
        %v751 = vand.u32 %v469, 4294901760
        %v752 = vsub.f32 %v469, %v751
        %753 = vmatpush.msra.mxu0 %v752
        %v754 = vand.u32 %v461, 4294901760
        %v755 = vsub.f32 %v461, %v754
        %756 = vmatpush.msra.mxu0 %v755
        %v757 = vand.u32 %v453, 4294901760
        %v758 = vsub.f32 %v453, %v757
        %759 = vmatpush.msra.mxu0 %v758
        %v760 = vand.u32 %v445, 4294901760
        %v761 = vsub.f32 %v445, %v760
        %762 = vmatpush.msra.mxu0 %v761
        %v763 = vand.u32 %v444, 4294901760
        %v764 = vsub.f32 %v444, %v763
        %765 = vmatmul.f32.gmra.mxu0 %v764
        %v766 = vpop.f32.mrf.mxu0
        %v767 = vadd.f32 %v713, %v766
        %768 = vdwg.mxu0
        %v769 = vand.u32 %v565, 4294901760
        %770 = vmatpush.msra.mxu0 %v769
        %v771 = vand.u32 %v557, 4294901760
        %772 = vmatpush.msra.mxu0 %v771
        %v773 = vand.u32 %v549, 4294901760
        %774 = vmatpush.msra.mxu0 %v773
        %v775 = vand.u32 %v541, 4294901760
        %776 = vmatpush.msra.mxu0 %v775
        %v777 = vand.u32 %v533, 4294901760
        %778 = vmatpush.msra.mxu0 %v777
        %v779 = vand.u32 %v525, 4294901760
        %780 = vmatpush.msra.mxu0 %v779
        %v781 = vand.u32 %v517, 4294901760
        %782 = vmatpush.msra.mxu0 %v781
        %v783 = vand.u32 %v509, 4294901760
        %784 = vmatpush.msra.mxu0 %v783
        %v785 = vand.u32 %v501, 4294901760
        %786 = vmatpush.msra.mxu0 %v785
        %v787 = vand.u32 %v493, 4294901760
        %788 = vmatpush.msra.mxu0 %v787
        %v789 = vand.u32 %v485, 4294901760
        %790 = vmatpush.msra.mxu0 %v789
        %v791 = vand.u32 %v477, 4294901760
        %792 = vmatpush.msra.mxu0 %v791
        %v793 = vand.u32 %v469, 4294901760
        %794 = vmatpush.msra.mxu0 %v793
        %v795 = vand.u32 %v461, 4294901760
        %796 = vmatpush.msra.mxu0 %v795
        %v797 = vand.u32 %v453, 4294901760
        %798 = vmatpush.msra.mxu0 %v797
        %v799 = vand.u32 %v445, 4294901760
        %800 = vmatpush.msra.mxu0 %v799
        %v801 = vand.u32 %v444, 4294901760
        %v802 = vsub.f32 %v444, %v801
        %v803 = vand.u32 %v802, 4294901760
        %804 = vmatmul.f32.gmra.mxu0 %v803
        %v805 = vpop.f32.mrf.mxu0
        %v806 = vadd.f32 %v767, %v805
        %807 = vdwg.mxu0
        %v808 = vand.u32 %v565, 4294901760
        %v809 = vsub.f32 %v565, %v808
        %v810 = vand.u32 %v809, 4294901760
        %811 = vmatpush.msra.mxu0 %v810
        %v812 = vand.u32 %v557, 4294901760
        %v813 = vsub.f32 %v557, %v812
        %v814 = vand.u32 %v813, 4294901760
        %815 = vmatpush.msra.mxu0 %v814
        %v816 = vand.u32 %v549, 4294901760
        %v817 = vsub.f32 %v549, %v816
        %v818 = vand.u32 %v817, 4294901760
        %819 = vmatpush.msra.mxu0 %v818
        %v820 = vand.u32 %v541, 4294901760
        %v821 = vsub.f32 %v541, %v820
        %v822 = vand.u32 %v821, 4294901760
        %823 = vmatpush.msra.mxu0 %v822
        %v824 = vand.u32 %v533, 4294901760
        %v825 = vsub.f32 %v533, %v824
        %v826 = vand.u32 %v825, 4294901760
        %827 = vmatpush.msra.mxu0 %v826
        %v828 = vand.u32 %v525, 4294901760
        %v829 = vsub.f32 %v525, %v828
        %v830 = vand.u32 %v829, 4294901760
        %831 = vmatpush.msra.mxu0 %v830
        %v832 = vand.u32 %v517, 4294901760
        %v833 = vsub.f32 %v517, %v832
        %v834 = vand.u32 %v833, 4294901760
        %835 = vmatpush.msra.mxu0 %v834
        %v836 = vand.u32 %v509, 4294901760
        %v837 = vsub.f32 %v509, %v836
        %v838 = vand.u32 %v837, 4294901760
        %839 = vmatpush.msra.mxu0 %v838
        %v840 = vand.u32 %v501, 4294901760
        %v841 = vsub.f32 %v501, %v840
        %v842 = vand.u32 %v841, 4294901760
        %843 = vmatpush.msra.mxu0 %v842
        %v844 = vand.u32 %v493, 4294901760
        %v845 = vsub.f32 %v493, %v844
        %v846 = vand.u32 %v845, 4294901760
        %847 = vmatpush.msra.mxu0 %v846
        %v848 = vand.u32 %v485, 4294901760
        %v849 = vsub.f32 %v485, %v848
        %v850 = vand.u32 %v849, 4294901760
        %851 = vmatpush.msra.mxu0 %v850
        %v852 = vand.u32 %v477, 4294901760
        %v853 = vsub.f32 %v477, %v852
        %v854 = vand.u32 %v853, 4294901760
        %855 = vmatpush.msra.mxu0 %v854
        %v856 = vand.u32 %v469, 4294901760
        %v857 = vsub.f32 %v469, %v856
        %v858 = vand.u32 %v857, 4294901760
        %859 = vmatpush.msra.mxu0 %v858
        %v860 = vand.u32 %v461, 4294901760
        %v861 = vsub.f32 %v461, %v860
        %v862 = vand.u32 %v861, 4294901760
        %863 = vmatpush.msra.mxu0 %v862
        %v864 = vand.u32 %v453, 4294901760
        %v865 = vsub.f32 %v453, %v864
        %v866 = vand.u32 %v865, 4294901760
        %867 = vmatpush.msra.mxu0 %v866
        %v868 = vand.u32 %v445, 4294901760
        %v869 = vsub.f32 %v445, %v868
        %v870 = vand.u32 %v869, 4294901760
        %871 = vmatpush.msra.mxu0 %v870
        %v872 = vand.u32 %v444, 4294901760
        %873 = vmatmul.f32.gmra.mxu0 %v872
        %v874 = vpop.f32.mrf.mxu0
        %v875 = vadd.f32 %v806, %v874
        %876 = vdwg.mxu0
        %v877 = vand.u32 %v565, 4294901760
        %878 = vmatpush.msra.mxu0 %v877
        %v879 = vand.u32 %v557, 4294901760
        %880 = vmatpush.msra.mxu0 %v879
        %v881 = vand.u32 %v549, 4294901760
        %882 = vmatpush.msra.mxu0 %v881
        %v883 = vand.u32 %v541, 4294901760
        %884 = vmatpush.msra.mxu0 %v883
        %v885 = vand.u32 %v533, 4294901760
        %886 = vmatpush.msra.mxu0 %v885
        %v887 = vand.u32 %v525, 4294901760
        %888 = vmatpush.msra.mxu0 %v887
        %v889 = vand.u32 %v517, 4294901760
        %890 = vmatpush.msra.mxu0 %v889
        %v891 = vand.u32 %v509, 4294901760
        %892 = vmatpush.msra.mxu0 %v891
        %v893 = vand.u32 %v501, 4294901760
        %894 = vmatpush.msra.mxu0 %v893
        %v895 = vand.u32 %v493, 4294901760
        %896 = vmatpush.msra.mxu0 %v895
        %v897 = vand.u32 %v485, 4294901760
        %898 = vmatpush.msra.mxu0 %v897
        %v899 = vand.u32 %v477, 4294901760
        %900 = vmatpush.msra.mxu0 %v899
        %v901 = vand.u32 %v469, 4294901760
        %902 = vmatpush.msra.mxu0 %v901
        %v903 = vand.u32 %v461, 4294901760
        %904 = vmatpush.msra.mxu0 %v903
        %v905 = vand.u32 %v453, 4294901760
        %906 = vmatpush.msra.mxu0 %v905
        %v907 = vand.u32 %v445, 4294901760
        %908 = vmatpush.msra.mxu0 %v907
        %v909 = vand.u32 %v444, 4294901760
        %910 = vmatmul.f32.gmra.mxu0 %v909
        %v911 = vpop.f32.mrf.mxu0
        %v912 = vadd.f32 %v875, %v911
        %913 = vdwg.mxu0
        %v914 = vand.u32 %v566, 4294901760
        %915 = vmatpush.msra.mxu0 %v914
        %v916 = vand.u32 %v558, 4294901760
        %917 = vmatpush.msra.mxu0 %v916
        %v918 = vand.u32 %v550, 4294901760
        %919 = vmatpush.msra.mxu0 %v918
        %v920 = vand.u32 %v542, 4294901760
        %921 = vmatpush.msra.mxu0 %v920
        %v922 = vand.u32 %v534, 4294901760
        %923 = vmatpush.msra.mxu0 %v922
        %v924 = vand.u32 %v526, 4294901760
        %925 = vmatpush.msra.mxu0 %v924
        %v926 = vand.u32 %v518, 4294901760
        %927 = vmatpush.msra.mxu0 %v926
        %v928 = vand.u32 %v510, 4294901760
        %929 = vmatpush.msra.mxu0 %v928
        %v930 = vand.u32 %v502, 4294901760
        %931 = vmatpush.msra.mxu0 %v930
        %v932 = vand.u32 %v494, 4294901760
        %933 = vmatpush.msra.mxu0 %v932
        %v934 = vand.u32 %v486, 4294901760
        %935 = vmatpush.msra.mxu0 %v934
        %v936 = vand.u32 %v478, 4294901760
        %937 = vmatpush.msra.mxu0 %v936
        %v938 = vand.u32 %v470, 4294901760
        %939 = vmatpush.msra.mxu0 %v938
        %v940 = vand.u32 %v462, 4294901760
        %941 = vmatpush.msra.mxu0 %v940
        %v942 = vand.u32 %v454, 4294901760
        %943 = vmatpush.msra.mxu0 %v942
        %v944 = vand.u32 %v446, 4294901760
        %945 = vmatpush.msra.mxu0 %v944
        %v946 = vand.u32 %v444, 4294901760
        %v947 = vsub.f32 %v444, %v946
        %v948 = vand.u32 %v947, 4294901760
        %v949 = vsub.f32 %v947, %v948
        %v950 = vand.u32 %v949, 4294901760
        %951 = vmatmul.f32.gmra.mxu0 %v950
        %v952 = vpop.f32.mrf.mxu0
        %v953 = vadd.f32 0.0, %v952
        %954 = vdwg.mxu0
        %v955 = vand.u32 %v566, 4294901760
        %v956 = vsub.f32 %v566, %v955
        %v957 = vand.u32 %v956, 4294901760
        %v958 = vsub.f32 %v956, %v957
        %v959 = vand.u32 %v958, 4294901760
        %960 = vmatpush.msra.mxu0 %v959
        %v961 = vand.u32 %v558, 4294901760
        %v962 = vsub.f32 %v558, %v961
        %v963 = vand.u32 %v962, 4294901760
        %v964 = vsub.f32 %v962, %v963
        %v965 = vand.u32 %v964, 4294901760
        %966 = vmatpush.msra.mxu0 %v965
        %v967 = vand.u32 %v550, 4294901760
        %v968 = vsub.f32 %v550, %v967
        %v969 = vand.u32 %v968, 4294901760
        %v970 = vsub.f32 %v968, %v969
        %v971 = vand.u32 %v970, 4294901760
        %972 = vmatpush.msra.mxu0 %v971
        %v973 = vand.u32 %v542, 4294901760
        %v974 = vsub.f32 %v542, %v973
        %v975 = vand.u32 %v974, 4294901760
        %v976 = vsub.f32 %v974, %v975
        %v977 = vand.u32 %v976, 4294901760
        %978 = vmatpush.msra.mxu0 %v977
        %v979 = vand.u32 %v534, 4294901760
        %v980 = vsub.f32 %v534, %v979
        %v981 = vand.u32 %v980, 4294901760
        %v982 = vsub.f32 %v980, %v981
        %v983 = vand.u32 %v982, 4294901760
        %984 = vmatpush.msra.mxu0 %v983
        %v985 = vand.u32 %v526, 4294901760
        %v986 = vsub.f32 %v526, %v985
        %v987 = vand.u32 %v986, 4294901760
        %v988 = vsub.f32 %v986, %v987
        %v989 = vand.u32 %v988, 4294901760
        %990 = vmatpush.msra.mxu0 %v989
        %v991 = vand.u32 %v518, 4294901760
        %v992 = vsub.f32 %v518, %v991
        %v993 = vand.u32 %v992, 4294901760
        %v994 = vsub.f32 %v992, %v993
        %v995 = vand.u32 %v994, 4294901760
        %996 = vmatpush.msra.mxu0 %v995
        %v997 = vand.u32 %v510, 4294901760
        %v998 = vsub.f32 %v510, %v997
        %v999 = vand.u32 %v998, 4294901760
        %v1000 = vsub.f32 %v998, %v999
        %v1001 = vand.u32 %v1000, 4294901760
        %1002 = vmatpush.msra.mxu0 %v1001
        %v1003 = vand.u32 %v502, 4294901760
        %v1004 = vsub.f32 %v502, %v1003
        %v1005 = vand.u32 %v1004, 4294901760
        %v1006 = vsub.f32 %v1004, %v1005
        %v1007 = vand.u32 %v1006, 4294901760
        %1008 = vmatpush.msra.mxu0 %v1007
        %v1009 = vand.u32 %v494, 4294901760
        %v1010 = vsub.f32 %v494, %v1009
        %v1011 = vand.u32 %v1010, 4294901760
        %v1012 = vsub.f32 %v1010, %v1011
        %v1013 = vand.u32 %v1012, 4294901760
        %1014 = vmatpush.msra.mxu0 %v1013
        %v1015 = vand.u32 %v486, 4294901760
        %v1016 = vsub.f32 %v486, %v1015
        %v1017 = vand.u32 %v1016, 4294901760
        %v1018 = vsub.f32 %v1016, %v1017
        %v1019 = vand.u32 %v1018, 4294901760
        %1020 = vmatpush.msra.mxu0 %v1019
        %v1021 = vand.u32 %v478, 4294901760
        %v1022 = vsub.f32 %v478, %v1021
        %v1023 = vand.u32 %v1022, 4294901760
        %v1024 = vsub.f32 %v1022, %v1023
        %v1025 = vand.u32 %v1024, 4294901760
        %1026 = vmatpush.msra.mxu0 %v1025
        %v1027 = vand.u32 %v470, 4294901760
        %v1028 = vsub.f32 %v470, %v1027
        %v1029 = vand.u32 %v1028, 4294901760
        %v1030 = vsub.f32 %v1028, %v1029
        %v1031 = vand.u32 %v1030, 4294901760
        %1032 = vmatpush.msra.mxu0 %v1031
        %v1033 = vand.u32 %v462, 4294901760
        %v1034 = vsub.f32 %v462, %v1033
        %v1035 = vand.u32 %v1034, 4294901760
        %v1036 = vsub.f32 %v1034, %v1035
        %v1037 = vand.u32 %v1036, 4294901760
        %1038 = vmatpush.msra.mxu0 %v1037
        %v1039 = vand.u32 %v454, 4294901760
        %v1040 = vsub.f32 %v454, %v1039
        %v1041 = vand.u32 %v1040, 4294901760
        %v1042 = vsub.f32 %v1040, %v1041
        %v1043 = vand.u32 %v1042, 4294901760
        %1044 = vmatpush.msra.mxu0 %v1043
        %v1045 = vand.u32 %v446, 4294901760
        %v1046 = vsub.f32 %v446, %v1045
        %v1047 = vand.u32 %v1046, 4294901760
        %v1048 = vsub.f32 %v1046, %v1047
        %v1049 = vand.u32 %v1048, 4294901760
        %1050 = vmatpush.msra.mxu0 %v1049
        %v1051 = vand.u32 %v444, 4294901760
        %1052 = vmatmul.f32.gmra.mxu0 %v1051
        %v1053 = vpop.f32.mrf.mxu0
        %v1054 = vadd.f32 %v953, %v1053
        %1055 = vdwg.mxu0
        %v1056 = vand.u32 %v566, 4294901760
        %v1057 = vsub.f32 %v566, %v1056
        %1058 = vmatpush.msra.mxu0 %v1057
        %v1059 = vand.u32 %v558, 4294901760
        %v1060 = vsub.f32 %v558, %v1059
        %1061 = vmatpush.msra.mxu0 %v1060
        %v1062 = vand.u32 %v550, 4294901760
        %v1063 = vsub.f32 %v550, %v1062
        %1064 = vmatpush.msra.mxu0 %v1063
        %v1065 = vand.u32 %v542, 4294901760
        %v1066 = vsub.f32 %v542, %v1065
        %1067 = vmatpush.msra.mxu0 %v1066
        %v1068 = vand.u32 %v534, 4294901760
        %v1069 = vsub.f32 %v534, %v1068
        %1070 = vmatpush.msra.mxu0 %v1069
        %v1071 = vand.u32 %v526, 4294901760
        %v1072 = vsub.f32 %v526, %v1071
        %1073 = vmatpush.msra.mxu0 %v1072
        %v1074 = vand.u32 %v518, 4294901760
        %v1075 = vsub.f32 %v518, %v1074
        %1076 = vmatpush.msra.mxu0 %v1075
        %v1077 = vand.u32 %v510, 4294901760
        %v1078 = vsub.f32 %v510, %v1077
        %1079 = vmatpush.msra.mxu0 %v1078
        %v1080 = vand.u32 %v502, 4294901760
        %v1081 = vsub.f32 %v502, %v1080
        %1082 = vmatpush.msra.mxu0 %v1081
        %v1083 = vand.u32 %v494, 4294901760
        %v1084 = vsub.f32 %v494, %v1083
        %1085 = vmatpush.msra.mxu0 %v1084
        %v1086 = vand.u32 %v486, 4294901760
        %v1087 = vsub.f32 %v486, %v1086
        %1088 = vmatpush.msra.mxu0 %v1087
        %v1089 = vand.u32 %v478, 4294901760
        %v1090 = vsub.f32 %v478, %v1089
        %1091 = vmatpush.msra.mxu0 %v1090
        %v1092 = vand.u32 %v470, 4294901760
        %v1093 = vsub.f32 %v470, %v1092
        %1094 = vmatpush.msra.mxu0 %v1093
        %v1095 = vand.u32 %v462, 4294901760
        %v1096 = vsub.f32 %v462, %v1095
        %1097 = vmatpush.msra.mxu0 %v1096
        %v1098 = vand.u32 %v454, 4294901760
        %v1099 = vsub.f32 %v454, %v1098
        %1100 = vmatpush.msra.mxu0 %v1099
        %v1101 = vand.u32 %v446, 4294901760
        %v1102 = vsub.f32 %v446, %v1101
        %1103 = vmatpush.msra.mxu0 %v1102
        %v1104 = vand.u32 %v444, 4294901760
        %v1105 = vsub.f32 %v444, %v1104
        %1106 = vmatmul.f32.gmra.mxu0 %v1105
        %v1107 = vpop.f32.mrf.mxu0
        %v1108 = vadd.f32 %v1054, %v1107
        %1109 = vdwg.mxu0
        %v1110 = vand.u32 %v566, 4294901760
        %1111 = vmatpush.msra.mxu0 %v1110
        %v1112 = vand.u32 %v558, 4294901760
        %1113 = vmatpush.msra.mxu0 %v1112
        %v1114 = vand.u32 %v550, 4294901760
        %1115 = vmatpush.msra.mxu0 %v1114
        %v1116 = vand.u32 %v542, 4294901760
        %1117 = vmatpush.msra.mxu0 %v1116
        %v1118 = vand.u32 %v534, 4294901760
        %1119 = vmatpush.msra.mxu0 %v1118
        %v1120 = vand.u32 %v526, 4294901760
        %1121 = vmatpush.msra.mxu0 %v1120
        %v1122 = vand.u32 %v518, 4294901760
        %1123 = vmatpush.msra.mxu0 %v1122
        %v1124 = vand.u32 %v510, 4294901760
        %1125 = vmatpush.msra.mxu0 %v1124
        %v1126 = vand.u32 %v502, 4294901760
        %1127 = vmatpush.msra.mxu0 %v1126
        %v1128 = vand.u32 %v494, 4294901760
        %1129 = vmatpush.msra.mxu0 %v1128
        %v1130 = vand.u32 %v486, 4294901760
        %1131 = vmatpush.msra.mxu0 %v1130
        %v1132 = vand.u32 %v478, 4294901760
        %1133 = vmatpush.msra.mxu0 %v1132
        %v1134 = vand.u32 %v470, 4294901760
        %1135 = vmatpush.msra.mxu0 %v1134
        %v1136 = vand.u32 %v462, 4294901760
        %1137 = vmatpush.msra.mxu0 %v1136
        %v1138 = vand.u32 %v454, 4294901760
        %1139 = vmatpush.msra.mxu0 %v1138
        %v1140 = vand.u32 %v446, 4294901760
        %1141 = vmatpush.msra.mxu0 %v1140
        %v1142 = vand.u32 %v444, 4294901760
        %v1143 = vsub.f32 %v444, %v1142
        %v1144 = vand.u32 %v1143, 4294901760
        %1145 = vmatmul.f32.gmra.mxu0 %v1144
        %v1146 = vpop.f32.mrf.mxu0
        %v1147 = vadd.f32 %v1108, %v1146
        %1148 = vdwg.mxu0
        %v1149 = vand.u32 %v566, 4294901760
        %v1150 = vsub.f32 %v566, %v1149
        %v1151 = vand.u32 %v1150, 4294901760
        %1152 = vmatpush.msra.mxu0 %v1151
        %v1153 = vand.u32 %v558, 4294901760
        %v1154 = vsub.f32 %v558, %v1153
        %v1155 = vand.u32 %v1154, 4294901760
        %1156 = vmatpush.msra.mxu0 %v1155
        %v1157 = vand.u32 %v550, 4294901760
        %v1158 = vsub.f32 %v550, %v1157
        %v1159 = vand.u32 %v1158, 4294901760
        %1160 = vmatpush.msra.mxu0 %v1159
        %v1161 = vand.u32 %v542, 4294901760
        %v1162 = vsub.f32 %v542, %v1161
        %v1163 = vand.u32 %v1162, 4294901760
        %1164 = vmatpush.msra.mxu0 %v1163
        %v1165 = vand.u32 %v534, 4294901760
        %v1166 = vsub.f32 %v534, %v1165
        %v1167 = vand.u32 %v1166, 4294901760
        %1168 = vmatpush.msra.mxu0 %v1167
        %v1169 = vand.u32 %v526, 4294901760
        %v1170 = vsub.f32 %v526, %v1169
        %v1171 = vand.u32 %v1170, 4294901760
        %1172 = vmatpush.msra.mxu0 %v1171
        %v1173 = vand.u32 %v518, 4294901760
        %v1174 = vsub.f32 %v518, %v1173
        %v1175 = vand.u32 %v1174, 4294901760
        %1176 = vmatpush.msra.mxu0 %v1175
        %v1177 = vand.u32 %v510, 4294901760
        %v1178 = vsub.f32 %v510, %v1177
        %v1179 = vand.u32 %v1178, 4294901760
        %1180 = vmatpush.msra.mxu0 %v1179
        %v1181 = vand.u32 %v502, 4294901760
        %v1182 = vsub.f32 %v502, %v1181
        %v1183 = vand.u32 %v1182, 4294901760
        %1184 = vmatpush.msra.mxu0 %v1183
        %v1185 = vand.u32 %v494, 4294901760
        %v1186 = vsub.f32 %v494, %v1185
        %v1187 = vand.u32 %v1186, 4294901760
        %1188 = vmatpush.msra.mxu0 %v1187
        %v1189 = vand.u32 %v486, 4294901760
        %v1190 = vsub.f32 %v486, %v1189
        %v1191 = vand.u32 %v1190, 4294901760
        %1192 = vmatpush.msra.mxu0 %v1191
        %v1193 = vand.u32 %v478, 4294901760
        %v1194 = vsub.f32 %v478, %v1193
        %v1195 = vand.u32 %v1194, 4294901760
        %1196 = vmatpush.msra.mxu0 %v1195
        %v1197 = vand.u32 %v470, 4294901760
        %v1198 = vsub.f32 %v470, %v1197
        %v1199 = vand.u32 %v1198, 4294901760
        %1200 = vmatpush.msra.mxu0 %v1199
        %v1201 = vand.u32 %v462, 4294901760
        %v1202 = vsub.f32 %v462, %v1201
        %v1203 = vand.u32 %v1202, 4294901760
        %1204 = vmatpush.msra.mxu0 %v1203
        %v1205 = vand.u32 %v454, 4294901760
        %v1206 = vsub.f32 %v454, %v1205
        %v1207 = vand.u32 %v1206, 4294901760
        %1208 = vmatpush.msra.mxu0 %v1207
        %v1209 = vand.u32 %v446, 4294901760
        %v1210 = vsub.f32 %v446, %v1209
        %v1211 = vand.u32 %v1210, 4294901760
        %1212 = vmatpush.msra.mxu0 %v1211
        %v1213 = vand.u32 %v444, 4294901760
        %1214 = vmatmul.f32.gmra.mxu0 %v1213
        %v1215 = vpop.f32.mrf.mxu0
        %v1216 = vadd.f32 %v1147, %v1215
        %1217 = vdwg.mxu0
        %v1218 = vand.u32 %v566, 4294901760
        %1219 = vmatpush.msra.mxu0 %v1218
        %v1220 = vand.u32 %v558, 4294901760
        %1221 = vmatpush.msra.mxu0 %v1220
        %v1222 = vand.u32 %v550, 4294901760
        %1223 = vmatpush.msra.mxu0 %v1222
        %v1224 = vand.u32 %v542, 4294901760
        %1225 = vmatpush.msra.mxu0 %v1224
        %v1226 = vand.u32 %v534, 4294901760
        %1227 = vmatpush.msra.mxu0 %v1226
        %v1228 = vand.u32 %v526, 4294901760
        %1229 = vmatpush.msra.mxu0 %v1228
        %v1230 = vand.u32 %v518, 4294901760
        %1231 = vmatpush.msra.mxu0 %v1230
        %v1232 = vand.u32 %v510, 4294901760
        %1233 = vmatpush.msra.mxu0 %v1232
        %v1234 = vand.u32 %v502, 4294901760
        %1235 = vmatpush.msra.mxu0 %v1234
        %v1236 = vand.u32 %v494, 4294901760
        %1237 = vmatpush.msra.mxu0 %v1236
        %v1238 = vand.u32 %v486, 4294901760
        %1239 = vmatpush.msra.mxu0 %v1238
        %v1240 = vand.u32 %v478, 4294901760
        %1241 = vmatpush.msra.mxu0 %v1240
        %v1242 = vand.u32 %v470, 4294901760
        %1243 = vmatpush.msra.mxu0 %v1242
        %v1244 = vand.u32 %v462, 4294901760
        %1245 = vmatpush.msra.mxu0 %v1244
        %v1246 = vand.u32 %v454, 4294901760
        %1247 = vmatpush.msra.mxu0 %v1246
        %v1248 = vand.u32 %v446, 4294901760
        %1249 = vmatpush.msra.mxu0 %v1248
        %v1250 = vand.u32 %v444, 4294901760
        %1251 = vmatmul.f32.gmra.mxu0 %v1250
        %v1252 = vpop.f32.mrf.mxu0
        %v1253 = vadd.f32 %v1216, %v1252
        %1254 = vdwg.mxu0
        %v1255 = vand.u32 %v567, 4294901760
        %1256 = vmatpush.msra.mxu0 %v1255
        %v1257 = vand.u32 %v559, 4294901760
        %1258 = vmatpush.msra.mxu0 %v1257
        %v1259 = vand.u32 %v551, 4294901760
        %1260 = vmatpush.msra.mxu0 %v1259
        %v1261 = vand.u32 %v543, 4294901760
        %1262 = vmatpush.msra.mxu0 %v1261
        %v1263 = vand.u32 %v535, 4294901760
        %1264 = vmatpush.msra.mxu0 %v1263
        %v1265 = vand.u32 %v527, 4294901760
        %1266 = vmatpush.msra.mxu0 %v1265
        %v1267 = vand.u32 %v519, 4294901760
        %1268 = vmatpush.msra.mxu0 %v1267
        %v1269 = vand.u32 %v511, 4294901760
        %1270 = vmatpush.msra.mxu0 %v1269
        %v1271 = vand.u32 %v503, 4294901760
        %1272 = vmatpush.msra.mxu0 %v1271
        %v1273 = vand.u32 %v495, 4294901760
        %1274 = vmatpush.msra.mxu0 %v1273
        %v1275 = vand.u32 %v487, 4294901760
        %1276 = vmatpush.msra.mxu0 %v1275
        %v1277 = vand.u32 %v479, 4294901760
        %1278 = vmatpush.msra.mxu0 %v1277
        %v1279 = vand.u32 %v471, 4294901760
        %1280 = vmatpush.msra.mxu0 %v1279
        %v1281 = vand.u32 %v463, 4294901760
        %1282 = vmatpush.msra.mxu0 %v1281
        %v1283 = vand.u32 %v455, 4294901760
        %1284 = vmatpush.msra.mxu0 %v1283
        %v1285 = vand.u32 %v447, 4294901760
        %1286 = vmatpush.msra.mxu0 %v1285
        %v1287 = vand.u32 %v444, 4294901760
        %v1288 = vsub.f32 %v444, %v1287
        %v1289 = vand.u32 %v1288, 4294901760
        %v1290 = vsub.f32 %v1288, %v1289
        %v1291 = vand.u32 %v1290, 4294901760
        %1292 = vmatmul.f32.gmra.mxu0 %v1291
        %v1293 = vpop.f32.mrf.mxu0
        %v1294 = vadd.f32 0.0, %v1293
        %1295 = vdwg.mxu0
        %v1296 = vand.u32 %v567, 4294901760
        %v1297 = vsub.f32 %v567, %v1296
        %v1298 = vand.u32 %v1297, 4294901760
        %v1299 = vsub.f32 %v1297, %v1298
        %v1300 = vand.u32 %v1299, 4294901760
        %1301 = vmatpush.msra.mxu0 %v1300
        %v1302 = vand.u32 %v559, 4294901760
        %v1303 = vsub.f32 %v559, %v1302
        %v1304 = vand.u32 %v1303, 4294901760
        %v1305 = vsub.f32 %v1303, %v1304
        %v1306 = vand.u32 %v1305, 4294901760
        %1307 = vmatpush.msra.mxu0 %v1306
        %v1308 = vand.u32 %v551, 4294901760
        %v1309 = vsub.f32 %v551, %v1308
        %v1310 = vand.u32 %v1309, 4294901760
        %v1311 = vsub.f32 %v1309, %v1310
        %v1312 = vand.u32 %v1311, 4294901760
        %1313 = vmatpush.msra.mxu0 %v1312
        %v1314 = vand.u32 %v543, 4294901760
        %v1315 = vsub.f32 %v543, %v1314
        %v1316 = vand.u32 %v1315, 4294901760
        %v1317 = vsub.f32 %v1315, %v1316
        %v1318 = vand.u32 %v1317, 4294901760
        %1319 = vmatpush.msra.mxu0 %v1318
        %v1320 = vand.u32 %v535, 4294901760
        %v1321 = vsub.f32 %v535, %v1320
        %v1322 = vand.u32 %v1321, 4294901760
        %v1323 = vsub.f32 %v1321, %v1322
        %v1324 = vand.u32 %v1323, 4294901760
        %1325 = vmatpush.msra.mxu0 %v1324
        %v1326 = vand.u32 %v527, 4294901760
        %v1327 = vsub.f32 %v527, %v1326
        %v1328 = vand.u32 %v1327, 4294901760
        %v1329 = vsub.f32 %v1327, %v1328
        %v1330 = vand.u32 %v1329, 4294901760
        %1331 = vmatpush.msra.mxu0 %v1330
        %v1332 = vand.u32 %v519, 4294901760
        %v1333 = vsub.f32 %v519, %v1332
        %v1334 = vand.u32 %v1333, 4294901760
        %v1335 = vsub.f32 %v1333, %v1334
        %v1336 = vand.u32 %v1335, 4294901760
        %1337 = vmatpush.msra.mxu0 %v1336
        %v1338 = vand.u32 %v511, 4294901760
        %v1339 = vsub.f32 %v511, %v1338
        %v1340 = vand.u32 %v1339, 4294901760
        %v1341 = vsub.f32 %v1339, %v1340
        %v1342 = vand.u32 %v1341, 4294901760
        %1343 = vmatpush.msra.mxu0 %v1342
        %v1344 = vand.u32 %v503, 4294901760
        %v1345 = vsub.f32 %v503, %v1344
        %v1346 = vand.u32 %v1345, 4294901760
        %v1347 = vsub.f32 %v1345, %v1346
        %v1348 = vand.u32 %v1347, 4294901760
        %1349 = vmatpush.msra.mxu0 %v1348
        %v1350 = vand.u32 %v495, 4294901760
        %v1351 = vsub.f32 %v495, %v1350
        %v1352 = vand.u32 %v1351, 4294901760
        %v1353 = vsub.f32 %v1351, %v1352
        %v1354 = vand.u32 %v1353, 4294901760
        %1355 = vmatpush.msra.mxu0 %v1354
        %v1356 = vand.u32 %v487, 4294901760
        %v1357 = vsub.f32 %v487, %v1356
        %v1358 = vand.u32 %v1357, 4294901760
        %v1359 = vsub.f32 %v1357, %v1358
        %v1360 = vand.u32 %v1359, 4294901760
        %1361 = vmatpush.msra.mxu0 %v1360
        %v1362 = vand.u32 %v479, 4294901760
        %v1363 = vsub.f32 %v479, %v1362
        %v1364 = vand.u32 %v1363, 4294901760
        %v1365 = vsub.f32 %v1363, %v1364
        %v1366 = vand.u32 %v1365, 4294901760
        %1367 = vmatpush.msra.mxu0 %v1366
        %v1368 = vand.u32 %v471, 4294901760
        %v1369 = vsub.f32 %v471, %v1368
        %v1370 = vand.u32 %v1369, 4294901760
        %v1371 = vsub.f32 %v1369, %v1370
        %v1372 = vand.u32 %v1371, 4294901760
        %1373 = vmatpush.msra.mxu0 %v1372
        %v1374 = vand.u32 %v463, 4294901760
        %v1375 = vsub.f32 %v463, %v1374
        %v1376 = vand.u32 %v1375, 4294901760
        %v1377 = vsub.f32 %v1375, %v1376
        %v1378 = vand.u32 %v1377, 4294901760
        %1379 = vmatpush.msra.mxu0 %v1378
        %v1380 = vand.u32 %v455, 4294901760
        %v1381 = vsub.f32 %v455, %v1380
        %v1382 = vand.u32 %v1381, 4294901760
        %v1383 = vsub.f32 %v1381, %v1382
        %v1384 = vand.u32 %v1383, 4294901760
        %1385 = vmatpush.msra.mxu0 %v1384
        %v1386 = vand.u32 %v447, 4294901760
        %v1387 = vsub.f32 %v447, %v1386
        %v1388 = vand.u32 %v1387, 4294901760
        %v1389 = vsub.f32 %v1387, %v1388
        %v1390 = vand.u32 %v1389, 4294901760
        %1391 = vmatpush.msra.mxu0 %v1390
        %v1392 = vand.u32 %v444, 4294901760
        %1393 = vmatmul.f32.gmra.mxu0 %v1392
        %v1394 = vpop.f32.mrf.mxu0
        %v1395 = vadd.f32 %v1294, %v1394
        %1396 = vdwg.mxu0
        %v1397 = vand.u32 %v567, 4294901760
        %v1398 = vsub.f32 %v567, %v1397
        %1399 = vmatpush.msra.mxu0 %v1398
        %v1400 = vand.u32 %v559, 4294901760
        %v1401 = vsub.f32 %v559, %v1400
        %1402 = vmatpush.msra.mxu0 %v1401
        %v1403 = vand.u32 %v551, 4294901760
        %v1404 = vsub.f32 %v551, %v1403
        %1405 = vmatpush.msra.mxu0 %v1404
        %v1406 = vand.u32 %v543, 4294901760
        %v1407 = vsub.f32 %v543, %v1406
        %1408 = vmatpush.msra.mxu0 %v1407
        %v1409 = vand.u32 %v535, 4294901760
        %v1410 = vsub.f32 %v535, %v1409
        %1411 = vmatpush.msra.mxu0 %v1410
        %v1412 = vand.u32 %v527, 4294901760
        %v1413 = vsub.f32 %v527, %v1412
        %1414 = vmatpush.msra.mxu0 %v1413
        %v1415 = vand.u32 %v519, 4294901760
        %v1416 = vsub.f32 %v519, %v1415
        %1417 = vmatpush.msra.mxu0 %v1416
        %v1418 = vand.u32 %v511, 4294901760
        %v1419 = vsub.f32 %v511, %v1418
        %1420 = vmatpush.msra.mxu0 %v1419
        %v1421 = vand.u32 %v503, 4294901760
        %v1422 = vsub.f32 %v503, %v1421
        %1423 = vmatpush.msra.mxu0 %v1422
        %v1424 = vand.u32 %v495, 4294901760
        %v1425 = vsub.f32 %v495, %v1424
        %1426 = vmatpush.msra.mxu0 %v1425
        %v1427 = vand.u32 %v487, 4294901760
        %v1428 = vsub.f32 %v487, %v1427
        %1429 = vmatpush.msra.mxu0 %v1428
        %v1430 = vand.u32 %v479, 4294901760
        %v1431 = vsub.f32 %v479, %v1430
        %1432 = vmatpush.msra.mxu0 %v1431
        %v1433 = vand.u32 %v471, 4294901760
        %v1434 = vsub.f32 %v471, %v1433
        %1435 = vmatpush.msra.mxu0 %v1434
        %v1436 = vand.u32 %v463, 4294901760
        %v1437 = vsub.f32 %v463, %v1436
        %1438 = vmatpush.msra.mxu0 %v1437
        %v1439 = vand.u32 %v455, 4294901760
        %v1440 = vsub.f32 %v455, %v1439
        %1441 = vmatpush.msra.mxu0 %v1440
        %v1442 = vand.u32 %v447, 4294901760
        %v1443 = vsub.f32 %v447, %v1442
        %1444 = vmatpush.msra.mxu0 %v1443
        %v1445 = vand.u32 %v444, 4294901760
        %v1446 = vsub.f32 %v444, %v1445
        %1447 = vmatmul.f32.gmra.mxu0 %v1446
        %v1448 = vpop.f32.mrf.mxu0
        %v1449 = vadd.f32 %v1395, %v1448
        %1450 = vdwg.mxu0
        %v1451 = vand.u32 %v567, 4294901760
        %1452 = vmatpush.msra.mxu0 %v1451
        %v1453 = vand.u32 %v559, 4294901760
        %1454 = vmatpush.msra.mxu0 %v1453
        %v1455 = vand.u32 %v551, 4294901760
        %1456 = vmatpush.msra.mxu0 %v1455
        %v1457 = vand.u32 %v543, 4294901760
        %1458 = vmatpush.msra.mxu0 %v1457
        %v1459 = vand.u32 %v535, 4294901760
        %1460 = vmatpush.msra.mxu0 %v1459
        %v1461 = vand.u32 %v527, 4294901760
        %1462 = vmatpush.msra.mxu0 %v1461
        %v1463 = vand.u32 %v519, 4294901760
        %1464 = vmatpush.msra.mxu0 %v1463
        %v1465 = vand.u32 %v511, 4294901760
        %1466 = vmatpush.msra.mxu0 %v1465
        %v1467 = vand.u32 %v503, 4294901760
        %1468 = vmatpush.msra.mxu0 %v1467
        %v1469 = vand.u32 %v495, 4294901760
        %1470 = vmatpush.msra.mxu0 %v1469
        %v1471 = vand.u32 %v487, 4294901760
        %1472 = vmatpush.msra.mxu0 %v1471
        %v1473 = vand.u32 %v479, 4294901760
        %1474 = vmatpush.msra.mxu0 %v1473
        %v1475 = vand.u32 %v471, 4294901760
        %1476 = vmatpush.msra.mxu0 %v1475
        %v1477 = vand.u32 %v463, 4294901760
        %1478 = vmatpush.msra.mxu0 %v1477
        %v1479 = vand.u32 %v455, 4294901760
        %1480 = vmatpush.msra.mxu0 %v1479
        %v1481 = vand.u32 %v447, 4294901760
        %1482 = vmatpush.msra.mxu0 %v1481
        %v1483 = vand.u32 %v444, 4294901760
        %v1484 = vsub.f32 %v444, %v1483
        %v1485 = vand.u32 %v1484, 4294901760
        %1486 = vmatmul.f32.gmra.mxu0 %v1485
        %v1487 = vpop.f32.mrf.mxu0
        %v1488 = vadd.f32 %v1449, %v1487
        %1489 = vdwg.mxu0
        %v1490 = vand.u32 %v567, 4294901760
        %v1491 = vsub.f32 %v567, %v1490
        %v1492 = vand.u32 %v1491, 4294901760
        %1493 = vmatpush.msra.mxu0 %v1492
        %v1494 = vand.u32 %v559, 4294901760
        %v1495 = vsub.f32 %v559, %v1494
        %v1496 = vand.u32 %v1495, 4294901760
        %1497 = vmatpush.msra.mxu0 %v1496
        %v1498 = vand.u32 %v551, 4294901760
        %v1499 = vsub.f32 %v551, %v1498
        %v1500 = vand.u32 %v1499, 4294901760
        %1501 = vmatpush.msra.mxu0 %v1500
        %v1502 = vand.u32 %v543, 4294901760
        %v1503 = vsub.f32 %v543, %v1502
        %v1504 = vand.u32 %v1503, 4294901760
        %1505 = vmatpush.msra.mxu0 %v1504
        %v1506 = vand.u32 %v535, 4294901760
        %v1507 = vsub.f32 %v535, %v1506
        %v1508 = vand.u32 %v1507, 4294901760
        %1509 = vmatpush.msra.mxu0 %v1508
        %v1510 = vand.u32 %v527, 4294901760
        %v1511 = vsub.f32 %v527, %v1510
        %v1512 = vand.u32 %v1511, 4294901760
        %1513 = vmatpush.msra.mxu0 %v1512
        %v1514 = vand.u32 %v519, 4294901760
        %v1515 = vsub.f32 %v519, %v1514
        %v1516 = vand.u32 %v1515, 4294901760
        %1517 = vmatpush.msra.mxu0 %v1516
        %v1518 = vand.u32 %v511, 4294901760
        %v1519 = vsub.f32 %v511, %v1518
        %v1520 = vand.u32 %v1519, 4294901760
        %1521 = vmatpush.msra.mxu0 %v1520
        %v1522 = vand.u32 %v503, 4294901760
        %v1523 = vsub.f32 %v503, %v1522
        %v1524 = vand.u32 %v1523, 4294901760
        %1525 = vmatpush.msra.mxu0 %v1524
        %v1526 = vand.u32 %v495, 4294901760
        %v1527 = vsub.f32 %v495, %v1526
        %v1528 = vand.u32 %v1527, 4294901760
        %1529 = vmatpush.msra.mxu0 %v1528
        %v1530 = vand.u32 %v487, 4294901760
        %v1531 = vsub.f32 %v487, %v1530
        %v1532 = vand.u32 %v1531, 4294901760
        %1533 = vmatpush.msra.mxu0 %v1532
        %v1534 = vand.u32 %v479, 4294901760
        %v1535 = vsub.f32 %v479, %v1534
        %v1536 = vand.u32 %v1535, 4294901760
        %1537 = vmatpush.msra.mxu0 %v1536
        %v1538 = vand.u32 %v471, 4294901760
        %v1539 = vsub.f32 %v471, %v1538
        %v1540 = vand.u32 %v1539, 4294901760
        %1541 = vmatpush.msra.mxu0 %v1540
        %v1542 = vand.u32 %v463, 4294901760
        %v1543 = vsub.f32 %v463, %v1542
        %v1544 = vand.u32 %v1543, 4294901760
        %1545 = vmatpush.msra.mxu0 %v1544
        %v1546 = vand.u32 %v455, 4294901760
        %v1547 = vsub.f32 %v455, %v1546
        %v1548 = vand.u32 %v1547, 4294901760
        %1549 = vmatpush.msra.mxu0 %v1548
        %v1550 = vand.u32 %v447, 4294901760
        %v1551 = vsub.f32 %v447, %v1550
        %v1552 = vand.u32 %v1551, 4294901760
        %1553 = vmatpush.msra.mxu0 %v1552
        %v1554 = vand.u32 %v444, 4294901760
        %1555 = vmatmul.f32.gmra.mxu0 %v1554
        %v1556 = vpop.f32.mrf.mxu0
        %v1557 = vadd.f32 %v1488, %v1556
        %1558 = vdwg.mxu0
        %v1559 = vand.u32 %v567, 4294901760
        %1560 = vmatpush.msra.mxu0 %v1559
        %v1561 = vand.u32 %v559, 4294901760
        %1562 = vmatpush.msra.mxu0 %v1561
        %v1563 = vand.u32 %v551, 4294901760
        %1564 = vmatpush.msra.mxu0 %v1563
        %v1565 = vand.u32 %v543, 4294901760
        %1566 = vmatpush.msra.mxu0 %v1565
        %v1567 = vand.u32 %v535, 4294901760
        %1568 = vmatpush.msra.mxu0 %v1567
        %v1569 = vand.u32 %v527, 4294901760
        %1570 = vmatpush.msra.mxu0 %v1569
        %v1571 = vand.u32 %v519, 4294901760
        %1572 = vmatpush.msra.mxu0 %v1571
        %v1573 = vand.u32 %v511, 4294901760
        %1574 = vmatpush.msra.mxu0 %v1573
        %v1575 = vand.u32 %v503, 4294901760
        %1576 = vmatpush.msra.mxu0 %v1575
        %v1577 = vand.u32 %v495, 4294901760
        %1578 = vmatpush.msra.mxu0 %v1577
        %v1579 = vand.u32 %v487, 4294901760
        %1580 = vmatpush.msra.mxu0 %v1579
        %v1581 = vand.u32 %v479, 4294901760
        %1582 = vmatpush.msra.mxu0 %v1581
        %v1583 = vand.u32 %v471, 4294901760
        %1584 = vmatpush.msra.mxu0 %v1583
        %v1585 = vand.u32 %v463, 4294901760
        %1586 = vmatpush.msra.mxu0 %v1585
        %v1587 = vand.u32 %v455, 4294901760
        %1588 = vmatpush.msra.mxu0 %v1587
        %v1589 = vand.u32 %v447, 4294901760
        %1590 = vmatpush.msra.mxu0 %v1589
        %v1591 = vand.u32 %v444, 4294901760
        %1592 = vmatmul.f32.gmra.mxu0 %v1591
        %v1593 = vpop.f32.mrf.mxu0
        %v1594 = vadd.f32 %v1557, %v1593
        %1595 = vdwg.mxu0
        %v1596 = vand.u32 %v568, 4294901760
        %1597 = vmatpush.msra.mxu0 %v1596
        %v1598 = vand.u32 %v560, 4294901760
        %1599 = vmatpush.msra.mxu0 %v1598
        %v1600 = vand.u32 %v552, 4294901760
        %1601 = vmatpush.msra.mxu0 %v1600
        %v1602 = vand.u32 %v544, 4294901760
        %1603 = vmatpush.msra.mxu0 %v1602
        %v1604 = vand.u32 %v536, 4294901760
        %1605 = vmatpush.msra.mxu0 %v1604
        %v1606 = vand.u32 %v528, 4294901760
        %1607 = vmatpush.msra.mxu0 %v1606
        %v1608 = vand.u32 %v520, 4294901760
        %1609 = vmatpush.msra.mxu0 %v1608
        %v1610 = vand.u32 %v512, 4294901760
        %1611 = vmatpush.msra.mxu0 %v1610
        %v1612 = vand.u32 %v504, 4294901760
        %1613 = vmatpush.msra.mxu0 %v1612
        %v1614 = vand.u32 %v496, 4294901760
        %1615 = vmatpush.msra.mxu0 %v1614
        %v1616 = vand.u32 %v488, 4294901760
        %1617 = vmatpush.msra.mxu0 %v1616
        %v1618 = vand.u32 %v480, 4294901760
        %1619 = vmatpush.msra.mxu0 %v1618
        %v1620 = vand.u32 %v472, 4294901760
        %1621 = vmatpush.msra.mxu0 %v1620
        %v1622 = vand.u32 %v464, 4294901760
        %1623 = vmatpush.msra.mxu0 %v1622
        %v1624 = vand.u32 %v456, 4294901760
        %1625 = vmatpush.msra.mxu0 %v1624
        %v1626 = vand.u32 %v448, 4294901760
        %1627 = vmatpush.msra.mxu0 %v1626
        %v1628 = vand.u32 %v444, 4294901760
        %v1629 = vsub.f32 %v444, %v1628
        %v1630 = vand.u32 %v1629, 4294901760
        %v1631 = vsub.f32 %v1629, %v1630
        %v1632 = vand.u32 %v1631, 4294901760
        %1633 = vmatmul.f32.gmra.mxu0 %v1632
        %v1634 = vpop.f32.mrf.mxu0
        %v1635 = vadd.f32 0.0, %v1634
        %1636 = vdwg.mxu0
        %v1637 = vand.u32 %v568, 4294901760
        %v1638 = vsub.f32 %v568, %v1637
        %v1639 = vand.u32 %v1638, 4294901760
        %v1640 = vsub.f32 %v1638, %v1639
        %v1641 = vand.u32 %v1640, 4294901760
        %1642 = vmatpush.msra.mxu0 %v1641
        %v1643 = vand.u32 %v560, 4294901760
        %v1644 = vsub.f32 %v560, %v1643
        %v1645 = vand.u32 %v1644, 4294901760
        %v1646 = vsub.f32 %v1644, %v1645
        %v1647 = vand.u32 %v1646, 4294901760
        %1648 = vmatpush.msra.mxu0 %v1647
        %v1649 = vand.u32 %v552, 4294901760
        %v1650 = vsub.f32 %v552, %v1649
        %v1651 = vand.u32 %v1650, 4294901760
        %v1652 = vsub.f32 %v1650, %v1651
        %v1653 = vand.u32 %v1652, 4294901760
        %1654 = vmatpush.msra.mxu0 %v1653
        %v1655 = vand.u32 %v544, 4294901760
        %v1656 = vsub.f32 %v544, %v1655
        %v1657 = vand.u32 %v1656, 4294901760
        %v1658 = vsub.f32 %v1656, %v1657
        %v1659 = vand.u32 %v1658, 4294901760
        %1660 = vmatpush.msra.mxu0 %v1659
        %v1661 = vand.u32 %v536, 4294901760
        %v1662 = vsub.f32 %v536, %v1661
        %v1663 = vand.u32 %v1662, 4294901760
        %v1664 = vsub.f32 %v1662, %v1663
        %v1665 = vand.u32 %v1664, 4294901760
        %1666 = vmatpush.msra.mxu0 %v1665
        %v1667 = vand.u32 %v528, 4294901760
        %v1668 = vsub.f32 %v528, %v1667
        %v1669 = vand.u32 %v1668, 4294901760
        %v1670 = vsub.f32 %v1668, %v1669
        %v1671 = vand.u32 %v1670, 4294901760
        %1672 = vmatpush.msra.mxu0 %v1671
        %v1673 = vand.u32 %v520, 4294901760
        %v1674 = vsub.f32 %v520, %v1673
        %v1675 = vand.u32 %v1674, 4294901760
        %v1676 = vsub.f32 %v1674, %v1675
        %v1677 = vand.u32 %v1676, 4294901760
        %1678 = vmatpush.msra.mxu0 %v1677
        %v1679 = vand.u32 %v512, 4294901760
        %v1680 = vsub.f32 %v512, %v1679
        %v1681 = vand.u32 %v1680, 4294901760
        %v1682 = vsub.f32 %v1680, %v1681
        %v1683 = vand.u32 %v1682, 4294901760
        %1684 = vmatpush.msra.mxu0 %v1683
        %v1685 = vand.u32 %v504, 4294901760
        %v1686 = vsub.f32 %v504, %v1685
        %v1687 = vand.u32 %v1686, 4294901760
        %v1688 = vsub.f32 %v1686, %v1687
        %v1689 = vand.u32 %v1688, 4294901760
        %1690 = vmatpush.msra.mxu0 %v1689
        %v1691 = vand.u32 %v496, 4294901760
        %v1692 = vsub.f32 %v496, %v1691
        %v1693 = vand.u32 %v1692, 4294901760
        %v1694 = vsub.f32 %v1692, %v1693
        %v1695 = vand.u32 %v1694, 4294901760
        %1696 = vmatpush.msra.mxu0 %v1695
        %v1697 = vand.u32 %v488, 4294901760
        %v1698 = vsub.f32 %v488, %v1697
        %v1699 = vand.u32 %v1698, 4294901760
        %v1700 = vsub.f32 %v1698, %v1699
        %v1701 = vand.u32 %v1700, 4294901760
        %1702 = vmatpush.msra.mxu0 %v1701
        %v1703 = vand.u32 %v480, 4294901760
        %v1704 = vsub.f32 %v480, %v1703
        %v1705 = vand.u32 %v1704, 4294901760
        %v1706 = vsub.f32 %v1704, %v1705
        %v1707 = vand.u32 %v1706, 4294901760
        %1708 = vmatpush.msra.mxu0 %v1707
        %v1709 = vand.u32 %v472, 4294901760
        %v1710 = vsub.f32 %v472, %v1709
        %v1711 = vand.u32 %v1710, 4294901760
        %v1712 = vsub.f32 %v1710, %v1711
        %v1713 = vand.u32 %v1712, 4294901760
        %1714 = vmatpush.msra.mxu0 %v1713
        %v1715 = vand.u32 %v464, 4294901760
        %v1716 = vsub.f32 %v464, %v1715
        %v1717 = vand.u32 %v1716, 4294901760
        %v1718 = vsub.f32 %v1716, %v1717
        %v1719 = vand.u32 %v1718, 4294901760
        %1720 = vmatpush.msra.mxu0 %v1719
        %v1721 = vand.u32 %v456, 4294901760
        %v1722 = vsub.f32 %v456, %v1721
        %v1723 = vand.u32 %v1722, 4294901760
        %v1724 = vsub.f32 %v1722, %v1723
        %v1725 = vand.u32 %v1724, 4294901760
        %1726 = vmatpush.msra.mxu0 %v1725
        %v1727 = vand.u32 %v448, 4294901760
        %v1728 = vsub.f32 %v448, %v1727
        %v1729 = vand.u32 %v1728, 4294901760
        %v1730 = vsub.f32 %v1728, %v1729
        %v1731 = vand.u32 %v1730, 4294901760
        %1732 = vmatpush.msra.mxu0 %v1731
        %v1733 = vand.u32 %v444, 4294901760
        %1734 = vmatmul.f32.gmra.mxu0 %v1733
        %v1735 = vpop.f32.mrf.mxu0
        %v1736 = vadd.f32 %v1635, %v1735
        %1737 = vdwg.mxu0
        %v1738 = vand.u32 %v568, 4294901760
        %v1739 = vsub.f32 %v568, %v1738
        %1740 = vmatpush.msra.mxu0 %v1739
        %v1741 = vand.u32 %v560, 4294901760
        %v1742 = vsub.f32 %v560, %v1741
        %1743 = vmatpush.msra.mxu0 %v1742
        %v1744 = vand.u32 %v552, 4294901760
        %v1745 = vsub.f32 %v552, %v1744
        %1746 = vmatpush.msra.mxu0 %v1745
        %v1747 = vand.u32 %v544, 4294901760
        %v1748 = vsub.f32 %v544, %v1747
        %1749 = vmatpush.msra.mxu0 %v1748
        %v1750 = vand.u32 %v536, 4294901760
        %v1751 = vsub.f32 %v536, %v1750
        %1752 = vmatpush.msra.mxu0 %v1751
        %v1753 = vand.u32 %v528, 4294901760
        %v1754 = vsub.f32 %v528, %v1753
        %1755 = vmatpush.msra.mxu0 %v1754
        %v1756 = vand.u32 %v520, 4294901760
        %v1757 = vsub.f32 %v520, %v1756
        %1758 = vmatpush.msra.mxu0 %v1757
        %v1759 = vand.u32 %v512, 4294901760
        %v1760 = vsub.f32 %v512, %v1759
        %1761 = vmatpush.msra.mxu0 %v1760
        %v1762 = vand.u32 %v504, 4294901760
        %v1763 = vsub.f32 %v504, %v1762
        %1764 = vmatpush.msra.mxu0 %v1763
        %v1765 = vand.u32 %v496, 4294901760
        %v1766 = vsub.f32 %v496, %v1765
        %1767 = vmatpush.msra.mxu0 %v1766
        %v1768 = vand.u32 %v488, 4294901760
        %v1769 = vsub.f32 %v488, %v1768
        %1770 = vmatpush.msra.mxu0 %v1769
        %v1771 = vand.u32 %v480, 4294901760
        %v1772 = vsub.f32 %v480, %v1771
        %1773 = vmatpush.msra.mxu0 %v1772
        %v1774 = vand.u32 %v472, 4294901760
        %v1775 = vsub.f32 %v472, %v1774
        %1776 = vmatpush.msra.mxu0 %v1775
        %v1777 = vand.u32 %v464, 4294901760
        %v1778 = vsub.f32 %v464, %v1777
        %1779 = vmatpush.msra.mxu0 %v1778
        %v1780 = vand.u32 %v456, 4294901760
        %v1781 = vsub.f32 %v456, %v1780
        %1782 = vmatpush.msra.mxu0 %v1781
        %v1783 = vand.u32 %v448, 4294901760
        %v1784 = vsub.f32 %v448, %v1783
        %1785 = vmatpush.msra.mxu0 %v1784
        %v1786 = vand.u32 %v444, 4294901760
        %v1787 = vsub.f32 %v444, %v1786
        %1788 = vmatmul.f32.gmra.mxu0 %v1787
        %v1789 = vpop.f32.mrf.mxu0
        %v1790 = vadd.f32 %v1736, %v1789
        %1791 = vdwg.mxu0
        %v1792 = vand.u32 %v568, 4294901760
        %1793 = vmatpush.msra.mxu0 %v1792
        %v1794 = vand.u32 %v560, 4294901760
        %1795 = vmatpush.msra.mxu0 %v1794
        %v1796 = vand.u32 %v552, 4294901760
        %1797 = vmatpush.msra.mxu0 %v1796
        %v1798 = vand.u32 %v544, 4294901760
        %1799 = vmatpush.msra.mxu0 %v1798
        %v1800 = vand.u32 %v536, 4294901760
        %1801 = vmatpush.msra.mxu0 %v1800
        %v1802 = vand.u32 %v528, 4294901760
        %1803 = vmatpush.msra.mxu0 %v1802
        %v1804 = vand.u32 %v520, 4294901760
        %1805 = vmatpush.msra.mxu0 %v1804
        %v1806 = vand.u32 %v512, 4294901760
        %1807 = vmatpush.msra.mxu0 %v1806
        %v1808 = vand.u32 %v504, 4294901760
        %1809 = vmatpush.msra.mxu0 %v1808
        %v1810 = vand.u32 %v496, 4294901760
        %1811 = vmatpush.msra.mxu0 %v1810
        %v1812 = vand.u32 %v488, 4294901760
        %1813 = vmatpush.msra.mxu0 %v1812
        %v1814 = vand.u32 %v480, 4294901760
        %1815 = vmatpush.msra.mxu0 %v1814
        %v1816 = vand.u32 %v472, 4294901760
        %1817 = vmatpush.msra.mxu0 %v1816
        %v1818 = vand.u32 %v464, 4294901760
        %1819 = vmatpush.msra.mxu0 %v1818
        %v1820 = vand.u32 %v456, 4294901760
        %1821 = vmatpush.msra.mxu0 %v1820
        %v1822 = vand.u32 %v448, 4294901760
        %1823 = vmatpush.msra.mxu0 %v1822
        %v1824 = vand.u32 %v444, 4294901760
        %v1825 = vsub.f32 %v444, %v1824
        %v1826 = vand.u32 %v1825, 4294901760
        %1827 = vmatmul.f32.gmra.mxu0 %v1826
        %v1828 = vpop.f32.mrf.mxu0
        %v1829 = vadd.f32 %v1790, %v1828
        %1830 = vdwg.mxu0
        %v1831 = vand.u32 %v568, 4294901760
        %v1832 = vsub.f32 %v568, %v1831
        %v1833 = vand.u32 %v1832, 4294901760
        %1834 = vmatpush.msra.mxu0 %v1833
        %v1835 = vand.u32 %v560, 4294901760
        %v1836 = vsub.f32 %v560, %v1835
        %v1837 = vand.u32 %v1836, 4294901760
        %1838 = vmatpush.msra.mxu0 %v1837
        %v1839 = vand.u32 %v552, 4294901760
        %v1840 = vsub.f32 %v552, %v1839
        %v1841 = vand.u32 %v1840, 4294901760
        %1842 = vmatpush.msra.mxu0 %v1841
        %v1843 = vand.u32 %v544, 4294901760
        %v1844 = vsub.f32 %v544, %v1843
        %v1845 = vand.u32 %v1844, 4294901760
        %1846 = vmatpush.msra.mxu0 %v1845
        %v1847 = vand.u32 %v536, 4294901760
        %v1848 = vsub.f32 %v536, %v1847
        %v1849 = vand.u32 %v1848, 4294901760
        %1850 = vmatpush.msra.mxu0 %v1849
        %v1851 = vand.u32 %v528, 4294901760
        %v1852 = vsub.f32 %v528, %v1851
        %v1853 = vand.u32 %v1852, 4294901760
        %1854 = vmatpush.msra.mxu0 %v1853
        %v1855 = vand.u32 %v520, 4294901760
        %v1856 = vsub.f32 %v520, %v1855
        %v1857 = vand.u32 %v1856, 4294901760
        %1858 = vmatpush.msra.mxu0 %v1857
        %v1859 = vand.u32 %v512, 4294901760
        %v1860 = vsub.f32 %v512, %v1859
        %v1861 = vand.u32 %v1860, 4294901760
        %1862 = vmatpush.msra.mxu0 %v1861
        %v1863 = vand.u32 %v504, 4294901760
        %v1864 = vsub.f32 %v504, %v1863
        %v1865 = vand.u32 %v1864, 4294901760
        %1866 = vmatpush.msra.mxu0 %v1865
        %v1867 = vand.u32 %v496, 4294901760
        %v1868 = vsub.f32 %v496, %v1867
        %v1869 = vand.u32 %v1868, 4294901760
        %1870 = vmatpush.msra.mxu0 %v1869
        %v1871 = vand.u32 %v488, 4294901760
        %v1872 = vsub.f32 %v488, %v1871
        %v1873 = vand.u32 %v1872, 4294901760
        %1874 = vmatpush.msra.mxu0 %v1873
        %v1875 = vand.u32 %v480, 4294901760
        %v1876 = vsub.f32 %v480, %v1875
        %v1877 = vand.u32 %v1876, 4294901760
        %1878 = vmatpush.msra.mxu0 %v1877
        %v1879 = vand.u32 %v472, 4294901760
        %v1880 = vsub.f32 %v472, %v1879
        %v1881 = vand.u32 %v1880, 4294901760
        %1882 = vmatpush.msra.mxu0 %v1881
        %v1883 = vand.u32 %v464, 4294901760
        %v1884 = vsub.f32 %v464, %v1883
        %v1885 = vand.u32 %v1884, 4294901760
        %1886 = vmatpush.msra.mxu0 %v1885
        %v1887 = vand.u32 %v456, 4294901760
        %v1888 = vsub.f32 %v456, %v1887
        %v1889 = vand.u32 %v1888, 4294901760
        %1890 = vmatpush.msra.mxu0 %v1889
        %v1891 = vand.u32 %v448, 4294901760
        %v1892 = vsub.f32 %v448, %v1891
        %v1893 = vand.u32 %v1892, 4294901760
        %1894 = vmatpush.msra.mxu0 %v1893
        %v1895 = vand.u32 %v444, 4294901760
        %1896 = vmatmul.f32.gmra.mxu0 %v1895
        %v1897 = vpop.f32.mrf.mxu0
        %v1898 = vadd.f32 %v1829, %v1897
        %1899 = vdwg.mxu0
        %v1900 = vand.u32 %v568, 4294901760
        %1901 = vmatpush.msra.mxu0 %v1900
        %v1902 = vand.u32 %v560, 4294901760
        %1903 = vmatpush.msra.mxu0 %v1902
        %v1904 = vand.u32 %v552, 4294901760
        %1905 = vmatpush.msra.mxu0 %v1904
        %v1906 = vand.u32 %v544, 4294901760
        %1907 = vmatpush.msra.mxu0 %v1906
        %v1908 = vand.u32 %v536, 4294901760
        %1909 = vmatpush.msra.mxu0 %v1908
        %v1910 = vand.u32 %v528, 4294901760
        %1911 = vmatpush.msra.mxu0 %v1910
        %v1912 = vand.u32 %v520, 4294901760
        %1913 = vmatpush.msra.mxu0 %v1912
        %v1914 = vand.u32 %v512, 4294901760
        %1915 = vmatpush.msra.mxu0 %v1914
        %v1916 = vand.u32 %v504, 4294901760
        %1917 = vmatpush.msra.mxu0 %v1916
        %v1918 = vand.u32 %v496, 4294901760
        %1919 = vmatpush.msra.mxu0 %v1918
        %v1920 = vand.u32 %v488, 4294901760
        %1921 = vmatpush.msra.mxu0 %v1920
        %v1922 = vand.u32 %v480, 4294901760
        %1923 = vmatpush.msra.mxu0 %v1922
        %v1924 = vand.u32 %v472, 4294901760
        %1925 = vmatpush.msra.mxu0 %v1924
        %v1926 = vand.u32 %v464, 4294901760
        %1927 = vmatpush.msra.mxu0 %v1926
        %v1928 = vand.u32 %v456, 4294901760
        %1929 = vmatpush.msra.mxu0 %v1928
        %v1930 = vand.u32 %v448, 4294901760
        %1931 = vmatpush.msra.mxu0 %v1930
        %v1932 = vand.u32 %v444, 4294901760
        %1933 = vmatmul.f32.gmra.mxu0 %v1932
        %v1934 = vpop.f32.mrf.mxu0
        %v1935 = vadd.f32 %v1898, %v1934
        %1936 = vdwg.mxu0
        %v1937 = vand.u32 %v569, 4294901760
        %1938 = vmatpush.msra.mxu0 %v1937
        %v1939 = vand.u32 %v561, 4294901760
        %1940 = vmatpush.msra.mxu0 %v1939
        %v1941 = vand.u32 %v553, 4294901760
        %1942 = vmatpush.msra.mxu0 %v1941
        %v1943 = vand.u32 %v545, 4294901760
        %1944 = vmatpush.msra.mxu0 %v1943
        %v1945 = vand.u32 %v537, 4294901760
        %1946 = vmatpush.msra.mxu0 %v1945
        %v1947 = vand.u32 %v529, 4294901760
        %1948 = vmatpush.msra.mxu0 %v1947
        %v1949 = vand.u32 %v521, 4294901760
        %1950 = vmatpush.msra.mxu0 %v1949
        %v1951 = vand.u32 %v513, 4294901760
        %1952 = vmatpush.msra.mxu0 %v1951
        %v1953 = vand.u32 %v505, 4294901760
        %1954 = vmatpush.msra.mxu0 %v1953
        %v1955 = vand.u32 %v497, 4294901760
        %1956 = vmatpush.msra.mxu0 %v1955
        %v1957 = vand.u32 %v489, 4294901760
        %1958 = vmatpush.msra.mxu0 %v1957
        %v1959 = vand.u32 %v481, 4294901760
        %1960 = vmatpush.msra.mxu0 %v1959
        %v1961 = vand.u32 %v473, 4294901760
        %1962 = vmatpush.msra.mxu0 %v1961
        %v1963 = vand.u32 %v465, 4294901760
        %1964 = vmatpush.msra.mxu0 %v1963
        %v1965 = vand.u32 %v457, 4294901760
        %1966 = vmatpush.msra.mxu0 %v1965
        %v1967 = vand.u32 %v449, 4294901760
        %1968 = vmatpush.msra.mxu0 %v1967
        %v1969 = vand.u32 %v444, 4294901760
        %v1970 = vsub.f32 %v444, %v1969
        %v1971 = vand.u32 %v1970, 4294901760
        %v1972 = vsub.f32 %v1970, %v1971
        %v1973 = vand.u32 %v1972, 4294901760
        %1974 = vmatmul.f32.gmra.mxu0 %v1973
        %v1975 = vpop.f32.mrf.mxu0
        %v1976 = vadd.f32 0.0, %v1975
        %1977 = vdwg.mxu0
        %v1978 = vand.u32 %v569, 4294901760
        %v1979 = vsub.f32 %v569, %v1978
        %v1980 = vand.u32 %v1979, 4294901760
        %v1981 = vsub.f32 %v1979, %v1980
        %v1982 = vand.u32 %v1981, 4294901760
        %1983 = vmatpush.msra.mxu0 %v1982
        %v1984 = vand.u32 %v561, 4294901760
        %v1985 = vsub.f32 %v561, %v1984
        %v1986 = vand.u32 %v1985, 4294901760
        %v1987 = vsub.f32 %v1985, %v1986
        %v1988 = vand.u32 %v1987, 4294901760
        %1989 = vmatpush.msra.mxu0 %v1988
        %v1990 = vand.u32 %v553, 4294901760
        %v1991 = vsub.f32 %v553, %v1990
        %v1992 = vand.u32 %v1991, 4294901760
        %v1993 = vsub.f32 %v1991, %v1992
        %v1994 = vand.u32 %v1993, 4294901760
        %1995 = vmatpush.msra.mxu0 %v1994
        %v1996 = vand.u32 %v545, 4294901760
        %v1997 = vsub.f32 %v545, %v1996
        %v1998 = vand.u32 %v1997, 4294901760
        %v1999 = vsub.f32 %v1997, %v1998
        %v2000 = vand.u32 %v1999, 4294901760
        %2001 = vmatpush.msra.mxu0 %v2000
        %v2002 = vand.u32 %v537, 4294901760
        %v2003 = vsub.f32 %v537, %v2002
        %v2004 = vand.u32 %v2003, 4294901760
        %v2005 = vsub.f32 %v2003, %v2004
        %v2006 = vand.u32 %v2005, 4294901760
        %2007 = vmatpush.msra.mxu0 %v2006
        %v2008 = vand.u32 %v529, 4294901760
        %v2009 = vsub.f32 %v529, %v2008
        %v2010 = vand.u32 %v2009, 4294901760
        %v2011 = vsub.f32 %v2009, %v2010
        %v2012 = vand.u32 %v2011, 4294901760
        %2013 = vmatpush.msra.mxu0 %v2012
        %v2014 = vand.u32 %v521, 4294901760
        %v2015 = vsub.f32 %v521, %v2014
        %v2016 = vand.u32 %v2015, 4294901760
        %v2017 = vsub.f32 %v2015, %v2016
        %v2018 = vand.u32 %v2017, 4294901760
        %2019 = vmatpush.msra.mxu0 %v2018
        %v2020 = vand.u32 %v513, 4294901760
        %v2021 = vsub.f32 %v513, %v2020
        %v2022 = vand.u32 %v2021, 4294901760
        %v2023 = vsub.f32 %v2021, %v2022
        %v2024 = vand.u32 %v2023, 4294901760
        %2025 = vmatpush.msra.mxu0 %v2024
        %v2026 = vand.u32 %v505, 4294901760
        %v2027 = vsub.f32 %v505, %v2026
        %v2028 = vand.u32 %v2027, 4294901760
        %v2029 = vsub.f32 %v2027, %v2028
        %v2030 = vand.u32 %v2029, 4294901760
        %2031 = vmatpush.msra.mxu0 %v2030
        %v2032 = vand.u32 %v497, 4294901760
        %v2033 = vsub.f32 %v497, %v2032
        %v2034 = vand.u32 %v2033, 4294901760
        %v2035 = vsub.f32 %v2033, %v2034
        %v2036 = vand.u32 %v2035, 4294901760
        %2037 = vmatpush.msra.mxu0 %v2036
        %v2038 = vand.u32 %v489, 4294901760
        %v2039 = vsub.f32 %v489, %v2038
        %v2040 = vand.u32 %v2039, 4294901760
        %v2041 = vsub.f32 %v2039, %v2040
        %v2042 = vand.u32 %v2041, 4294901760
        %2043 = vmatpush.msra.mxu0 %v2042
        %v2044 = vand.u32 %v481, 4294901760
        %v2045 = vsub.f32 %v481, %v2044
        %v2046 = vand.u32 %v2045, 4294901760
        %v2047 = vsub.f32 %v2045, %v2046
        %v2048 = vand.u32 %v2047, 4294901760
        %2049 = vmatpush.msra.mxu0 %v2048
        %v2050 = vand.u32 %v473, 4294901760
        %v2051 = vsub.f32 %v473, %v2050
        %v2052 = vand.u32 %v2051, 4294901760
        %v2053 = vsub.f32 %v2051, %v2052
        %v2054 = vand.u32 %v2053, 4294901760
        %2055 = vmatpush.msra.mxu0 %v2054
        %v2056 = vand.u32 %v465, 4294901760
        %v2057 = vsub.f32 %v465, %v2056
        %v2058 = vand.u32 %v2057, 4294901760
        %v2059 = vsub.f32 %v2057, %v2058
        %v2060 = vand.u32 %v2059, 4294901760
        %2061 = vmatpush.msra.mxu0 %v2060
        %v2062 = vand.u32 %v457, 4294901760
        %v2063 = vsub.f32 %v457, %v2062
        %v2064 = vand.u32 %v2063, 4294901760
        %v2065 = vsub.f32 %v2063, %v2064
        %v2066 = vand.u32 %v2065, 4294901760
        %2067 = vmatpush.msra.mxu0 %v2066
        %v2068 = vand.u32 %v449, 4294901760
        %v2069 = vsub.f32 %v449, %v2068
        %v2070 = vand.u32 %v2069, 4294901760
        %v2071 = vsub.f32 %v2069, %v2070
        %v2072 = vand.u32 %v2071, 4294901760
        %2073 = vmatpush.msra.mxu0 %v2072
        %v2074 = vand.u32 %v444, 4294901760
        %2075 = vmatmul.f32.gmra.mxu0 %v2074
        %v2076 = vpop.f32.mrf.mxu0
        %v2077 = vadd.f32 %v1976, %v2076
        %2078 = vdwg.mxu0
        %v2079 = vand.u32 %v569, 4294901760
        %v2080 = vsub.f32 %v569, %v2079
        %2081 = vmatpush.msra.mxu0 %v2080
        %v2082 = vand.u32 %v561, 4294901760
        %v2083 = vsub.f32 %v561, %v2082
        %2084 = vmatpush.msra.mxu0 %v2083
        %v2085 = vand.u32 %v553, 4294901760
        %v2086 = vsub.f32 %v553, %v2085
        %2087 = vmatpush.msra.mxu0 %v2086
        %v2088 = vand.u32 %v545, 4294901760
        %v2089 = vsub.f32 %v545, %v2088
        %2090 = vmatpush.msra.mxu0 %v2089
        %v2091 = vand.u32 %v537, 4294901760
        %v2092 = vsub.f32 %v537, %v2091
        %2093 = vmatpush.msra.mxu0 %v2092
        %v2094 = vand.u32 %v529, 4294901760
        %v2095 = vsub.f32 %v529, %v2094
        %2096 = vmatpush.msra.mxu0 %v2095
        %v2097 = vand.u32 %v521, 4294901760
        %v2098 = vsub.f32 %v521, %v2097
        %2099 = vmatpush.msra.mxu0 %v2098
        %v2100 = vand.u32 %v513, 4294901760
        %v2101 = vsub.f32 %v513, %v2100
        %2102 = vmatpush.msra.mxu0 %v2101
        %v2103 = vand.u32 %v505, 4294901760
        %v2104 = vsub.f32 %v505, %v2103
        %2105 = vmatpush.msra.mxu0 %v2104
        %v2106 = vand.u32 %v497, 4294901760
        %v2107 = vsub.f32 %v497, %v2106
        %2108 = vmatpush.msra.mxu0 %v2107
        %v2109 = vand.u32 %v489, 4294901760
        %v2110 = vsub.f32 %v489, %v2109
        %2111 = vmatpush.msra.mxu0 %v2110
        %v2112 = vand.u32 %v481, 4294901760
        %v2113 = vsub.f32 %v481, %v2112
        %2114 = vmatpush.msra.mxu0 %v2113
        %v2115 = vand.u32 %v473, 4294901760
        %v2116 = vsub.f32 %v473, %v2115
        %2117 = vmatpush.msra.mxu0 %v2116
        %v2118 = vand.u32 %v465, 4294901760
        %v2119 = vsub.f32 %v465, %v2118
        %2120 = vmatpush.msra.mxu0 %v2119
        %v2121 = vand.u32 %v457, 4294901760
        %v2122 = vsub.f32 %v457, %v2121
        %2123 = vmatpush.msra.mxu0 %v2122
        %v2124 = vand.u32 %v449, 4294901760
        %v2125 = vsub.f32 %v449, %v2124
        %2126 = vmatpush.msra.mxu0 %v2125
        %v2127 = vand.u32 %v444, 4294901760
        %v2128 = vsub.f32 %v444, %v2127
        %2129 = vmatmul.f32.gmra.mxu0 %v2128
        %v2130 = vpop.f32.mrf.mxu0
        %v2131 = vadd.f32 %v2077, %v2130
        %2132 = vdwg.mxu0
        %v2133 = vand.u32 %v569, 4294901760
        %2134 = vmatpush.msra.mxu0 %v2133
        %v2135 = vand.u32 %v561, 4294901760
        %2136 = vmatpush.msra.mxu0 %v2135
        %v2137 = vand.u32 %v553, 4294901760
        %2138 = vmatpush.msra.mxu0 %v2137
        %v2139 = vand.u32 %v545, 4294901760
        %2140 = vmatpush.msra.mxu0 %v2139
        %v2141 = vand.u32 %v537, 4294901760
        %2142 = vmatpush.msra.mxu0 %v2141
        %v2143 = vand.u32 %v529, 4294901760
        %2144 = vmatpush.msra.mxu0 %v2143
        %v2145 = vand.u32 %v521, 4294901760
        %2146 = vmatpush.msra.mxu0 %v2145
        %v2147 = vand.u32 %v513, 4294901760
        %2148 = vmatpush.msra.mxu0 %v2147
        %v2149 = vand.u32 %v505, 4294901760
        %2150 = vmatpush.msra.mxu0 %v2149
        %v2151 = vand.u32 %v497, 4294901760
        %2152 = vmatpush.msra.mxu0 %v2151
        %v2153 = vand.u32 %v489, 4294901760
        %2154 = vmatpush.msra.mxu0 %v2153
        %v2155 = vand.u32 %v481, 4294901760
        %2156 = vmatpush.msra.mxu0 %v2155
        %v2157 = vand.u32 %v473, 4294901760
        %2158 = vmatpush.msra.mxu0 %v2157
        %v2159 = vand.u32 %v465, 4294901760
        %2160 = vmatpush.msra.mxu0 %v2159
        %v2161 = vand.u32 %v457, 4294901760
        %2162 = vmatpush.msra.mxu0 %v2161
        %v2163 = vand.u32 %v449, 4294901760
        %2164 = vmatpush.msra.mxu0 %v2163
        %v2165 = vand.u32 %v444, 4294901760
        %v2166 = vsub.f32 %v444, %v2165
        %v2167 = vand.u32 %v2166, 4294901760
        %2168 = vmatmul.f32.gmra.mxu0 %v2167
        %v2169 = vpop.f32.mrf.mxu0
        %v2170 = vadd.f32 %v2131, %v2169
        %2171 = vdwg.mxu0
        %v2172 = vand.u32 %v569, 4294901760
        %v2173 = vsub.f32 %v569, %v2172
        %v2174 = vand.u32 %v2173, 4294901760
        %2175 = vmatpush.msra.mxu0 %v2174
        %v2176 = vand.u32 %v561, 4294901760
        %v2177 = vsub.f32 %v561, %v2176
        %v2178 = vand.u32 %v2177, 4294901760
        %2179 = vmatpush.msra.mxu0 %v2178
        %v2180 = vand.u32 %v553, 4294901760
        %v2181 = vsub.f32 %v553, %v2180
        %v2182 = vand.u32 %v2181, 4294901760
        %2183 = vmatpush.msra.mxu0 %v2182
        %v2184 = vand.u32 %v545, 4294901760
        %v2185 = vsub.f32 %v545, %v2184
        %v2186 = vand.u32 %v2185, 4294901760
        %2187 = vmatpush.msra.mxu0 %v2186
        %v2188 = vand.u32 %v537, 4294901760
        %v2189 = vsub.f32 %v537, %v2188
        %v2190 = vand.u32 %v2189, 4294901760
        %2191 = vmatpush.msra.mxu0 %v2190
        %v2192 = vand.u32 %v529, 4294901760
        %v2193 = vsub.f32 %v529, %v2192
        %v2194 = vand.u32 %v2193, 4294901760
        %2195 = vmatpush.msra.mxu0 %v2194
        %v2196 = vand.u32 %v521, 4294901760
        %v2197 = vsub.f32 %v521, %v2196
        %v2198 = vand.u32 %v2197, 4294901760
        %2199 = vmatpush.msra.mxu0 %v2198
        %v2200 = vand.u32 %v513, 4294901760
        %v2201 = vsub.f32 %v513, %v2200
        %v2202 = vand.u32 %v2201, 4294901760
        %2203 = vmatpush.msra.mxu0 %v2202
        %v2204 = vand.u32 %v505, 4294901760
        %v2205 = vsub.f32 %v505, %v2204
        %v2206 = vand.u32 %v2205, 4294901760
        %2207 = vmatpush.msra.mxu0 %v2206
        %v2208 = vand.u32 %v497, 4294901760
        %v2209 = vsub.f32 %v497, %v2208
        %v2210 = vand.u32 %v2209, 4294901760
        %2211 = vmatpush.msra.mxu0 %v2210
        %v2212 = vand.u32 %v489, 4294901760
        %v2213 = vsub.f32 %v489, %v2212
        %v2214 = vand.u32 %v2213, 4294901760
        %2215 = vmatpush.msra.mxu0 %v2214
        %v2216 = vand.u32 %v481, 4294901760
        %v2217 = vsub.f32 %v481, %v2216
        %v2218 = vand.u32 %v2217, 4294901760
        %2219 = vmatpush.msra.mxu0 %v2218
        %v2220 = vand.u32 %v473, 4294901760
        %v2221 = vsub.f32 %v473, %v2220
        %v2222 = vand.u32 %v2221, 4294901760
        %2223 = vmatpush.msra.mxu0 %v2222
        %v2224 = vand.u32 %v465, 4294901760
        %v2225 = vsub.f32 %v465, %v2224
        %v2226 = vand.u32 %v2225, 4294901760
        %2227 = vmatpush.msra.mxu0 %v2226
        %v2228 = vand.u32 %v457, 4294901760
        %v2229 = vsub.f32 %v457, %v2228
        %v2230 = vand.u32 %v2229, 4294901760
        %2231 = vmatpush.msra.mxu0 %v2230
        %v2232 = vand.u32 %v449, 4294901760
        %v2233 = vsub.f32 %v449, %v2232
        %v2234 = vand.u32 %v2233, 4294901760
        %2235 = vmatpush.msra.mxu0 %v2234
        %v2236 = vand.u32 %v444, 4294901760
        %2237 = vmatmul.f32.gmra.mxu0 %v2236
        %v2238 = vpop.f32.mrf.mxu0
        %v2239 = vadd.f32 %v2170, %v2238
        %2240 = vdwg.mxu0
        %v2241 = vand.u32 %v569, 4294901760
        %2242 = vmatpush.msra.mxu0 %v2241
        %v2243 = vand.u32 %v561, 4294901760
        %2244 = vmatpush.msra.mxu0 %v2243
        %v2245 = vand.u32 %v553, 4294901760
        %2246 = vmatpush.msra.mxu0 %v2245
        %v2247 = vand.u32 %v545, 4294901760
        %2248 = vmatpush.msra.mxu0 %v2247
        %v2249 = vand.u32 %v537, 4294901760
        %2250 = vmatpush.msra.mxu0 %v2249
        %v2251 = vand.u32 %v529, 4294901760
        %2252 = vmatpush.msra.mxu0 %v2251
        %v2253 = vand.u32 %v521, 4294901760
        %2254 = vmatpush.msra.mxu0 %v2253
        %v2255 = vand.u32 %v513, 4294901760
        %2256 = vmatpush.msra.mxu0 %v2255
        %v2257 = vand.u32 %v505, 4294901760
        %2258 = vmatpush.msra.mxu0 %v2257
        %v2259 = vand.u32 %v497, 4294901760
        %2260 = vmatpush.msra.mxu0 %v2259
        %v2261 = vand.u32 %v489, 4294901760
        %2262 = vmatpush.msra.mxu0 %v2261
        %v2263 = vand.u32 %v481, 4294901760
        %2264 = vmatpush.msra.mxu0 %v2263
        %v2265 = vand.u32 %v473, 4294901760
        %2266 = vmatpush.msra.mxu0 %v2265
        %v2267 = vand.u32 %v465, 4294901760
        %2268 = vmatpush.msra.mxu0 %v2267
        %v2269 = vand.u32 %v457, 4294901760
        %2270 = vmatpush.msra.mxu0 %v2269
        %v2271 = vand.u32 %v449, 4294901760
        %2272 = vmatpush.msra.mxu0 %v2271
        %v2273 = vand.u32 %v444, 4294901760
        %2274 = vmatmul.f32.gmra.mxu0 %v2273
        %v2275 = vpop.f32.mrf.mxu0
        %v2276 = vadd.f32 %v2239, %v2275
        %2277 = vdwg.mxu0
        %v2278 = vand.u32 %v570, 4294901760
        %2279 = vmatpush.msra.mxu0 %v2278
        %v2280 = vand.u32 %v562, 4294901760
        %2281 = vmatpush.msra.mxu0 %v2280
        %v2282 = vand.u32 %v554, 4294901760
        %2283 = vmatpush.msra.mxu0 %v2282
        %v2284 = vand.u32 %v546, 4294901760
        %2285 = vmatpush.msra.mxu0 %v2284
        %v2286 = vand.u32 %v538, 4294901760
        %2287 = vmatpush.msra.mxu0 %v2286
        %v2288 = vand.u32 %v530, 4294901760
        %2289 = vmatpush.msra.mxu0 %v2288
        %v2290 = vand.u32 %v522, 4294901760
        %2291 = vmatpush.msra.mxu0 %v2290
        %v2292 = vand.u32 %v514, 4294901760
        %2293 = vmatpush.msra.mxu0 %v2292
        %v2294 = vand.u32 %v506, 4294901760
        %2295 = vmatpush.msra.mxu0 %v2294
        %v2296 = vand.u32 %v498, 4294901760
        %2297 = vmatpush.msra.mxu0 %v2296
        %v2298 = vand.u32 %v490, 4294901760
        %2299 = vmatpush.msra.mxu0 %v2298
        %v2300 = vand.u32 %v482, 4294901760
        %2301 = vmatpush.msra.mxu0 %v2300
        %v2302 = vand.u32 %v474, 4294901760
        %2303 = vmatpush.msra.mxu0 %v2302
        %v2304 = vand.u32 %v466, 4294901760
        %2305 = vmatpush.msra.mxu0 %v2304
        %v2306 = vand.u32 %v458, 4294901760
        %2307 = vmatpush.msra.mxu0 %v2306
        %v2308 = vand.u32 %v450, 4294901760
        %2309 = vmatpush.msra.mxu0 %v2308
        %v2310 = vand.u32 %v444, 4294901760
        %v2311 = vsub.f32 %v444, %v2310
        %v2312 = vand.u32 %v2311, 4294901760
        %v2313 = vsub.f32 %v2311, %v2312
        %v2314 = vand.u32 %v2313, 4294901760
        %2315 = vmatmul.f32.gmra.mxu0 %v2314
        %v2316 = vpop.f32.mrf.mxu0
        %v2317 = vadd.f32 0.0, %v2316
        %2318 = vdwg.mxu0
        %v2319 = vand.u32 %v570, 4294901760
        %v2320 = vsub.f32 %v570, %v2319
        %v2321 = vand.u32 %v2320, 4294901760
        %v2322 = vsub.f32 %v2320, %v2321
        %v2323 = vand.u32 %v2322, 4294901760
        %2324 = vmatpush.msra.mxu0 %v2323
        %v2325 = vand.u32 %v562, 4294901760
        %v2326 = vsub.f32 %v562, %v2325
        %v2327 = vand.u32 %v2326, 4294901760
        %v2328 = vsub.f32 %v2326, %v2327
        %v2329 = vand.u32 %v2328, 4294901760
        %2330 = vmatpush.msra.mxu0 %v2329
        %v2331 = vand.u32 %v554, 4294901760
        %v2332 = vsub.f32 %v554, %v2331
        %v2333 = vand.u32 %v2332, 4294901760
        %v2334 = vsub.f32 %v2332, %v2333
        %v2335 = vand.u32 %v2334, 4294901760
        %2336 = vmatpush.msra.mxu0 %v2335
        %v2337 = vand.u32 %v546, 4294901760
        %v2338 = vsub.f32 %v546, %v2337
        %v2339 = vand.u32 %v2338, 4294901760
        %v2340 = vsub.f32 %v2338, %v2339
        %v2341 = vand.u32 %v2340, 4294901760
        %2342 = vmatpush.msra.mxu0 %v2341
        %v2343 = vand.u32 %v538, 4294901760
        %v2344 = vsub.f32 %v538, %v2343
        %v2345 = vand.u32 %v2344, 4294901760
        %v2346 = vsub.f32 %v2344, %v2345
        %v2347 = vand.u32 %v2346, 4294901760
        %2348 = vmatpush.msra.mxu0 %v2347
        %v2349 = vand.u32 %v530, 4294901760
        %v2350 = vsub.f32 %v530, %v2349
        %v2351 = vand.u32 %v2350, 4294901760
        %v2352 = vsub.f32 %v2350, %v2351
        %v2353 = vand.u32 %v2352, 4294901760
        %2354 = vmatpush.msra.mxu0 %v2353
        %v2355 = vand.u32 %v522, 4294901760
        %v2356 = vsub.f32 %v522, %v2355
        %v2357 = vand.u32 %v2356, 4294901760
        %v2358 = vsub.f32 %v2356, %v2357
        %v2359 = vand.u32 %v2358, 4294901760
        %2360 = vmatpush.msra.mxu0 %v2359
        %v2361 = vand.u32 %v514, 4294901760
        %v2362 = vsub.f32 %v514, %v2361
        %v2363 = vand.u32 %v2362, 4294901760
        %v2364 = vsub.f32 %v2362, %v2363
        %v2365 = vand.u32 %v2364, 4294901760
        %2366 = vmatpush.msra.mxu0 %v2365
        %v2367 = vand.u32 %v506, 4294901760
        %v2368 = vsub.f32 %v506, %v2367
        %v2369 = vand.u32 %v2368, 4294901760
        %v2370 = vsub.f32 %v2368, %v2369
        %v2371 = vand.u32 %v2370, 4294901760
        %2372 = vmatpush.msra.mxu0 %v2371
        %v2373 = vand.u32 %v498, 4294901760
        %v2374 = vsub.f32 %v498, %v2373
        %v2375 = vand.u32 %v2374, 4294901760
        %v2376 = vsub.f32 %v2374, %v2375
        %v2377 = vand.u32 %v2376, 4294901760
        %2378 = vmatpush.msra.mxu0 %v2377
        %v2379 = vand.u32 %v490, 4294901760
        %v2380 = vsub.f32 %v490, %v2379
        %v2381 = vand.u32 %v2380, 4294901760
        %v2382 = vsub.f32 %v2380, %v2381
        %v2383 = vand.u32 %v2382, 4294901760
        %2384 = vmatpush.msra.mxu0 %v2383
        %v2385 = vand.u32 %v482, 4294901760
        %v2386 = vsub.f32 %v482, %v2385
        %v2387 = vand.u32 %v2386, 4294901760
        %v2388 = vsub.f32 %v2386, %v2387
        %v2389 = vand.u32 %v2388, 4294901760
        %2390 = vmatpush.msra.mxu0 %v2389
        %v2391 = vand.u32 %v474, 4294901760
        %v2392 = vsub.f32 %v474, %v2391
        %v2393 = vand.u32 %v2392, 4294901760
        %v2394 = vsub.f32 %v2392, %v2393
        %v2395 = vand.u32 %v2394, 4294901760
        %2396 = vmatpush.msra.mxu0 %v2395
        %v2397 = vand.u32 %v466, 4294901760
        %v2398 = vsub.f32 %v466, %v2397
        %v2399 = vand.u32 %v2398, 4294901760
        %v2400 = vsub.f32 %v2398, %v2399
        %v2401 = vand.u32 %v2400, 4294901760
        %2402 = vmatpush.msra.mxu0 %v2401
        %v2403 = vand.u32 %v458, 4294901760
        %v2404 = vsub.f32 %v458, %v2403
        %v2405 = vand.u32 %v2404, 4294901760
        %v2406 = vsub.f32 %v2404, %v2405
        %v2407 = vand.u32 %v2406, 4294901760
        %2408 = vmatpush.msra.mxu0 %v2407
        %v2409 = vand.u32 %v450, 4294901760
        %v2410 = vsub.f32 %v450, %v2409
        %v2411 = vand.u32 %v2410, 4294901760
        %v2412 = vsub.f32 %v2410, %v2411
        %v2413 = vand.u32 %v2412, 4294901760
        %2414 = vmatpush.msra.mxu0 %v2413
        %v2415 = vand.u32 %v444, 4294901760
        %2416 = vmatmul.f32.gmra.mxu0 %v2415
        %v2417 = vpop.f32.mrf.mxu0
        %v2418 = vadd.f32 %v2317, %v2417
        %2419 = vdwg.mxu0
        %v2420 = vand.u32 %v570, 4294901760
        %v2421 = vsub.f32 %v570, %v2420
        %2422 = vmatpush.msra.mxu0 %v2421
        %v2423 = vand.u32 %v562, 4294901760
        %v2424 = vsub.f32 %v562, %v2423
        %2425 = vmatpush.msra.mxu0 %v2424
        %v2426 = vand.u32 %v554, 4294901760
        %v2427 = vsub.f32 %v554, %v2426
        %2428 = vmatpush.msra.mxu0 %v2427
        %v2429 = vand.u32 %v546, 4294901760
        %v2430 = vsub.f32 %v546, %v2429
        %2431 = vmatpush.msra.mxu0 %v2430
        %v2432 = vand.u32 %v538, 4294901760
        %v2433 = vsub.f32 %v538, %v2432
        %2434 = vmatpush.msra.mxu0 %v2433
        %v2435 = vand.u32 %v530, 4294901760
        %v2436 = vsub.f32 %v530, %v2435
        %2437 = vmatpush.msra.mxu0 %v2436
        %v2438 = vand.u32 %v522, 4294901760
        %v2439 = vsub.f32 %v522, %v2438
        %2440 = vmatpush.msra.mxu0 %v2439
        %v2441 = vand.u32 %v514, 4294901760
        %v2442 = vsub.f32 %v514, %v2441
        %2443 = vmatpush.msra.mxu0 %v2442
        %v2444 = vand.u32 %v506, 4294901760
        %v2445 = vsub.f32 %v506, %v2444
        %2446 = vmatpush.msra.mxu0 %v2445
        %v2447 = vand.u32 %v498, 4294901760
        %v2448 = vsub.f32 %v498, %v2447
        %2449 = vmatpush.msra.mxu0 %v2448
        %v2450 = vand.u32 %v490, 4294901760
        %v2451 = vsub.f32 %v490, %v2450
        %2452 = vmatpush.msra.mxu0 %v2451
        %v2453 = vand.u32 %v482, 4294901760
        %v2454 = vsub.f32 %v482, %v2453
        %2455 = vmatpush.msra.mxu0 %v2454
        %v2456 = vand.u32 %v474, 4294901760
        %v2457 = vsub.f32 %v474, %v2456
        %2458 = vmatpush.msra.mxu0 %v2457
        %v2459 = vand.u32 %v466, 4294901760
        %v2460 = vsub.f32 %v466, %v2459
        %2461 = vmatpush.msra.mxu0 %v2460
        %v2462 = vand.u32 %v458, 4294901760
        %v2463 = vsub.f32 %v458, %v2462
        %2464 = vmatpush.msra.mxu0 %v2463
        %v2465 = vand.u32 %v450, 4294901760
        %v2466 = vsub.f32 %v450, %v2465
        %2467 = vmatpush.msra.mxu0 %v2466
        %v2468 = vand.u32 %v444, 4294901760
        %v2469 = vsub.f32 %v444, %v2468
        %2470 = vmatmul.f32.gmra.mxu0 %v2469
        %v2471 = vpop.f32.mrf.mxu0
        %v2472 = vadd.f32 %v2418, %v2471
        %2473 = vdwg.mxu0
        %v2474 = vand.u32 %v570, 4294901760
        %2475 = vmatpush.msra.mxu0 %v2474
        %v2476 = vand.u32 %v562, 4294901760
        %2477 = vmatpush.msra.mxu0 %v2476
        %v2478 = vand.u32 %v554, 4294901760
        %2479 = vmatpush.msra.mxu0 %v2478
        %v2480 = vand.u32 %v546, 4294901760
        %2481 = vmatpush.msra.mxu0 %v2480
        %v2482 = vand.u32 %v538, 4294901760
        %2483 = vmatpush.msra.mxu0 %v2482
        %v2484 = vand.u32 %v530, 4294901760
        %2485 = vmatpush.msra.mxu0 %v2484
        %v2486 = vand.u32 %v522, 4294901760
        %2487 = vmatpush.msra.mxu0 %v2486
        %v2488 = vand.u32 %v514, 4294901760
        %2489 = vmatpush.msra.mxu0 %v2488
        %v2490 = vand.u32 %v506, 4294901760
        %2491 = vmatpush.msra.mxu0 %v2490
        %v2492 = vand.u32 %v498, 4294901760
        %2493 = vmatpush.msra.mxu0 %v2492
        %v2494 = vand.u32 %v490, 4294901760
        %2495 = vmatpush.msra.mxu0 %v2494
        %v2496 = vand.u32 %v482, 4294901760
        %2497 = vmatpush.msra.mxu0 %v2496
        %v2498 = vand.u32 %v474, 4294901760
        %2499 = vmatpush.msra.mxu0 %v2498
        %v2500 = vand.u32 %v466, 4294901760
        %2501 = vmatpush.msra.mxu0 %v2500
        %v2502 = vand.u32 %v458, 4294901760
        %2503 = vmatpush.msra.mxu0 %v2502
        %v2504 = vand.u32 %v450, 4294901760
        %2505 = vmatpush.msra.mxu0 %v2504
        %v2506 = vand.u32 %v444, 4294901760
        %v2507 = vsub.f32 %v444, %v2506
        %v2508 = vand.u32 %v2507, 4294901760
        %2509 = vmatmul.f32.gmra.mxu0 %v2508
        %v2510 = vpop.f32.mrf.mxu0
        %v2511 = vadd.f32 %v2472, %v2510
        %2512 = vdwg.mxu0
        %v2513 = vand.u32 %v570, 4294901760
        %v2514 = vsub.f32 %v570, %v2513
        %v2515 = vand.u32 %v2514, 4294901760
        %2516 = vmatpush.msra.mxu0 %v2515
        %v2517 = vand.u32 %v562, 4294901760
        %v2518 = vsub.f32 %v562, %v2517
        %v2519 = vand.u32 %v2518, 4294901760
        %2520 = vmatpush.msra.mxu0 %v2519
        %v2521 = vand.u32 %v554, 4294901760
        %v2522 = vsub.f32 %v554, %v2521
        %v2523 = vand.u32 %v2522, 4294901760
        %2524 = vmatpush.msra.mxu0 %v2523
        %v2525 = vand.u32 %v546, 4294901760
        %v2526 = vsub.f32 %v546, %v2525
        %v2527 = vand.u32 %v2526, 4294901760
        %2528 = vmatpush.msra.mxu0 %v2527
        %v2529 = vand.u32 %v538, 4294901760
        %v2530 = vsub.f32 %v538, %v2529
        %v2531 = vand.u32 %v2530, 4294901760
        %2532 = vmatpush.msra.mxu0 %v2531
        %v2533 = vand.u32 %v530, 4294901760
        %v2534 = vsub.f32 %v530, %v2533
        %v2535 = vand.u32 %v2534, 4294901760
        %2536 = vmatpush.msra.mxu0 %v2535
        %v2537 = vand.u32 %v522, 4294901760
        %v2538 = vsub.f32 %v522, %v2537
        %v2539 = vand.u32 %v2538, 4294901760
        %2540 = vmatpush.msra.mxu0 %v2539
        %v2541 = vand.u32 %v514, 4294901760
        %v2542 = vsub.f32 %v514, %v2541
        %v2543 = vand.u32 %v2542, 4294901760
        %2544 = vmatpush.msra.mxu0 %v2543
        %v2545 = vand.u32 %v506, 4294901760
        %v2546 = vsub.f32 %v506, %v2545
        %v2547 = vand.u32 %v2546, 4294901760
        %2548 = vmatpush.msra.mxu0 %v2547
        %v2549 = vand.u32 %v498, 4294901760
        %v2550 = vsub.f32 %v498, %v2549
        %v2551 = vand.u32 %v2550, 4294901760
        %2552 = vmatpush.msra.mxu0 %v2551
        %v2553 = vand.u32 %v490, 4294901760
        %v2554 = vsub.f32 %v490, %v2553
        %v2555 = vand.u32 %v2554, 4294901760
        %2556 = vmatpush.msra.mxu0 %v2555
        %v2557 = vand.u32 %v482, 4294901760
        %v2558 = vsub.f32 %v482, %v2557
        %v2559 = vand.u32 %v2558, 4294901760
        %2560 = vmatpush.msra.mxu0 %v2559
        %v2561 = vand.u32 %v474, 4294901760
        %v2562 = vsub.f32 %v474, %v2561
        %v2563 = vand.u32 %v2562, 4294901760
        %2564 = vmatpush.msra.mxu0 %v2563
        %v2565 = vand.u32 %v466, 4294901760
        %v2566 = vsub.f32 %v466, %v2565
        %v2567 = vand.u32 %v2566, 4294901760
        %2568 = vmatpush.msra.mxu0 %v2567
        %v2569 = vand.u32 %v458, 4294901760
        %v2570 = vsub.f32 %v458, %v2569
        %v2571 = vand.u32 %v2570, 4294901760
        %2572 = vmatpush.msra.mxu0 %v2571
        %v2573 = vand.u32 %v450, 4294901760
        %v2574 = vsub.f32 %v450, %v2573
        %v2575 = vand.u32 %v2574, 4294901760
        %2576 = vmatpush.msra.mxu0 %v2575
        %v2577 = vand.u32 %v444, 4294901760
        %2578 = vmatmul.f32.gmra.mxu0 %v2577
        %v2579 = vpop.f32.mrf.mxu0
        %v2580 = vadd.f32 %v2511, %v2579
        %2581 = vdwg.mxu0
        %v2582 = vand.u32 %v570, 4294901760
        %2583 = vmatpush.msra.mxu0 %v2582
        %v2584 = vand.u32 %v562, 4294901760
        %2585 = vmatpush.msra.mxu0 %v2584
        %v2586 = vand.u32 %v554, 4294901760
        %2587 = vmatpush.msra.mxu0 %v2586
        %v2588 = vand.u32 %v546, 4294901760
        %2589 = vmatpush.msra.mxu0 %v2588
        %v2590 = vand.u32 %v538, 4294901760
        %2591 = vmatpush.msra.mxu0 %v2590
        %v2592 = vand.u32 %v530, 4294901760
        %2593 = vmatpush.msra.mxu0 %v2592
        %v2594 = vand.u32 %v522, 4294901760
        %2595 = vmatpush.msra.mxu0 %v2594
        %v2596 = vand.u32 %v514, 4294901760
        %2597 = vmatpush.msra.mxu0 %v2596
        %v2598 = vand.u32 %v506, 4294901760
        %2599 = vmatpush.msra.mxu0 %v2598
        %v2600 = vand.u32 %v498, 4294901760
        %2601 = vmatpush.msra.mxu0 %v2600
        %v2602 = vand.u32 %v490, 4294901760
        %2603 = vmatpush.msra.mxu0 %v2602
        %v2604 = vand.u32 %v482, 4294901760
        %2605 = vmatpush.msra.mxu0 %v2604
        %v2606 = vand.u32 %v474, 4294901760
        %2607 = vmatpush.msra.mxu0 %v2606
        %v2608 = vand.u32 %v466, 4294901760
        %2609 = vmatpush.msra.mxu0 %v2608
        %v2610 = vand.u32 %v458, 4294901760
        %2611 = vmatpush.msra.mxu0 %v2610
        %v2612 = vand.u32 %v450, 4294901760
        %2613 = vmatpush.msra.mxu0 %v2612
        %v2614 = vand.u32 %v444, 4294901760
        %2615 = vmatmul.f32.gmra.mxu0 %v2614
        %v2616 = vpop.f32.mrf.mxu0
        %v2617 = vadd.f32 %v2580, %v2616
        %2618 = vdwg.mxu0
        %v2619 = vand.u32 %v571, 4294901760
        %2620 = vmatpush.msra.mxu0 %v2619
        %v2621 = vand.u32 %v563, 4294901760
        %2622 = vmatpush.msra.mxu0 %v2621
        %v2623 = vand.u32 %v555, 4294901760
        %2624 = vmatpush.msra.mxu0 %v2623
        %v2625 = vand.u32 %v547, 4294901760
        %2626 = vmatpush.msra.mxu0 %v2625
        %v2627 = vand.u32 %v539, 4294901760
        %2628 = vmatpush.msra.mxu0 %v2627
        %v2629 = vand.u32 %v531, 4294901760
        %2630 = vmatpush.msra.mxu0 %v2629
        %v2631 = vand.u32 %v523, 4294901760
        %2632 = vmatpush.msra.mxu0 %v2631
        %v2633 = vand.u32 %v515, 4294901760
        %2634 = vmatpush.msra.mxu0 %v2633
        %v2635 = vand.u32 %v507, 4294901760
        %2636 = vmatpush.msra.mxu0 %v2635
        %v2637 = vand.u32 %v499, 4294901760
        %2638 = vmatpush.msra.mxu0 %v2637
        %v2639 = vand.u32 %v491, 4294901760
        %2640 = vmatpush.msra.mxu0 %v2639
        %v2641 = vand.u32 %v483, 4294901760
        %2642 = vmatpush.msra.mxu0 %v2641
        %v2643 = vand.u32 %v475, 4294901760
        %2644 = vmatpush.msra.mxu0 %v2643
        %v2645 = vand.u32 %v467, 4294901760
        %2646 = vmatpush.msra.mxu0 %v2645
        %v2647 = vand.u32 %v459, 4294901760
        %2648 = vmatpush.msra.mxu0 %v2647
        %v2649 = vand.u32 %v451, 4294901760
        %2650 = vmatpush.msra.mxu0 %v2649
        %v2651 = vand.u32 %v444, 4294901760
        %v2652 = vsub.f32 %v444, %v2651
        %v2653 = vand.u32 %v2652, 4294901760
        %v2654 = vsub.f32 %v2652, %v2653
        %v2655 = vand.u32 %v2654, 4294901760
        %2656 = vmatmul.f32.gmra.mxu0 %v2655
        %v2657 = vpop.f32.mrf.mxu0
        %v2658 = vadd.f32 0.0, %v2657
        %2659 = vdwg.mxu0
        %v2660 = vand.u32 %v571, 4294901760
        %v2661 = vsub.f32 %v571, %v2660
        %v2662 = vand.u32 %v2661, 4294901760
        %v2663 = vsub.f32 %v2661, %v2662
        %v2664 = vand.u32 %v2663, 4294901760
        %2665 = vmatpush.msra.mxu0 %v2664
        %v2666 = vand.u32 %v563, 4294901760
        %v2667 = vsub.f32 %v563, %v2666
        %v2668 = vand.u32 %v2667, 4294901760
        %v2669 = vsub.f32 %v2667, %v2668
        %v2670 = vand.u32 %v2669, 4294901760
        %2671 = vmatpush.msra.mxu0 %v2670
        %v2672 = vand.u32 %v555, 4294901760
        %v2673 = vsub.f32 %v555, %v2672
        %v2674 = vand.u32 %v2673, 4294901760
        %v2675 = vsub.f32 %v2673, %v2674
        %v2676 = vand.u32 %v2675, 4294901760
        %2677 = vmatpush.msra.mxu0 %v2676
        %v2678 = vand.u32 %v547, 4294901760
        %v2679 = vsub.f32 %v547, %v2678
        %v2680 = vand.u32 %v2679, 4294901760
        %v2681 = vsub.f32 %v2679, %v2680
        %v2682 = vand.u32 %v2681, 4294901760
        %2683 = vmatpush.msra.mxu0 %v2682
        %v2684 = vand.u32 %v539, 4294901760
        %v2685 = vsub.f32 %v539, %v2684
        %v2686 = vand.u32 %v2685, 4294901760
        %v2687 = vsub.f32 %v2685, %v2686
        %v2688 = vand.u32 %v2687, 4294901760
        %2689 = vmatpush.msra.mxu0 %v2688
        %v2690 = vand.u32 %v531, 4294901760
        %v2691 = vsub.f32 %v531, %v2690
        %v2692 = vand.u32 %v2691, 4294901760
        %v2693 = vsub.f32 %v2691, %v2692
        %v2694 = vand.u32 %v2693, 4294901760
        %2695 = vmatpush.msra.mxu0 %v2694
        %v2696 = vand.u32 %v523, 4294901760
        %v2697 = vsub.f32 %v523, %v2696
        %v2698 = vand.u32 %v2697, 4294901760
        %v2699 = vsub.f32 %v2697, %v2698
        %v2700 = vand.u32 %v2699, 4294901760
        %2701 = vmatpush.msra.mxu0 %v2700
        %v2702 = vand.u32 %v515, 4294901760
        %v2703 = vsub.f32 %v515, %v2702
        %v2704 = vand.u32 %v2703, 4294901760
        %v2705 = vsub.f32 %v2703, %v2704
        %v2706 = vand.u32 %v2705, 4294901760
        %2707 = vmatpush.msra.mxu0 %v2706
        %v2708 = vand.u32 %v507, 4294901760
        %v2709 = vsub.f32 %v507, %v2708
        %v2710 = vand.u32 %v2709, 4294901760
        %v2711 = vsub.f32 %v2709, %v2710
        %v2712 = vand.u32 %v2711, 4294901760
        %2713 = vmatpush.msra.mxu0 %v2712
        %v2714 = vand.u32 %v499, 4294901760
        %v2715 = vsub.f32 %v499, %v2714
        %v2716 = vand.u32 %v2715, 4294901760
        %v2717 = vsub.f32 %v2715, %v2716
        %v2718 = vand.u32 %v2717, 4294901760
        %2719 = vmatpush.msra.mxu0 %v2718
        %v2720 = vand.u32 %v491, 4294901760
        %v2721 = vsub.f32 %v491, %v2720
        %v2722 = vand.u32 %v2721, 4294901760
        %v2723 = vsub.f32 %v2721, %v2722
        %v2724 = vand.u32 %v2723, 4294901760
        %2725 = vmatpush.msra.mxu0 %v2724
        %v2726 = vand.u32 %v483, 4294901760
        %v2727 = vsub.f32 %v483, %v2726
        %v2728 = vand.u32 %v2727, 4294901760
        %v2729 = vsub.f32 %v2727, %v2728
        %v2730 = vand.u32 %v2729, 4294901760
        %2731 = vmatpush.msra.mxu0 %v2730
        %v2732 = vand.u32 %v475, 4294901760
        %v2733 = vsub.f32 %v475, %v2732
        %v2734 = vand.u32 %v2733, 4294901760
        %v2735 = vsub.f32 %v2733, %v2734
        %v2736 = vand.u32 %v2735, 4294901760
        %2737 = vmatpush.msra.mxu0 %v2736
        %v2738 = vand.u32 %v467, 4294901760
        %v2739 = vsub.f32 %v467, %v2738
        %v2740 = vand.u32 %v2739, 4294901760
        %v2741 = vsub.f32 %v2739, %v2740
        %v2742 = vand.u32 %v2741, 4294901760
        %2743 = vmatpush.msra.mxu0 %v2742
        %v2744 = vand.u32 %v459, 4294901760
        %v2745 = vsub.f32 %v459, %v2744
        %v2746 = vand.u32 %v2745, 4294901760
        %v2747 = vsub.f32 %v2745, %v2746
        %v2748 = vand.u32 %v2747, 4294901760
        %2749 = vmatpush.msra.mxu0 %v2748
        %v2750 = vand.u32 %v451, 4294901760
        %v2751 = vsub.f32 %v451, %v2750
        %v2752 = vand.u32 %v2751, 4294901760
        %v2753 = vsub.f32 %v2751, %v2752
        %v2754 = vand.u32 %v2753, 4294901760
        %2755 = vmatpush.msra.mxu0 %v2754
        %v2756 = vand.u32 %v444, 4294901760
        %2757 = vmatmul.f32.gmra.mxu0 %v2756
        %v2758 = vpop.f32.mrf.mxu0
        %v2759 = vadd.f32 %v2658, %v2758
        %2760 = vdwg.mxu0
        %v2761 = vand.u32 %v571, 4294901760
        %v2762 = vsub.f32 %v571, %v2761
        %2763 = vmatpush.msra.mxu0 %v2762
        %v2764 = vand.u32 %v563, 4294901760
        %v2765 = vsub.f32 %v563, %v2764
        %2766 = vmatpush.msra.mxu0 %v2765
        %v2767 = vand.u32 %v555, 4294901760
        %v2768 = vsub.f32 %v555, %v2767
        %2769 = vmatpush.msra.mxu0 %v2768
        %v2770 = vand.u32 %v547, 4294901760
        %v2771 = vsub.f32 %v547, %v2770
        %2772 = vmatpush.msra.mxu0 %v2771
        %v2773 = vand.u32 %v539, 4294901760
        %v2774 = vsub.f32 %v539, %v2773
        %2775 = vmatpush.msra.mxu0 %v2774
        %v2776 = vand.u32 %v531, 4294901760
        %v2777 = vsub.f32 %v531, %v2776
        %2778 = vmatpush.msra.mxu0 %v2777
        %v2779 = vand.u32 %v523, 4294901760
        %v2780 = vsub.f32 %v523, %v2779
        %2781 = vmatpush.msra.mxu0 %v2780
        %v2782 = vand.u32 %v515, 4294901760
        %v2783 = vsub.f32 %v515, %v2782
        %2784 = vmatpush.msra.mxu0 %v2783
        %v2785 = vand.u32 %v507, 4294901760
        %v2786 = vsub.f32 %v507, %v2785
        %2787 = vmatpush.msra.mxu0 %v2786
        %v2788 = vand.u32 %v499, 4294901760
        %v2789 = vsub.f32 %v499, %v2788
        %2790 = vmatpush.msra.mxu0 %v2789
        %v2791 = vand.u32 %v491, 4294901760
        %v2792 = vsub.f32 %v491, %v2791
        %2793 = vmatpush.msra.mxu0 %v2792
        %v2794 = vand.u32 %v483, 4294901760
        %v2795 = vsub.f32 %v483, %v2794
        %2796 = vmatpush.msra.mxu0 %v2795
        %v2797 = vand.u32 %v475, 4294901760
        %v2798 = vsub.f32 %v475, %v2797
        %2799 = vmatpush.msra.mxu0 %v2798
        %v2800 = vand.u32 %v467, 4294901760
        %v2801 = vsub.f32 %v467, %v2800
        %2802 = vmatpush.msra.mxu0 %v2801
        %v2803 = vand.u32 %v459, 4294901760
        %v2804 = vsub.f32 %v459, %v2803
        %2805 = vmatpush.msra.mxu0 %v2804
        %v2806 = vand.u32 %v451, 4294901760
        %v2807 = vsub.f32 %v451, %v2806
        %2808 = vmatpush.msra.mxu0 %v2807
        %v2809 = vand.u32 %v444, 4294901760
        %v2810 = vsub.f32 %v444, %v2809
        %2811 = vmatmul.f32.gmra.mxu0 %v2810
        %v2812 = vpop.f32.mrf.mxu0
        %v2813 = vadd.f32 %v2759, %v2812
        %2814 = vdwg.mxu0
        %v2815 = vand.u32 %v571, 4294901760
        %2816 = vmatpush.msra.mxu0 %v2815
        %v2817 = vand.u32 %v563, 4294901760
        %2818 = vmatpush.msra.mxu0 %v2817
        %v2819 = vand.u32 %v555, 4294901760
        %2820 = vmatpush.msra.mxu0 %v2819
        %v2821 = vand.u32 %v547, 4294901760
        %2822 = vmatpush.msra.mxu0 %v2821
        %v2823 = vand.u32 %v539, 4294901760
        %2824 = vmatpush.msra.mxu0 %v2823
        %v2825 = vand.u32 %v531, 4294901760
        %2826 = vmatpush.msra.mxu0 %v2825
        %v2827 = vand.u32 %v523, 4294901760
        %2828 = vmatpush.msra.mxu0 %v2827
        %v2829 = vand.u32 %v515, 4294901760
        %2830 = vmatpush.msra.mxu0 %v2829
        %v2831 = vand.u32 %v507, 4294901760
        %2832 = vmatpush.msra.mxu0 %v2831
        %v2833 = vand.u32 %v499, 4294901760
        %2834 = vmatpush.msra.mxu0 %v2833
        %v2835 = vand.u32 %v491, 4294901760
        %2836 = vmatpush.msra.mxu0 %v2835
        %v2837 = vand.u32 %v483, 4294901760
        %2838 = vmatpush.msra.mxu0 %v2837
        %v2839 = vand.u32 %v475, 4294901760
        %2840 = vmatpush.msra.mxu0 %v2839
        %v2841 = vand.u32 %v467, 4294901760
        %2842 = vmatpush.msra.mxu0 %v2841
        %v2843 = vand.u32 %v459, 4294901760
        %2844 = vmatpush.msra.mxu0 %v2843
        %v2845 = vand.u32 %v451, 4294901760
        %2846 = vmatpush.msra.mxu0 %v2845
        %v2847 = vand.u32 %v444, 4294901760
        %v2848 = vsub.f32 %v444, %v2847
        %v2849 = vand.u32 %v2848, 4294901760
        %2850 = vmatmul.f32.gmra.mxu0 %v2849
        %v2851 = vpop.f32.mrf.mxu0
        %v2852 = vadd.f32 %v2813, %v2851
        %2853 = vdwg.mxu0
        %v2854 = vand.u32 %v571, 4294901760
        %v2855 = vsub.f32 %v571, %v2854
        %v2856 = vand.u32 %v2855, 4294901760
        %2857 = vmatpush.msra.mxu0 %v2856
        %v2858 = vand.u32 %v563, 4294901760
        %v2859 = vsub.f32 %v563, %v2858
        %v2860 = vand.u32 %v2859, 4294901760
        %2861 = vmatpush.msra.mxu0 %v2860
        %v2862 = vand.u32 %v555, 4294901760
        %v2863 = vsub.f32 %v555, %v2862
        %v2864 = vand.u32 %v2863, 4294901760
        %2865 = vmatpush.msra.mxu0 %v2864
        %v2866 = vand.u32 %v547, 4294901760
        %v2867 = vsub.f32 %v547, %v2866
        %v2868 = vand.u32 %v2867, 4294901760
        %2869 = vmatpush.msra.mxu0 %v2868
        %v2870 = vand.u32 %v539, 4294901760
        %v2871 = vsub.f32 %v539, %v2870
        %v2872 = vand.u32 %v2871, 4294901760
        %2873 = vmatpush.msra.mxu0 %v2872
        %v2874 = vand.u32 %v531, 4294901760
        %v2875 = vsub.f32 %v531, %v2874
        %v2876 = vand.u32 %v2875, 4294901760
        %2877 = vmatpush.msra.mxu0 %v2876
        %v2878 = vand.u32 %v523, 4294901760
        %v2879 = vsub.f32 %v523, %v2878
        %v2880 = vand.u32 %v2879, 4294901760
        %2881 = vmatpush.msra.mxu0 %v2880
        %v2882 = vand.u32 %v515, 4294901760
        %v2883 = vsub.f32 %v515, %v2882
        %v2884 = vand.u32 %v2883, 4294901760
        %2885 = vmatpush.msra.mxu0 %v2884
        %v2886 = vand.u32 %v507, 4294901760
        %v2887 = vsub.f32 %v507, %v2886
        %v2888 = vand.u32 %v2887, 4294901760
        %2889 = vmatpush.msra.mxu0 %v2888
        %v2890 = vand.u32 %v499, 4294901760
        %v2891 = vsub.f32 %v499, %v2890
        %v2892 = vand.u32 %v2891, 4294901760
        %2893 = vmatpush.msra.mxu0 %v2892
        %v2894 = vand.u32 %v491, 4294901760
        %v2895 = vsub.f32 %v491, %v2894
        %v2896 = vand.u32 %v2895, 4294901760
        %2897 = vmatpush.msra.mxu0 %v2896
        %v2898 = vand.u32 %v483, 4294901760
        %v2899 = vsub.f32 %v483, %v2898
        %v2900 = vand.u32 %v2899, 4294901760
        %2901 = vmatpush.msra.mxu0 %v2900
        %v2902 = vand.u32 %v475, 4294901760
        %v2903 = vsub.f32 %v475, %v2902
        %v2904 = vand.u32 %v2903, 4294901760
        %2905 = vmatpush.msra.mxu0 %v2904
        %v2906 = vand.u32 %v467, 4294901760
        %v2907 = vsub.f32 %v467, %v2906
        %v2908 = vand.u32 %v2907, 4294901760
        %2909 = vmatpush.msra.mxu0 %v2908
        %v2910 = vand.u32 %v459, 4294901760
        %v2911 = vsub.f32 %v459, %v2910
        %v2912 = vand.u32 %v2911, 4294901760
        %2913 = vmatpush.msra.mxu0 %v2912
        %v2914 = vand.u32 %v451, 4294901760
        %v2915 = vsub.f32 %v451, %v2914
        %v2916 = vand.u32 %v2915, 4294901760
        %2917 = vmatpush.msra.mxu0 %v2916
        %v2918 = vand.u32 %v444, 4294901760
        %2919 = vmatmul.f32.gmra.mxu0 %v2918
        %v2920 = vpop.f32.mrf.mxu0
        %v2921 = vadd.f32 %v2852, %v2920
        %2922 = vdwg.mxu0
        %v2923 = vand.u32 %v571, 4294901760
        %2924 = vmatpush.msra.mxu0 %v2923
        %v2925 = vand.u32 %v563, 4294901760
        %2926 = vmatpush.msra.mxu0 %v2925
        %v2927 = vand.u32 %v555, 4294901760
        %2928 = vmatpush.msra.mxu0 %v2927
        %v2929 = vand.u32 %v547, 4294901760
        %2930 = vmatpush.msra.mxu0 %v2929
        %v2931 = vand.u32 %v539, 4294901760
        %2932 = vmatpush.msra.mxu0 %v2931
        %v2933 = vand.u32 %v531, 4294901760
        %2934 = vmatpush.msra.mxu0 %v2933
        %v2935 = vand.u32 %v523, 4294901760
        %2936 = vmatpush.msra.mxu0 %v2935
        %v2937 = vand.u32 %v515, 4294901760
        %2938 = vmatpush.msra.mxu0 %v2937
        %v2939 = vand.u32 %v507, 4294901760
        %2940 = vmatpush.msra.mxu0 %v2939
        %v2941 = vand.u32 %v499, 4294901760
        %2942 = vmatpush.msra.mxu0 %v2941
        %v2943 = vand.u32 %v491, 4294901760
        %2944 = vmatpush.msra.mxu0 %v2943
        %v2945 = vand.u32 %v483, 4294901760
        %2946 = vmatpush.msra.mxu0 %v2945
        %v2947 = vand.u32 %v475, 4294901760
        %2948 = vmatpush.msra.mxu0 %v2947
        %v2949 = vand.u32 %v467, 4294901760
        %2950 = vmatpush.msra.mxu0 %v2949
        %v2951 = vand.u32 %v459, 4294901760
        %2952 = vmatpush.msra.mxu0 %v2951
        %v2953 = vand.u32 %v451, 4294901760
        %2954 = vmatpush.msra.mxu0 %v2953
        %v2955 = vand.u32 %v444, 4294901760
        %2956 = vmatmul.f32.gmra.mxu0 %v2955
        %v2957 = vpop.f32.mrf.mxu0
        %v2958 = vadd.f32 %v2921, %v2957
        %2959 = vdwg.mxu0
        %v2960 = vand.u32 %v572, 4294901760
        %2961 = vmatpush.msra.mxu0 %v2960
        %v2962 = vand.u32 %v564, 4294901760
        %2963 = vmatpush.msra.mxu0 %v2962
        %v2964 = vand.u32 %v556, 4294901760
        %2965 = vmatpush.msra.mxu0 %v2964
        %v2966 = vand.u32 %v548, 4294901760
        %2967 = vmatpush.msra.mxu0 %v2966
        %v2968 = vand.u32 %v540, 4294901760
        %2969 = vmatpush.msra.mxu0 %v2968
        %v2970 = vand.u32 %v532, 4294901760
        %2971 = vmatpush.msra.mxu0 %v2970
        %v2972 = vand.u32 %v524, 4294901760
        %2973 = vmatpush.msra.mxu0 %v2972
        %v2974 = vand.u32 %v516, 4294901760
        %2975 = vmatpush.msra.mxu0 %v2974
        %v2976 = vand.u32 %v508, 4294901760
        %2977 = vmatpush.msra.mxu0 %v2976
        %v2978 = vand.u32 %v500, 4294901760
        %2979 = vmatpush.msra.mxu0 %v2978
        %v2980 = vand.u32 %v492, 4294901760
        %2981 = vmatpush.msra.mxu0 %v2980
        %v2982 = vand.u32 %v484, 4294901760
        %2983 = vmatpush.msra.mxu0 %v2982
        %v2984 = vand.u32 %v476, 4294901760
        %2985 = vmatpush.msra.mxu0 %v2984
        %v2986 = vand.u32 %v468, 4294901760
        %2987 = vmatpush.msra.mxu0 %v2986
        %v2988 = vand.u32 %v460, 4294901760
        %2989 = vmatpush.msra.mxu0 %v2988
        %v2990 = vand.u32 %v452, 4294901760
        %2991 = vmatpush.msra.mxu0 %v2990
        %v2992 = vand.u32 %v444, 4294901760
        %v2993 = vsub.f32 %v444, %v2992
        %v2994 = vand.u32 %v2993, 4294901760
        %v2995 = vsub.f32 %v2993, %v2994
        %v2996 = vand.u32 %v2995, 4294901760
        %2997 = vmatmul.f32.gmra.mxu0 %v2996
        %v2998 = vpop.f32.mrf.mxu0
        %v2999 = vadd.f32 0.0, %v2998
        %3000 = vdwg.mxu0
        %v3001 = vand.u32 %v572, 4294901760
        %v3002 = vsub.f32 %v572, %v3001
        %v3003 = vand.u32 %v3002, 4294901760
        %v3004 = vsub.f32 %v3002, %v3003
        %v3005 = vand.u32 %v3004, 4294901760
        %3006 = vmatpush.msra.mxu0 %v3005
        %v3007 = vand.u32 %v564, 4294901760
        %v3008 = vsub.f32 %v564, %v3007
        %v3009 = vand.u32 %v3008, 4294901760
        %v3010 = vsub.f32 %v3008, %v3009
        %v3011 = vand.u32 %v3010, 4294901760
        %3012 = vmatpush.msra.mxu0 %v3011
        %v3013 = vand.u32 %v556, 4294901760
        %v3014 = vsub.f32 %v556, %v3013
        %v3015 = vand.u32 %v3014, 4294901760
        %v3016 = vsub.f32 %v3014, %v3015
        %v3017 = vand.u32 %v3016, 4294901760
        %3018 = vmatpush.msra.mxu0 %v3017
        %v3019 = vand.u32 %v548, 4294901760
        %v3020 = vsub.f32 %v548, %v3019
        %v3021 = vand.u32 %v3020, 4294901760
        %v3022 = vsub.f32 %v3020, %v3021
        %v3023 = vand.u32 %v3022, 4294901760
        %3024 = vmatpush.msra.mxu0 %v3023
        %v3025 = vand.u32 %v540, 4294901760
        %v3026 = vsub.f32 %v540, %v3025
        %v3027 = vand.u32 %v3026, 4294901760
        %v3028 = vsub.f32 %v3026, %v3027
        %v3029 = vand.u32 %v3028, 4294901760
        %3030 = vmatpush.msra.mxu0 %v3029
        %v3031 = vand.u32 %v532, 4294901760
        %v3032 = vsub.f32 %v532, %v3031
        %v3033 = vand.u32 %v3032, 4294901760
        %v3034 = vsub.f32 %v3032, %v3033
        %v3035 = vand.u32 %v3034, 4294901760
        %3036 = vmatpush.msra.mxu0 %v3035
        %v3037 = vand.u32 %v524, 4294901760
        %v3038 = vsub.f32 %v524, %v3037
        %v3039 = vand.u32 %v3038, 4294901760
        %v3040 = vsub.f32 %v3038, %v3039
        %v3041 = vand.u32 %v3040, 4294901760
        %3042 = vmatpush.msra.mxu0 %v3041
        %v3043 = vand.u32 %v516, 4294901760
        %v3044 = vsub.f32 %v516, %v3043
        %v3045 = vand.u32 %v3044, 4294901760
        %v3046 = vsub.f32 %v3044, %v3045
        %v3047 = vand.u32 %v3046, 4294901760
        %3048 = vmatpush.msra.mxu0 %v3047
        %v3049 = vand.u32 %v508, 4294901760
        %v3050 = vsub.f32 %v508, %v3049
        %v3051 = vand.u32 %v3050, 4294901760
        %v3052 = vsub.f32 %v3050, %v3051
        %v3053 = vand.u32 %v3052, 4294901760
        %3054 = vmatpush.msra.mxu0 %v3053
        %v3055 = vand.u32 %v500, 4294901760
        %v3056 = vsub.f32 %v500, %v3055
        %v3057 = vand.u32 %v3056, 4294901760
        %v3058 = vsub.f32 %v3056, %v3057
        %v3059 = vand.u32 %v3058, 4294901760
        %3060 = vmatpush.msra.mxu0 %v3059
        %v3061 = vand.u32 %v492, 4294901760
        %v3062 = vsub.f32 %v492, %v3061
        %v3063 = vand.u32 %v3062, 4294901760
        %v3064 = vsub.f32 %v3062, %v3063
        %v3065 = vand.u32 %v3064, 4294901760
        %3066 = vmatpush.msra.mxu0 %v3065
        %v3067 = vand.u32 %v484, 4294901760
        %v3068 = vsub.f32 %v484, %v3067
        %v3069 = vand.u32 %v3068, 4294901760
        %v3070 = vsub.f32 %v3068, %v3069
        %v3071 = vand.u32 %v3070, 4294901760
        %3072 = vmatpush.msra.mxu0 %v3071
        %v3073 = vand.u32 %v476, 4294901760
        %v3074 = vsub.f32 %v476, %v3073
        %v3075 = vand.u32 %v3074, 4294901760
        %v3076 = vsub.f32 %v3074, %v3075
        %v3077 = vand.u32 %v3076, 4294901760
        %3078 = vmatpush.msra.mxu0 %v3077
        %v3079 = vand.u32 %v468, 4294901760
        %v3080 = vsub.f32 %v468, %v3079
        %v3081 = vand.u32 %v3080, 4294901760
        %v3082 = vsub.f32 %v3080, %v3081
        %v3083 = vand.u32 %v3082, 4294901760
        %3084 = vmatpush.msra.mxu0 %v3083
        %v3085 = vand.u32 %v460, 4294901760
        %v3086 = vsub.f32 %v460, %v3085
        %v3087 = vand.u32 %v3086, 4294901760
        %v3088 = vsub.f32 %v3086, %v3087
        %v3089 = vand.u32 %v3088, 4294901760
        %3090 = vmatpush.msra.mxu0 %v3089
        %v3091 = vand.u32 %v452, 4294901760
        %v3092 = vsub.f32 %v452, %v3091
        %v3093 = vand.u32 %v3092, 4294901760
        %v3094 = vsub.f32 %v3092, %v3093
        %v3095 = vand.u32 %v3094, 4294901760
        %3096 = vmatpush.msra.mxu0 %v3095
        %v3097 = vand.u32 %v444, 4294901760
        %3098 = vmatmul.f32.gmra.mxu0 %v3097
        %v3099 = vpop.f32.mrf.mxu0
        %v3100 = vadd.f32 %v2999, %v3099
        %3101 = vdwg.mxu0
        %v3102 = vand.u32 %v572, 4294901760
        %v3103 = vsub.f32 %v572, %v3102
        %3104 = vmatpush.msra.mxu0 %v3103
        %v3105 = vand.u32 %v564, 4294901760
        %v3106 = vsub.f32 %v564, %v3105
        %3107 = vmatpush.msra.mxu0 %v3106
        %v3108 = vand.u32 %v556, 4294901760
        %v3109 = vsub.f32 %v556, %v3108
        %3110 = vmatpush.msra.mxu0 %v3109
        %v3111 = vand.u32 %v548, 4294901760
        %v3112 = vsub.f32 %v548, %v3111
        %3113 = vmatpush.msra.mxu0 %v3112
        %v3114 = vand.u32 %v540, 4294901760
        %v3115 = vsub.f32 %v540, %v3114
        %3116 = vmatpush.msra.mxu0 %v3115
        %v3117 = vand.u32 %v532, 4294901760
        %v3118 = vsub.f32 %v532, %v3117
        %3119 = vmatpush.msra.mxu0 %v3118
        %v3120 = vand.u32 %v524, 4294901760
        %v3121 = vsub.f32 %v524, %v3120
        %3122 = vmatpush.msra.mxu0 %v3121
        %v3123 = vand.u32 %v516, 4294901760
        %v3124 = vsub.f32 %v516, %v3123
        %3125 = vmatpush.msra.mxu0 %v3124
        %v3126 = vand.u32 %v508, 4294901760
        %v3127 = vsub.f32 %v508, %v3126
        %3128 = vmatpush.msra.mxu0 %v3127
        %v3129 = vand.u32 %v500, 4294901760
        %v3130 = vsub.f32 %v500, %v3129
        %3131 = vmatpush.msra.mxu0 %v3130
        %v3132 = vand.u32 %v492, 4294901760
        %v3133 = vsub.f32 %v492, %v3132
        %3134 = vmatpush.msra.mxu0 %v3133
        %v3135 = vand.u32 %v484, 4294901760
        %v3136 = vsub.f32 %v484, %v3135
        %3137 = vmatpush.msra.mxu0 %v3136
        %v3138 = vand.u32 %v476, 4294901760
        %v3139 = vsub.f32 %v476, %v3138
        %3140 = vmatpush.msra.mxu0 %v3139
        %v3141 = vand.u32 %v468, 4294901760
        %v3142 = vsub.f32 %v468, %v3141
        %3143 = vmatpush.msra.mxu0 %v3142
        %v3144 = vand.u32 %v460, 4294901760
        %v3145 = vsub.f32 %v460, %v3144
        %3146 = vmatpush.msra.mxu0 %v3145
        %v3147 = vand.u32 %v452, 4294901760
        %v3148 = vsub.f32 %v452, %v3147
        %3149 = vmatpush.msra.mxu0 %v3148
        %v3150 = vand.u32 %v444, 4294901760
        %v3151 = vsub.f32 %v444, %v3150
        %3152 = vmatmul.f32.gmra.mxu0 %v3151
        %v3153 = vpop.f32.mrf.mxu0
        %v3154 = vadd.f32 %v3100, %v3153
        %3155 = vdwg.mxu0
        %v3156 = vand.u32 %v572, 4294901760
        %3157 = vmatpush.msra.mxu0 %v3156
        %v3158 = vand.u32 %v564, 4294901760
        %3159 = vmatpush.msra.mxu0 %v3158
        %v3160 = vand.u32 %v556, 4294901760
        %3161 = vmatpush.msra.mxu0 %v3160
        %v3162 = vand.u32 %v548, 4294901760
        %3163 = vmatpush.msra.mxu0 %v3162
        %v3164 = vand.u32 %v540, 4294901760
        %3165 = vmatpush.msra.mxu0 %v3164
        %v3166 = vand.u32 %v532, 4294901760
        %3167 = vmatpush.msra.mxu0 %v3166
        %v3168 = vand.u32 %v524, 4294901760
        %3169 = vmatpush.msra.mxu0 %v3168
        %v3170 = vand.u32 %v516, 4294901760
        %3171 = vmatpush.msra.mxu0 %v3170
        %v3172 = vand.u32 %v508, 4294901760
        %3173 = vmatpush.msra.mxu0 %v3172
        %v3174 = vand.u32 %v500, 4294901760
        %3175 = vmatpush.msra.mxu0 %v3174
        %v3176 = vand.u32 %v492, 4294901760
        %3177 = vmatpush.msra.mxu0 %v3176
        %v3178 = vand.u32 %v484, 4294901760
        %3179 = vmatpush.msra.mxu0 %v3178
        %v3180 = vand.u32 %v476, 4294901760
        %3181 = vmatpush.msra.mxu0 %v3180
        %v3182 = vand.u32 %v468, 4294901760
        %3183 = vmatpush.msra.mxu0 %v3182
        %v3184 = vand.u32 %v460, 4294901760
        %3185 = vmatpush.msra.mxu0 %v3184
        %v3186 = vand.u32 %v452, 4294901760
        %3187 = vmatpush.msra.mxu0 %v3186
        %v3188 = vand.u32 %v444, 4294901760
        %v3189 = vsub.f32 %v444, %v3188
        %v3190 = vand.u32 %v3189, 4294901760
        %3191 = vmatmul.f32.gmra.mxu0 %v3190
        %v3192 = vpop.f32.mrf.mxu0
        %v3193 = vadd.f32 %v3154, %v3192
        %3194 = vdwg.mxu0
        %v3195 = vand.u32 %v572, 4294901760
        %v3196 = vsub.f32 %v572, %v3195
        %v3197 = vand.u32 %v3196, 4294901760
        %3198 = vmatpush.msra.mxu0 %v3197
        %v3199 = vand.u32 %v564, 4294901760
        %v3200 = vsub.f32 %v564, %v3199
        %v3201 = vand.u32 %v3200, 4294901760
        %3202 = vmatpush.msra.mxu0 %v3201
        %v3203 = vand.u32 %v556, 4294901760
        %v3204 = vsub.f32 %v556, %v3203
        %v3205 = vand.u32 %v3204, 4294901760
        %3206 = vmatpush.msra.mxu0 %v3205
        %v3207 = vand.u32 %v548, 4294901760
        %v3208 = vsub.f32 %v548, %v3207
        %v3209 = vand.u32 %v3208, 4294901760
        %3210 = vmatpush.msra.mxu0 %v3209
        %v3211 = vand.u32 %v540, 4294901760
        %v3212 = vsub.f32 %v540, %v3211
        %v3213 = vand.u32 %v3212, 4294901760
        %3214 = vmatpush.msra.mxu0 %v3213
        %v3215 = vand.u32 %v532, 4294901760
        %v3216 = vsub.f32 %v532, %v3215
        %v3217 = vand.u32 %v3216, 4294901760
        %3218 = vmatpush.msra.mxu0 %v3217
        %v3219 = vand.u32 %v524, 4294901760
        %v3220 = vsub.f32 %v524, %v3219
        %v3221 = vand.u32 %v3220, 4294901760
        %3222 = vmatpush.msra.mxu0 %v3221
        %v3223 = vand.u32 %v516, 4294901760
        %v3224 = vsub.f32 %v516, %v3223
        %v3225 = vand.u32 %v3224, 4294901760
        %3226 = vmatpush.msra.mxu0 %v3225
        %v3227 = vand.u32 %v508, 4294901760
        %v3228 = vsub.f32 %v508, %v3227
        %v3229 = vand.u32 %v3228, 4294901760
        %3230 = vmatpush.msra.mxu0 %v3229
        %v3231 = vand.u32 %v500, 4294901760
        %v3232 = vsub.f32 %v500, %v3231
        %v3233 = vand.u32 %v3232, 4294901760
        %3234 = vmatpush.msra.mxu0 %v3233
        %v3235 = vand.u32 %v492, 4294901760
        %v3236 = vsub.f32 %v492, %v3235
        %v3237 = vand.u32 %v3236, 4294901760
        %3238 = vmatpush.msra.mxu0 %v3237
        %v3239 = vand.u32 %v484, 4294901760
        %v3240 = vsub.f32 %v484, %v3239
        %v3241 = vand.u32 %v3240, 4294901760
        %3242 = vmatpush.msra.mxu0 %v3241
        %v3243 = vand.u32 %v476, 4294901760
        %v3244 = vsub.f32 %v476, %v3243
        %v3245 = vand.u32 %v3244, 4294901760
        %3246 = vmatpush.msra.mxu0 %v3245
        %v3247 = vand.u32 %v468, 4294901760
        %v3248 = vsub.f32 %v468, %v3247
        %v3249 = vand.u32 %v3248, 4294901760
        %3250 = vmatpush.msra.mxu0 %v3249
        %v3251 = vand.u32 %v460, 4294901760
        %v3252 = vsub.f32 %v460, %v3251
        %v3253 = vand.u32 %v3252, 4294901760
        %3254 = vmatpush.msra.mxu0 %v3253
        %v3255 = vand.u32 %v452, 4294901760
        %v3256 = vsub.f32 %v452, %v3255
        %v3257 = vand.u32 %v3256, 4294901760
        %3258 = vmatpush.msra.mxu0 %v3257
        %v3259 = vand.u32 %v444, 4294901760
        %3260 = vmatmul.f32.gmra.mxu0 %v3259
        %v3261 = vpop.f32.mrf.mxu0
        %v3262 = vadd.f32 %v3193, %v3261
        %3263 = vdwg.mxu0
        %v3264 = vand.u32 %v572, 4294901760
        %3265 = vmatpush.msra.mxu0 %v3264
        %v3266 = vand.u32 %v564, 4294901760
        %3267 = vmatpush.msra.mxu0 %v3266
        %v3268 = vand.u32 %v556, 4294901760
        %3269 = vmatpush.msra.mxu0 %v3268
        %v3270 = vand.u32 %v548, 4294901760
        %3271 = vmatpush.msra.mxu0 %v3270
        %v3272 = vand.u32 %v540, 4294901760
        %3273 = vmatpush.msra.mxu0 %v3272
        %v3274 = vand.u32 %v532, 4294901760
        %3275 = vmatpush.msra.mxu0 %v3274
        %v3276 = vand.u32 %v524, 4294901760
        %3277 = vmatpush.msra.mxu0 %v3276
        %v3278 = vand.u32 %v516, 4294901760
        %3279 = vmatpush.msra.mxu0 %v3278
        %v3280 = vand.u32 %v508, 4294901760
        %3281 = vmatpush.msra.mxu0 %v3280
        %v3282 = vand.u32 %v500, 4294901760
        %3283 = vmatpush.msra.mxu0 %v3282
        %v3284 = vand.u32 %v492, 4294901760
        %3285 = vmatpush.msra.mxu0 %v3284
        %v3286 = vand.u32 %v484, 4294901760
        %3287 = vmatpush.msra.mxu0 %v3286
        %v3288 = vand.u32 %v476, 4294901760
        %3289 = vmatpush.msra.mxu0 %v3288
        %v3290 = vand.u32 %v468, 4294901760
        %3291 = vmatpush.msra.mxu0 %v3290
        %v3292 = vand.u32 %v460, 4294901760
        %3293 = vmatpush.msra.mxu0 %v3292
        %v3294 = vand.u32 %v452, 4294901760
        %3295 = vmatpush.msra.mxu0 %v3294
        %v3296 = vand.u32 %v444, 4294901760
        %3297 = vmatmul.f32.gmra.mxu0 %v3296
        %v3298 = vpop.f32.mrf.mxu0
        %v3299 = vadd.f32 %v3262, %v3298
        %3300 = vdwg.mxu0
        %v3301 = vmul.f32 %v436, %v912
        %v3302 = vmul.f32 %v437, %v1253
        %v3303 = vmul.f32 %v438, %v1594
        %v3304 = vmul.f32 %v439, %v1935
        %v3305 = vmul.f32 %v440, %v2276
        %v3306 = vmul.f32 %v441, %v2617
        %v3307 = vmul.f32 %v442, %v2958
        %v3308 = vmul.f32 %v443, %v3299
        %3309 = vst [vmem:[%s369] sm:$0xff] %v3301
        %3310 = vst [vmem:[%s369 + $0x8] sm:$0xff] %v3302
        %3311 = vst [vmem:[%s369 + $0x10] sm:$0xff] %v3303
        %3312 = vst [vmem:[%s369 + $0x18] sm:$0xff] %v3304
        %3313 = vst [vmem:[%s369 + $0x20] sm:$0xff] %v3305
        %3314 = vst [vmem:[%s369 + $0x28] sm:$0xff] %v3306
        %3315 = vst [vmem:[%s369 + $0x30] sm:$0xff] %v3307
        %3316 = vst [vmem:[%s369 + $0x38] sm:$0xff] %v3308
        %s3317 = sand.u32 %s169, 1
        %s3318 = scalar_lea.sflag [#allocation4], %s3317
        %s3319 = sand.u32 %s169, 1
        %s3320 = smul.addr %s3319, 64
        %s3321 = scalar_lea.vmem [#allocation10], %s3320
        // Predicated region
        $region61: #{tpu_custom_call.1} parent=39 // pred_check
          %p3322 = pneg %p179
        $region62: #{tpu_custom_call.1} parent=39 // pred_check_branch
          %3324 = sbr.rel (%p3322) target = $region64
        $region63: #{tpu_custom_call.1} parent=39 // pred_region
          %3326 = vsyncadd %s3318, 0
          %s3327 = smul.addr %s26, 8
          %s3328 = smul.addr %s25, 8
          %s3329 = sadd.s32 %s3327, %s3328
          %s3330 = smul.addr %s3329, 8
          %s3331 = scalar_lea.hbm %s5, %s3330
          %s3333 = sshll.u32 %s3321, 4
          %s3334 = int_to_ptr.vmem [resolvable:$true] %s3333
          %s3335 = sshll.u32 %s3331, 4
          %s3336 = int_to_ptr.hbm [resolvable:$true] %s3335
          %3338 = dma.vmem_to_hbm [thread:$0]  %s3334, 1024, %s3336, %s3318
        $region64: #{tpu_custom_call.1} parent=39 // pred_fallthru
          _
      $region40: #{tpu_custom_call.1} parent=5 // pred_fallthru
        _
      %p3339 = scmp.le.s32.totalorder 2, %s16
      // Predicated region
      $region65: #{tpu_custom_call.1} parent=5 // pred_check
        %p3340 = pneg %p3339
      $region66: #{tpu_custom_call.1} parent=5 // pred_check_branch
        %3342 = sbr.rel (%p3340) target = $region68
      $region67: #{tpu_custom_call.1} parent=5 // pred_region
        %s3343 = ssub.s32 %s16, 2
        // Predicated region
        $region69: #{tpu_custom_call.1} parent=67 // pred_check
          %p3344 = pneg %p185
        $region70: #{tpu_custom_call.1} parent=67 // pred_check_branch
          %3346 = sbr.rel (%p3344) target = $region72
        $region71: #{tpu_custom_call.1} parent=67 // pred_region
          %s3347 = sand.u32 %s170, 1
          %s3348 = scalar_lea.sflag [#allocation4], %s3347
          %s3349 = sand.u32 %s170, 1
          %s3350 = smul.addr %s3349, 64
          %s3351 = scalar_lea.vmem [#allocation10], %s3350
          %3353 = dma.done %s3348, 1024
        $region72: #{tpu_custom_call.1} parent=67 // pred_fallthru
          _
      $region68: #{tpu_custom_call.1} parent=5 // pred_fallthru
        _
    $region6: #{tpu_custom_call.1} parent=1 // loop_footer
      %s20 = sadd.s32 1, %s16
    $region7: #{tpu_custom_call.1} parent=1 // loop_footer_branch
      %15 = sbr.rel target = $region3
    $region8: #{tpu_custom_call.1} parent=1 // loop_exit
      _
    %3354 = vsyncpa [#allocation3], 1
    %s3355 = scalar_lea.sflag [#allocation3], 1
    %3356 = vsyncpa %s3355, 1
    %3357 = vsyncpa [#allocation6], 1
    %3358 = vsyncpa [#allocation4], 1
    %s3359 = scalar_lea.sflag [#allocation4], 1
    %3360 = vsyncpa %s3359, 1

</llo_original>
